<compile_context>
chip_gen: v7x
topology: tpu7x:2x2x1
jax: 0.10.0
libtpu: 0.0.40
codegen_flags: <defaults>
</compile_context>

<pallas_src>
import functools

import jax
import jax.numpy as jnp
from jax.experimental import pallas as pl
from jax.experimental.pallas import tpu as pltpu

# ----------------------------- configuration --------------------------------
BATCH = 2
C_IN = 3          # RGB, as CLIP expects
IMG = 16          # image spatial size (small synthetic)
PATCH = 4         # patch size  -> grid 4x4 = 16 patches, seq = 17 with CLS
WIDTH = 32        # transformer width (ViT-B/32 uses 768)
HEADS = 4         # attention heads (head_dim = 8)
LAYERS = 2        # transformer depth (ViT-B/32 uses 12)
EMBED = 16        # CLIP projection dim (real model uses 512)
NUM_CLASSES = 10
NORMALIZE = True  # mirrors `normalize=True` branch of the module

GRID = IMG // PATCH
NUM_PATCHES = GRID * GRID
SEQ = NUM_PATCHES + 1            # 17
S_PAD = ((SEQ + 7) // 8) * 8     # 24  (sublane-aligned sequence length)
HEAD_DIM = WIDTH // HEADS
MLP_DIM = 4 * WIDTH
PATCH_DIM = C_IN * PATCH * PATCH  # 48


# ------------------------------ kernel helpers -------------------------------
def _ln(x, g, b, eps=1e-5):
    """LayerNorm over the last (lane) axis; g/b are (1, D) and broadcast."""
    mean = jnp.mean(x, axis=-1, keepdims=True)
    var = jnp.mean(jnp.square(x - mean), axis=-1, keepdims=True)
    return (x - mean) * jax.lax.rsqrt(var + eps) * g + b


# ------------------------------ Pallas kernels -------------------------------
def _embed_kernel(p_ref, w_ref, poscls_ref, g_ref, b_ref, o_ref):
    """patch matmul + (cls + pos emb, pre-folded) + ln_pre, one batch element."""
    patches = p_ref[0]                                      # (S_PAD, PATCH_DIM)
    emb = jnp.dot(patches, w_ref[...], preferred_element_type=jnp.float32)
    # poscls already contains: row0 = class_emb + pos_emb[0]; rows 1..SEQ-1 =
    # pos_emb[i]; padded rows = 0.  Padded patch rows are zero, so emb is 0 there.
    x = emb + poscls_ref[...]                               # (S_PAD, W)
    o_ref[0] = _ln(x, g_ref[...], b_ref[...])


def _block_kernel(x_ref, ln1_g_ref, ln1_b_ref, wqkv_ref, bqkv_ref,
                  wout_ref, bout_ref, ln2_g_ref, ln2_b_ref,
                  w1_ref, b1_ref, w2_ref, b2_ref, o_ref, *, scale):
    """Fused pre-LN transformer block for one batch element (S_PAD, W)."""
    x = x_ref[0]                                            # (S_PAD, W)

    # ---- attention sub-block: LN1 -> QKV -> per-head SDPA -> out-proj ------
    h = _ln(x, ln1_g_ref[...], ln1_b_ref[...])
    qkv = jnp.dot(h, wqkv_ref[...],
                  preferred_element_type=jnp.float32) + bqkv_ref[...]  # (S_PAD, 3W)

    # Mask padded key rows (index >= SEQ) so they get ~zero attention weight.
    key_idx = jax.lax.broadcasted_iota(jnp.int32, (1, S_PAD), 1)
    key_mask = jnp.where(key_idx < SEQ, 0.0, -1e30)         # (1, S_PAD)

    wout = wout_ref[...]                                    # (W, W)
    acc = jnp.zeros((S_PAD, WIDTH), jnp.float32)
    for hd in range(HEADS):                                 # static unroll, 4 heads
        lo = hd * HEAD_DIM
        q = qkv[:, lo:lo + HEAD_DIM]                        # (S_PAD, Dh)
        k = qkv[:, WIDTH + lo:WIDTH + lo + HEAD_DIM]
        v = qkv[:, 2 * WIDTH + lo:2 * WIDTH + lo + HEAD_DIM]
        s = jnp.dot(q, k.T, preferred_element_type=jnp.float32) * scale + key_mask
        s = s - jnp.max(s, axis=-1, keepdims=True)
        p = jnp.exp(s)
        p = p * pl.reciprocal(jnp.sum(p, axis=-1, keepdims=True), approx=True)
        o_h = jnp.dot(p, v, preferred_element_type=jnp.float32)       # (S_PAD, Dh)
        # concat-over-heads @ W_out  ==  sum_h  o_h @ W_out[h*Dh:(h+1)*Dh, :]
        acc = acc + jnp.dot(o_h, wout[lo:lo + HEAD_DIM, :],
                            preferred_element_type=jnp.float32)
    x = x + acc + bout_ref[...]                             # residual

    # ---- MLP sub-block: LN2 -> c_fc -> QuickGELU -> c_proj -----------------
    h = _ln(x, ln2_g_ref[...], ln2_b_ref[...])
    h = jnp.dot(h, w1_ref[...], preferred_element_type=jnp.float32) + b1_ref[...]
    h = h * jax.nn.sigmoid(1.702 * h)                       # QuickGELU
    h = jnp.dot(h, w2_ref[...], preferred_element_type=jnp.float32) + b2_ref[...]
    o_ref[0] = x + h                                        # residual


def _head_kernel(cls_ref, g_ref, b_ref, proj_ref, cw_ref, cb_ref, o_ref, *,
                 normalize):
    """ln_post + CLIP projection + optional L2 normalize + classifier."""
    h = _ln(cls_ref[...], g_ref[...], b_ref[...])                      # (B, W)
    feats = jnp.dot(h, proj_ref[...], preferred_element_type=jnp.float32)
    if normalize:  # features / features.norm(dim=-1, keepdim=True)  (no eps, as torch)
        feats = feats * jax.lax.rsqrt(jnp.sum(feats * feats, axis=-1, keepdims=True))
    o_ref[...] = jnp.dot(feats, cw_ref[...],
                         preferred_element_type=jnp.float32) + cb_ref[...]


# ------------------------------ kernel wrappers ------------------------------
def pallas_embed(patches, p):
    b = patches.shape[0]
    return pl.pallas_call(
        _embed_kernel,
        grid=(b,),
        in_specs=[
            pl.BlockSpec((1, S_PAD, PATCH_DIM), lambda i: (i, 0, 0)),
            pl.BlockSpec((PATCH_DIM, WIDTH), lambda i: (0, 0)),
            pl.BlockSpec((S_PAD, WIDTH), lambda i: (0, 0)),
            pl.BlockSpec((1, WIDTH), lambda i: (0, 0)),
            pl.BlockSpec((1, WIDTH), lambda i: (0, 0)),
        ],
        out_specs=pl.BlockSpec((1, S_PAD, WIDTH), lambda i: (i, 0, 0)),
        out_shape=jax.ShapeDtypeStruct((b, S_PAD, WIDTH), jnp.float32),
        compiler_params=pltpu.CompilerParams(dimension_semantics=("parallel",)),
    )(patches, p["patch_w"], p["pos_cls"], p["ln_pre_g"], p["ln_pre_b"])


def pallas_block(x, blk):
    b = x.shape[0]
    kernel = functools.partial(_block_kernel, scale=1.0 / (HEAD_DIM ** 0.5))

    def full2d(shape):
        return pl.BlockSpec(shape, lambda i: (0, 0))

    return pl.pallas_call(
        kernel,
        grid=(b,),
        in_specs=[
            pl.BlockSpec((1, S_PAD, WIDTH), lambda i: (i, 0, 0)),
            full2d((1, WIDTH)), full2d((1, WIDTH)),                   # ln1
            full2d((WIDTH, 3 * WIDTH)), full2d((1, 3 * WIDTH)),       # qkv
            full2d((WIDTH, WIDTH)), full2d((1, WIDTH)),               # out proj
            full2d((1, WIDTH)), full2d((1, WIDTH)),                   # ln2
            full2d((WIDTH, MLP_DIM)), full2d((1, MLP_DIM)),           # c_fc
            full2d((MLP_DIM, WIDTH)), full2d((1, WIDTH)),             # c_proj
        ],
        out_specs=pl.BlockSpec((1, S_PAD, WIDTH), lambda i: (i, 0, 0)),
        out_shape=jax.ShapeDtypeStruct((b, S_PAD, WIDTH), jnp.float32),
        compiler_params=pltpu.CompilerParams(dimension_semantics=("parallel",)),
    )(x, blk["ln1_g"], blk["ln1_b"], blk["attn_in_w"], blk["attn_in_b"],
      blk["attn_out_w"], blk["attn_out_b"], blk["ln2_g"], blk["ln2_b"],
      blk["mlp_w1"], blk["mlp_b1"], blk["mlp_w2"], blk["mlp_b2"])


def pallas_head(cls_tok, p, normalize):
    b = cls_tok.shape[0]
    kernel = functools.partial(_head_kernel, normalize=normalize)
    return pl.pallas_call(
        kernel,
        out_shape=jax.ShapeDtypeStruct((b, NUM_CLASSES), jnp.float32),
    )(cls_tok, p["ln_post_g"], p["ln_post_b"], p["proj"], p["cls_w"], p["cls_b"])


# ------------------------------ parameter init -------------------------------
def _normal(key, shape, scale=0.02):
    return scale * jax.random.normal(key, shape, dtype=jnp.float32)


def init_params(key):
    keys = iter(jax.random.split(key, 8 + 8 * LAYERS))
    p = {}
    # conv1: Conv2d(C_IN, WIDTH, kernel=PATCH, stride=PATCH, bias=False)
    conv_w = _normal(next(keys), (WIDTH, C_IN, PATCH, PATCH))
    p["patch_w"] = conv_w.reshape(WIDTH, PATCH_DIM).T                 # (C*P*P, W)
    class_emb = _normal(next(keys), (WIDTH,))
    pos_emb = _normal(next(keys), (SEQ, WIDTH))
    # pre-fold cls token + positional embedding into one padded (S_PAD, W) table
    pos_cls = jnp.zeros((S_PAD, WIDTH), jnp.float32)
    pos_cls = pos_cls.at[:SEQ].set(pos_emb)
    pos_cls = pos_cls.at[0].add(class_emb)
    p["pos_cls"] = pos_cls
    p["ln_pre_g"] = jnp.ones((1, WIDTH), jnp.float32)
    p["ln_pre_b"] = jnp.zeros((1, WIDTH), jnp.float32)

    blocks = []
    for _ in range(LAYERS):
        blk = {}
        blk["ln1_g"] = jnp.ones((1, WIDTH), jnp.float32)
        blk["ln1_b"] = jnp.zeros((1, WIDTH), jnp.float32)
        in_proj_w = _normal(next(keys), (3 * WIDTH, WIDTH))           # torch MHA layout
        blk["attn_in_w"] = in_proj_w.T                                # (W, 3W)
        blk["attn_in_b"] = _normal(next(keys), (3 * WIDTH,)).reshape(1, 3 * WIDTH)
        out_proj_w = _normal(next(keys), (WIDTH, WIDTH))
        blk["attn_out_w"] = out_proj_w.T                              # (W, W)
        blk["attn_out_b"] = _normal(next(keys), (WIDTH,)).reshape(1, WIDTH)
        blk["ln2_g"] = jnp.ones((1, WIDTH), jnp.float32)
        blk["ln2_b"] = jnp.zeros((1, WIDTH), jnp.float32)
        c_fc_w = _normal(next(keys), (MLP_DIM, WIDTH))
        blk["mlp_w1"] = c_fc_w.T                                      # (W, 4W)
        blk["mlp_b1"] = _normal(next(keys), (MLP_DIM,)).reshape(1, MLP_DIM)
        c_proj_w = _normal(next(keys), (WIDTH, MLP_DIM))
        blk["mlp_w2"] = c_proj_w.T                                    # (4W, W)
        blk["mlp_b2"] = _normal(next(keys), (WIDTH,)).reshape(1, WIDTH)
        blocks.append(blk)
    p["blocks"] = blocks

    p["ln_post_g"] = jnp.ones((1, WIDTH), jnp.float32)
    p["ln_post_b"] = jnp.zeros((1, WIDTH), jnp.float32)
    p["proj"] = _normal(next(keys), (WIDTH, EMBED))                   # x @ proj
    cls_w = _normal(next(keys), (NUM_CLASSES, EMBED))                 # nn.Linear(512, C)
    p["cls_w"] = cls_w.T                                              # (EMBED, C)
    p["cls_b"] = jnp.zeros((1, NUM_CLASSES), jnp.float32)
    return p


# ------------------------------- model forward -------------------------------
def vit_forward(images, params, normalize=NORMALIZE):
    """images: (B, C, H, W) NCHW float32 -> logits (B, NUM_CLASSES)."""
    b = images.shape[0]
    # patch-embedding conv (stride == kernel) == unfold + matmul; unfold stays
    # in XLA (tiny), padded so row 0 is the CLS slot and rows >= SEQ are zero.
    patches = images.reshape(b, C_IN, GRID, PATCH, GRID, PATCH)
    patches = patches.transpose(0, 2, 4, 1, 3, 5).reshape(b, NUM_PATCHES, PATCH_DIM)
    patches = jnp.pad(patches, ((0, 0), (1, S_PAD - 1 - NUM_PATCHES), (0, 0)))

    x = pallas_embed(patches, params)                     # (B, S_PAD, W), ln_pre applied

    for blk in params["blocks"]:
        x = pallas_block(x, blk)                          # one fused kernel per layer

    cls_tok = x[:, 0, :]                                  # (B, W)
    return pallas_head(cls_tok, params, normalize)        # (B, NUM_CLASSES)


# ----------------------------------- main ------------------------------------
if __name__ == "__main__":
    key = jax.random.PRNGKey(0)
    k_img, k_par = jax.random.split(key)
    images = jax.random.normal(k_img, (BATCH, C_IN, IMG, IMG), dtype=jnp.float32)
    params = init_params(k_par)

    fwd = jax.jit(functools.partial(vit_forward, normalize=NORMALIZE))
    logits = fwd(images, params)
    jax.block_until_ready(logits)

    assert logits.shape == (BATCH, NUM_CLASSES), logits.shape
    assert logits.dtype == jnp.float32
    assert bool(jnp.all(jnp.isfinite(logits)))
    print("KERNEL_OK")
</pallas_src>

<mosaic_0001>
module attributes {stable_mosaic.version = 11 : i64} {
  func.func @_embed_kernel(%arg0: i32, %arg1: memref<1x24x48xf32, #tpu.memory_space<vmem>>, %arg2: memref<48x32xf32, #tpu.memory_space<vmem>>, %arg3: memref<24x32xf32, #tpu.memory_space<vmem>>, %arg4: memref<1x32xf32, #tpu.memory_space<vmem>>, %arg5: memref<1x32xf32, #tpu.memory_space<vmem>>, %arg6: memref<1x24x32xf32, #tpu.memory_space<vmem>>) attributes {dimension_semantics = [#tpu.dimension_semantics<parallel>], iteration_bounds = array<i64: 2>, scalar_prefetch = 0 : i64, scratch_operands = 0 : i64, tpu.core_type = #tpu.core_type<tc>, window_params = [{transform_indices = @transform_0, window_bounds = array<i64: 1, 24, 48>}, {pipeline_mode = #tpu.pipeline_mode<synchronous>, transform_indices = @transform_1, window_bounds = array<i64: 48, 32>}, {pipeline_mode = #tpu.pipeline_mode<synchronous>, transform_indices = @transform_2, window_bounds = array<i64: 24, 32>}, {pipeline_mode = #tpu.pipeline_mode<synchronous>, transform_indices = @transform_3, window_bounds = array<i64: 1, 32>}, {pipeline_mode = #tpu.pipeline_mode<synchronous>, transform_indices = @transform_4, window_bounds = array<i64: 1, 32>}, {transform_indices = @transform_5, window_bounds = array<i64: 1, 24, 32>}]} {
    %c0 = arith.constant 0 : index
    %c0_0 = arith.constant 0 : index
    %c0_1 = arith.constant 0 : index
    %0 = vector.load %arg1[%c0, %c0_0, %c0_1] : memref<1x24x48xf32, #tpu.memory_space<vmem>>, vector<1x24x48xf32>
    %1 = vector.shape_cast %0 : vector<1x24x48xf32> to vector<24x48xf32>
    %c0_2 = arith.constant 0 : index
    %c0_3 = arith.constant 0 : index
    %2 = vector.load %arg2[%c0_2, %c0_3] : memref<48x32xf32, #tpu.memory_space<vmem>>, vector<48x32xf32>
    %cst = arith.constant dense<0.000000e+00> : vector<24x32xf32>
    %3 = tpu.matmul %1, %2, %cst {dimension_numbers = #tpu.dot_dimension_numbers<[1], [0], [0], [1], [0, 0, 1, 1], [], []>} : vector<24x48xf32>, vector<48x32xf32>, vector<24x32xf32> -> vector<24x32xf32>
    %c0_4 = arith.constant 0 : index
    %c0_5 = arith.constant 0 : index
    %4 = vector.load %arg3[%c0_4, %c0_5] : memref<24x32xf32, #tpu.memory_space<vmem>>, vector<24x32xf32>
    %5 = arith.addf %3, %4 : vector<24x32xf32>
    %c0_6 = arith.constant 0 : index
    %c0_7 = arith.constant 0 : index
    %6 = vector.load %arg4[%c0_6, %c0_7] : memref<1x32xf32, #tpu.memory_space<vmem>>, vector<1x32xf32>
    %c0_8 = arith.constant 0 : index
    %c0_9 = arith.constant 0 : index
    %7 = vector.load %arg5[%c0_8, %c0_9] : memref<1x32xf32, #tpu.memory_space<vmem>>, vector<1x32xf32>
    %cst_10 = arith.constant dense<0.000000e+00> : vector<24xf32>
    %8 = vector.multi_reduction <add>, %5, %cst_10 [1] : vector<24x32xf32> to vector<24xf32>
    %9 = vector.shape_cast %8 : vector<24xf32> to vector<24x1xf32>
    %cst_11 = arith.constant 3.200000e+01 : f32
    %10 = vector.broadcast %cst_11 : f32 to vector<24x1xf32>
    %11 = arith.divf %9, %10 : vector<24x1xf32>
    %12 = vector.broadcast %11 : vector<24x1xf32> to vector<24x32xf32>
    %13 = arith.subf %5, %12 : vector<24x32xf32>
    %14 = arith.mulf %13, %13 : vector<24x32xf32>
    %cst_12 = arith.constant dense<0.000000e+00> : vector<24xf32>
    %15 = vector.multi_reduction <add>, %14, %cst_12 [1] : vector<24x32xf32> to vector<24xf32>
    %16 = vector.shape_cast %15 : vector<24xf32> to vector<24x1xf32>
    %cst_13 = arith.constant 3.200000e+01 : f32
    %17 = vector.broadcast %cst_13 : f32 to vector<24x1xf32>
    %18 = arith.divf %16, %17 : vector<24x1xf32>
    %19 = vector.broadcast %11 : vector<24x1xf32> to vector<24x32xf32>
    %20 = arith.subf %5, %19 : vector<24x32xf32>
    %cst_14 = arith.constant 9.99999974E-6 : f32
    %21 = vector.broadcast %cst_14 : f32 to vector<24x1xf32>
    %22 = arith.addf %18, %21 : vector<24x1xf32>
    %23 = math.rsqrt %22 : vector<24x1xf32>
    %24 = vector.broadcast %23 : vector<24x1xf32> to vector<24x32xf32>
    %25 = arith.mulf %20, %24 : vector<24x32xf32>
    %26 = vector.broadcast %6 : vector<1x32xf32> to vector<24x32xf32>
    %27 = arith.mulf %25, %26 : vector<24x32xf32>
    %28 = vector.broadcast %7 : vector<1x32xf32> to vector<24x32xf32>
    %29 = arith.addf %27, %28 : vector<24x32xf32>
    %c0_15 = arith.constant 0 : index
    %c0_16 = arith.constant 0 : index
    %c0_17 = arith.constant 0 : index
    %30 = vector.load %arg6[%c0_15, %c0_16, %c0_17] : memref<1x24x32xf32, #tpu.memory_space<vmem>>, vector<1x24x32xf32>
    %31 = vector.shape_cast %30 : vector<1x24x32xf32> to vector<24x32xf32>
    %32 = vector.shape_cast %29 : vector<24x32xf32> to vector<1x24x32xf32>
    tpu.vector_store %arg6[%c0_15, %c0_16, %c0_17], %32 {strides = array<i32>} : memref<1x24x32xf32, #tpu.memory_space<vmem>>, vector<1x24x32xf32>,
    return
  }
  func.func @transform_0(%arg0: i32) -> (i32, i32, i32) {
    %c0_i32 = arith.constant 0 : i32
    %c0_i32_0 = arith.constant 0 : i32
    %c0_i32_1 = arith.constant 0 : i32
    return %arg0, %c0_i32, %c0_i32_0 : i32, i32, i32
  }
  func.func @transform_1(%arg0: i32) -> (i32, i32) {
    %c0_i32 = arith.constant 0 : i32
    %c0_i32_0 = arith.constant 0 : i32
    %c0_i32_1 = arith.constant 0 : i32
    return %c0_i32, %c0_i32_0 : i32, i32
  }
  func.func @transform_2(%arg0: i32) -> (i32, i32) {
    %c0_i32 = arith.constant 0 : i32
    %c0_i32_0 = arith.constant 0 : i32
    %c0_i32_1 = arith.constant 0 : i32
    return %c0_i32, %c0_i32_0 : i32, i32
  }
  func.func @transform_3(%arg0: i32) -> (i32, i32) {
    %c0_i32 = arith.constant 0 : i32
    %c0_i32_0 = arith.constant 0 : i32
    %c0_i32_1 = arith.constant 0 : i32
    return %c0_i32, %c0_i32_0 : i32, i32
  }
  func.func @transform_4(%arg0: i32) -> (i32, i32) {
    %c0_i32 = arith.constant 0 : i32
    %c0_i32_0 = arith.constant 0 : i32
    %c0_i32_1 = arith.constant 0 : i32
    return %c0_i32, %c0_i32_0 : i32, i32
  }
  func.func @transform_5(%arg0: i32) -> (i32, i32, i32) {
    %c0_i32 = arith.constant 0 : i32
    %c0_i32_0 = arith.constant 0 : i32
    %c0_i32_1 = arith.constant 0 : i32
    return %arg0, %c0_i32, %c0_i32_0 : i32, i32, i32
  }
}

module attributes {stable_mosaic.version = 11 : i64} {
  func.func @_block_kernel(%arg0: i32, %arg1: memref<1x24x32xf32, #tpu.memory_space<vmem>>, %arg2: memref<1x32xf32, #tpu.memory_space<vmem>>, %arg3: memref<1x32xf32, #tpu.memory_space<vmem>>, %arg4: memref<32x96xf32, #tpu.memory_space<vmem>>, %arg5: memref<1x96xf32, #tpu.memory_space<vmem>>, %arg6: memref<32x32xf32, #tpu.memory_space<vmem>>, %arg7: memref<1x32xf32, #tpu.memory_space<vmem>>, %arg8: memref<1x32xf32, #tpu.memory_space<vmem>>, %arg9: memref<1x32xf32, #tpu.memory_space<vmem>>, %arg10: memref<32x128xf32, #tpu.memory_space<vmem>>, %arg11: memref<1x128xf32, #tpu.memory_space<vmem>>, %arg12: memref<128x32xf32, #tpu.memory_space<vmem>>, %arg13: memref<1x32xf32, #tpu.memory_space<vmem>>, %arg14: memref<1x24x32xf32, #tpu.memory_space<vmem>>) attributes {dimension_semantics = [#tpu.dimension_semantics<parallel>], iteration_bounds = array<i64: 2>, scalar_prefetch = 0 : i64, scratch_operands = 0 : i64, tpu.core_type = #tpu.core_type<tc>, window_params = [{transform_indices = @transform_0, window_bounds = array<i64: 1, 24, 32>}, {pipeline_mode = #tpu.pipeline_mode<synchronous>, transform_indices = @transform_1, window_bounds = array<i64: 1, 32>}, {pipeline_mode = #tpu.pipeline_mode<synchronous>, transform_indices = @transform_2, window_bounds = array<i64: 1, 32>}, {pipeline_mode = #tpu.pipeline_mode<synchronous>, transform_indices = @transform_3, window_bounds = array<i64: 32, 96>}, {pipeline_mode = #tpu.pipeline_mode<synchronous>, transform_indices = @transform_4, window_bounds = array<i64: 1, 96>}, {pipeline_mode = #tpu.pipeline_mode<synchronous>, transform_indices = @transform_5, window_bounds = array<i64: 32, 32>}, {pipeline_mode = #tpu.pipeline_mode<synchronous>, transform_indices = @transform_6, window_bounds = array<i64: 1, 32>}, {pipeline_mode = #tpu.pipeline_mode<synchronous>, transform_indices = @transform_7, window_bounds = array<i64: 1, 32>}, {pipeline_mode = #tpu.pipeline_mode<synchronous>, transform_indices = @transform_8, window_bounds = array<i64: 1, 32>}, {pipeline_mode = #tpu.pipeline_mode<synchronous>, transform_indices = @transform_9, window_bounds = array<i64: 32, 128>}, {pipeline_mode = #tpu.pipeline_mode<synchronous>, transform_indices = @transform_10, window_bounds = array<i64: 1, 128>}, {pipeline_mode = #tpu.pipeline_mode<synchronous>, transform_indices = @transform_11, window_bounds = array<i64: 128, 32>}, {pipeline_mode = #tpu.pipeline_mode<synchronous>, transform_indices = @transform_12, window_bounds = array<i64: 1, 32>}, {transform_indices = @transform_13, window_bounds = array<i64: 1, 24, 32>}]} {
    %c0 = arith.constant 0 : index
    %c0_0 = arith.constant 0 : index
    %c0_1 = arith.constant 0 : index
    %0 = vector.load %arg1[%c0, %c0_0, %c0_1] : memref<1x24x32xf32, #tpu.memory_space<vmem>>, vector<1x24x32xf32>
    %1 = vector.shape_cast %0 : vector<1x24x32xf32> to vector<24x32xf32>
    %c0_2 = arith.constant 0 : index
    %c0_3 = arith.constant 0 : index
    %2 = vector.load %arg2[%c0_2, %c0_3] : memref<1x32xf32, #tpu.memory_space<vmem>>, vector<1x32xf32>
    %c0_4 = arith.constant 0 : index
    %c0_5 = arith.constant 0 : index
    %3 = vector.load %arg3[%c0_4, %c0_5] : memref<1x32xf32, #tpu.memory_space<vmem>>, vector<1x32xf32>
    %cst = arith.constant dense<0.000000e+00> : vector<24xf32>
    %4 = vector.multi_reduction <add>, %1, %cst [1] : vector<24x32xf32> to vector<24xf32>
    %5 = vector.shape_cast %4 : vector<24xf32> to vector<24x1xf32>
    %cst_6 = arith.constant 3.200000e+01 : f32
    %6 = vector.broadcast %cst_6 : f32 to vector<24x1xf32>
    %7 = arith.divf %5, %6 : vector<24x1xf32>
    %8 = vector.broadcast %7 : vector<24x1xf32> to vector<24x32xf32>
    %9 = arith.subf %1, %8 : vector<24x32xf32>
    %10 = arith.mulf %9, %9 : vector<24x32xf32>
    %cst_7 = arith.constant dense<0.000000e+00> : vector<24xf32>
    %11 = vector.multi_reduction <add>, %10, %cst_7 [1] : vector<24x32xf32> to vector<24xf32>
    %12 = vector.shape_cast %11 : vector<24xf32> to vector<24x1xf32>
    %cst_8 = arith.constant 3.200000e+01 : f32
    %13 = vector.broadcast %cst_8 : f32 to vector<24x1xf32>
    %14 = arith.divf %12, %13 : vector<24x1xf32>
    %15 = vector.broadcast %7 : vector<24x1xf32> to vector<24x32xf32>
    %16 = arith.subf %1, %15 : vector<24x32xf32>
    %cst_9 = arith.constant 9.99999974E-6 : f32
    %17 = vector.broadcast %cst_9 : f32 to vector<24x1xf32>
    %18 = arith.addf %14, %17 : vector<24x1xf32>
    %19 = math.rsqrt %18 : vector<24x1xf32>
    %20 = vector.broadcast %19 : vector<24x1xf32> to vector<24x32xf32>
    %21 = arith.mulf %16, %20 : vector<24x32xf32>
    %22 = vector.broadcast %2 : vector<1x32xf32> to vector<24x32xf32>
    %23 = arith.mulf %21, %22 : vector<24x32xf32>
    %24 = vector.broadcast %3 : vector<1x32xf32> to vector<24x32xf32>
    %25 = arith.addf %23, %24 : vector<24x32xf32>
    %c0_10 = arith.constant 0 : index
    %c0_11 = arith.constant 0 : index
    %26 = vector.load %arg4[%c0_10, %c0_11] : memref<32x96xf32, #tpu.memory_space<vmem>>, vector<32x96xf32>
    %cst_12 = arith.constant dense<0.000000e+00> : vector<24x96xf32>
    %27 = tpu.matmul %25, %26, %cst_12 {dimension_numbers = #tpu.dot_dimension_numbers<[1], [0], [0], [1], [0, 0, 1, 1], [], []>} : vector<24x32xf32>, vector<32x96xf32>, vector<24x96xf32> -> vector<24x96xf32>
    %c0_13 = arith.constant 0 : index
    %c0_14 = arith.constant 0 : index
    %28 = vector.load %arg5[%c0_13, %c0_14] : memref<1x96xf32, #tpu.memory_space<vmem>>, vector<1x96xf32>
    %29 = vector.broadcast %28 : vector<1x96xf32> to vector<24x96xf32>
    %30 = arith.addf %27, %29 : vector<24x96xf32>
    %31 = tpu.iota {dimensions = array<i32: 1>} : vector<1x24xi32>
    %c17_i32 = arith.constant 17 : i32
    %32 = vector.broadcast %c17_i32 : i32 to vector<1x24xi32>
    %33 = arith.cmpi slt, %31, %32 : vector<1x24xi32>
    %cst_15 = arith.constant 0.000000e+00 : f32
    %cst_16 = arith.constant -1.000000e+30 : f32
    %34 = vector.broadcast %cst_15 : f32 to vector<1x24xf32>
    %35 = vector.broadcast %cst_16 : f32 to vector<1x24xf32>
    %36 = arith.select %33, %34, %35 : vector<1x24xi1>, vector<1x24xf32>
    %c0_17 = arith.constant 0 : index
    %c0_18 = arith.constant 0 : index
    %37 = vector.load %arg6[%c0_17, %c0_18] : memref<32x32xf32, #tpu.memory_space<vmem>>, vector<32x32xf32>
    %cst_19 = arith.constant 0.000000e+00 : f32
    %38 = vector.broadcast %cst_19 : f32 to vector<24x32xf32>
    %39 = vector.extract_strided_slice %30 {offsets = [0, 0], sizes = [24, 8], strides = [1, 1]} : vector<24x96xf32> to vector<24x8xf32>
    %40 = vector.extract_strided_slice %30 {offsets = [0, 32], sizes = [24, 8], strides = [1, 1]} : vector<24x96xf32> to vector<24x8xf32>
    %41 = vector.extract_strided_slice %30 {offsets = [0, 64], sizes = [24, 8], strides = [1, 1]} : vector<24x96xf32> to vector<24x8xf32>
    %42 = tpu.transpose %40, [1, 0] : vector<24x8xf32> -> vector<8x24xf32>
    %cst_20 = arith.constant dense<0.000000e+00> : vector<24x24xf32>
    %43 = tpu.matmul %39, %42, %cst_20 {dimension_numbers = #tpu.dot_dimension_numbers<[1], [0], [0], [1], [0, 0, 1, 1], [], []>} : vector<24x8xf32>, vector<8x24xf32>, vector<24x24xf32> -> vector<24x24xf32>
    %cst_21 = arith.constant 0.353553385 : f32
    %44 = vector.broadcast %cst_21 : f32 to vector<24x24xf32>
    %45 = arith.mulf %43, %44 : vector<24x24xf32>
    %46 = vector.broadcast %36 : vector<1x24xf32> to vector<24x24xf32>
    %47 = arith.addf %45, %46 : vector<24x24xf32>
    %cst_22 = arith.constant dense<0xFF800000> : vector<24xf32>
    %48 = vector.multi_reduction <maximumf>, %47, %cst_22 [1] : vector<24x24xf32> to vector<24xf32>
    %49 = vector.shape_cast %48 : vector<24xf32> to vector<24x1xf32>
    %50 = vector.broadcast %49 : vector<24x1xf32> to vector<24x24xf32>
    %51 = arith.subf %47, %50 : vector<24x24xf32>
    %52 = math.exp %51 : vector<24x24xf32>
    %cst_23 = arith.constant dense<0.000000e+00> : vector<24xf32>
    %53 = vector.multi_reduction <add>, %52, %cst_23 [1] : vector<24x24xf32> to vector<24xf32>
    %54 = vector.shape_cast %53 : vector<24xf32> to vector<24x1xf32>
    %55 = tpu.reciprocal %54 {approx = true} : vector<24x1xf32> -> vector<24x1xf32>
    %56 = vector.broadcast %55 : vector<24x1xf32> to vector<24x24xf32>
    %57 = arith.mulf %52, %56 : vector<24x24xf32>
    %cst_24 = arith.constant dense<0.000000e+00> : vector<24x8xf32>
    %58 = tpu.matmul %57, %41, %cst_24 {dimension_numbers = #tpu.dot_dimension_numbers<[1], [0], [0], [1], [0, 0, 1, 1], [], []>} : vector<24x24xf32>, vector<24x8xf32>, vector<24x8xf32> -> vector<24x8xf32>
    %59 = vector.extract_strided_slice %37 {offsets = [0, 0], sizes = [8, 32], strides = [1, 1]} : vector<32x32xf32> to vector<8x32xf32>
    %cst_25 = arith.constant dense<0.000000e+00> : vector<24x32xf32>
    %60 = tpu.matmul %58, %59, %cst_25 {dimension_numbers = #tpu.dot_dimension_numbers<[1], [0], [0], [1], [0, 0, 1, 1], [], []>} : vector<24x8xf32>, vector<8x32xf32>, vector<24x32xf32> -> vector<24x32xf32>
    %61 = arith.addf %38, %60 : vector<24x32xf32>
    %62 = vector.extract_strided_slice %30 {offsets = [0, 8], sizes = [24, 8], strides = [1, 1]} : vector<24x96xf32> to vector<24x8xf32>
    %63 = vector.extract_strided_slice %30 {offsets = [0, 40], sizes = [24, 8], strides = [1, 1]} : vector<24x96xf32> to vector<24x8xf32>
    %64 = vector.extract_strided_slice %30 {offsets = [0, 72], sizes = [24, 8], strides = [1, 1]} : vector<24x96xf32> to vector<24x8xf32>
    %65 = tpu.transpose %63, [1, 0] : vector<24x8xf32> -> vector<8x24xf32>
    %cst_26 = arith.constant dense<0.000000e+00> : vector<24x24xf32>
    %66 = tpu.matmul %62, %65, %cst_26 {dimension_numbers = #tpu.dot_dimension_numbers<[1], [0], [0], [1], [0, 0, 1, 1], [], []>} : vector<24x8xf32>, vector<8x24xf32>, vector<24x24xf32> -> vector<24x24xf32>
    %cst_27 = arith.constant 0.353553385 : f32
    %67 = vector.broadcast %cst_27 : f32 to vector<24x24xf32>
    %68 = arith.mulf %66, %67 : vector<24x24xf32>
    %69 = vector.broadcast %36 : vector<1x24xf32> to vector<24x24xf32>
    %70 = arith.addf %68, %69 : vector<24x24xf32>
    %cst_28 = arith.constant dense<0xFF800000> : vector<24xf32>
    %71 = vector.multi_reduction <maximumf>, %70, %cst_28 [1] : vector<24x24xf32> to vector<24xf32>
    %72 = vector.shape_cast %71 : vector<24xf32> to vector<24x1xf32>
    %73 = vector.broadcast %72 : vector<24x1xf32> to vector<24x24xf32>
    %74 = arith.subf %70, %73 : vector<24x24xf32>
    %75 = math.exp %74 : vector<24x24xf32>
    %cst_29 = arith.constant dense<0.000000e+00> : vector<24xf32>
    %76 = vector.multi_reduction <add>, %75, %cst_29 [1] : vector<24x24xf32> to vector<24xf32>
    %77 = vector.shape_cast %76 : vector<24xf32> to vector<24x1xf32>
    %78 = tpu.reciprocal %77 {approx = true} : vector<24x1xf32> -> vector<24x1xf32>
    %79 = vector.broadcast %78 : vector<24x1xf32> to vector<24x24xf32>
    %80 = arith.mulf %75, %79 : vector<24x24xf32>
    %cst_30 = arith.constant dense<0.000000e+00> : vector<24x8xf32>
    %81 = tpu.matmul %80, %64, %cst_30 {dimension_numbers = #tpu.dot_dimension_numbers<[1], [0], [0], [1], [0, 0, 1, 1], [], []>} : vector<24x24xf32>, vector<24x8xf32>, vector<24x8xf32> -> vector<24x8xf32>
    %82 = vector.extract_strided_slice %37 {offsets = [8, 0], sizes = [8, 32], strides = [1, 1]} : vector<32x32xf32> to vector<8x32xf32>
    %cst_31 = arith.constant dense<0.000000e+00> : vector<24x32xf32>
    %83 = tpu.matmul %81, %82, %cst_31 {dimension_numbers = #tpu.dot_dimension_numbers<[1], [0], [0], [1], [0, 0, 1, 1], [], []>} : vector<24x8xf32>, vector<8x32xf32>, vector<24x32xf32> -> vector<24x32xf32>
    %84 = arith.addf %61, %83 : vector<24x32xf32>
    %85 = vector.extract_strided_slice %30 {offsets = [0, 16], sizes = [24, 8], strides = [1, 1]} : vector<24x96xf32> to vector<24x8xf32>
    %86 = vector.extract_strided_slice %30 {offsets = [0, 48], sizes = [24, 8], strides = [1, 1]} : vector<24x96xf32> to vector<24x8xf32>
    %87 = vector.extract_strided_slice %30 {offsets = [0, 80], sizes = [24, 8], strides = [1, 1]} : vector<24x96xf32> to vector<24x8xf32>
    %88 = tpu.transpose %86, [1, 0] : vector<24x8xf32> -> vector<8x24xf32>
    %cst_32 = arith.constant dense<0.000000e+00> : vector<24x24xf32>
    %89 = tpu.matmul %85, %88, %cst_32 {dimension_numbers = #tpu.dot_dimension_numbers<[1], [0], [0], [1], [0, 0, 1, 1], [], []>} : vector<24x8xf32>, vector<8x24xf32>, vector<24x24xf32> -> vector<24x24xf32>
    %cst_33 = arith.constant 0.353553385 : f32
    %90 = vector.broadcast %cst_33 : f32 to vector<24x24xf32>
    %91 = arith.mulf %89, %90 : vector<24x24xf32>
    %92 = vector.broadcast %36 : vector<1x24xf32> to vector<24x24xf32>
    %93 = arith.addf %91, %92 : vector<24x24xf32>
    %cst_34 = arith.constant dense<0xFF800000> : vector<24xf32>
    %94 = vector.multi_reduction <maximumf>, %93, %cst_34 [1] : vector<24x24xf32> to vector<24xf32>
    %95 = vector.shape_cast %94 : vector<24xf32> to vector<24x1xf32>
    %96 = vector.broadcast %95 : vector<24x1xf32> to vector<24x24xf32>
    %97 = arith.subf %93, %96 : vector<24x24xf32>
    %98 = math.exp %97 : vector<24x24xf32>
    %cst_35 = arith.constant dense<0.000000e+00> : vector<24xf32>
    %99 = vector.multi_reduction <add>, %98, %cst_35 [1] : vector<24x24xf32> to vector<24xf32>
    %100 = vector.shape_cast %99 : vector<24xf32> to vector<24x1xf32>
    %101 = tpu.reciprocal %100 {approx = true} : vector<24x1xf32> -> vector<24x1xf32>
    %102 = vector.broadcast %101 : vector<24x1xf32> to vector<24x24xf32>
    %103 = arith.mulf %98, %102 : vector<24x24xf32>
    %cst_36 = arith.constant dense<0.000000e+00> : vector<24x8xf32>
    %104 = tpu.matmul %103, %87, %cst_36 {dimension_numbers = #tpu.dot_dimension_numbers<[1], [0], [0], [1], [0, 0, 1, 1], [], []>} : vector<24x24xf32>, vector<24x8xf32>, vector<24x8xf32> -> vector<24x8xf32>
    %105 = vector.extract_strided_slice %37 {offsets = [16, 0], sizes = [8, 32], strides = [1, 1]} : vector<32x32xf32> to vector<8x32xf32>
    %cst_37 = arith.constant dense<0.000000e+00> : vector<24x32xf32>
    %106 = tpu.matmul %104, %105, %cst_37 {dimension_numbers = #tpu.dot_dimension_numbers<[1], [0], [0], [1], [0, 0, 1, 1], [], []>} : vector<24x8xf32>, vector<8x32xf32>, vector<24x32xf32> -> vector<24x32xf32>
    %107 = arith.addf %84, %106 : vector<24x32xf32>
    %108 = vector.extract_strided_slice %30 {offsets = [0, 24], sizes = [24, 8], strides = [1, 1]} : vector<24x96xf32> to vector<24x8xf32>
    %109 = vector.extract_strided_slice %30 {offsets = [0, 56], sizes = [24, 8], strides = [1, 1]} : vector<24x96xf32> to vector<24x8xf32>
    %110 = vector.extract_strided_slice %30 {offsets = [0, 88], sizes = [24, 8], strides = [1, 1]} : vector<24x96xf32> to vector<24x8xf32>
    %111 = tpu.transpose %109, [1, 0] : vector<24x8xf32> -> vector<8x24xf32>
    %cst_38 = arith.constant dense<0.000000e+00> : vector<24x24xf32>
    %112 = tpu.matmul %108, %111, %cst_38 {dimension_numbers = #tpu.dot_dimension_numbers<[1], [0], [0], [1], [0, 0, 1, 1], [], []>} : vector<24x8xf32>, vector<8x24xf32>, vector<24x24xf32> -> vector<24x24xf32>
    %cst_39 = arith.constant 0.353553385 : f32
    %113 = vector.broadcast %cst_39 : f32 to vector<24x24xf32>
    %114 = arith.mulf %112, %113 : vector<24x24xf32>
    %115 = vector.broadcast %36 : vector<1x24xf32> to vector<24x24xf32>
    %116 = arith.addf %114, %115 : vector<24x24xf32>
    %cst_40 = arith.constant dense<0xFF800000> : vector<24xf32>
    %117 = vector.multi_reduction <maximumf>, %116, %cst_40 [1] : vector<24x24xf32> to vector<24xf32>
    %118 = vector.shape_cast %117 : vector<24xf32> to vector<24x1xf32>
    %119 = vector.broadcast %118 : vector<24x1xf32> to vector<24x24xf32>
    %120 = arith.subf %116, %119 : vector<24x24xf32>
    %121 = math.exp %120 : vector<24x24xf32>
    %cst_41 = arith.constant dense<0.000000e+00> : vector<24xf32>
    %122 = vector.multi_reduction <add>, %121, %cst_41 [1] : vector<24x24xf32> to vector<24xf32>
    %123 = vector.shape_cast %122 : vector<24xf32> to vector<24x1xf32>
    %124 = tpu.reciprocal %123 {approx = true} : vector<24x1xf32> -> vector<24x1xf32>
    %125 = vector.broadcast %124 : vector<24x1xf32> to vector<24x24xf32>
    %126 = arith.mulf %121, %125 : vector<24x24xf32>
    %cst_42 = arith.constant dense<0.000000e+00> : vector<24x8xf32>
    %127 = tpu.matmul %126, %110, %cst_42 {dimension_numbers = #tpu.dot_dimension_numbers<[1], [0], [0], [1], [0, 0, 1, 1], [], []>} : vector<24x24xf32>, vector<24x8xf32>, vector<24x8xf32> -> vector<24x8xf32>
    %128 = vector.extract_strided_slice %37 {offsets = [24, 0], sizes = [8, 32], strides = [1, 1]} : vector<32x32xf32> to vector<8x32xf32>
    %cst_43 = arith.constant dense<0.000000e+00> : vector<24x32xf32>
    %129 = tpu.matmul %127, %128, %cst_43 {dimension_numbers = #tpu.dot_dimension_numbers<[1], [0], [0], [1], [0, 0, 1, 1], [], []>} : vector<24x8xf32>, vector<8x32xf32>, vector<24x32xf32> -> vector<24x32xf32>
    %130 = arith.addf %107, %129 : vector<24x32xf32>
    %131 = arith.addf %1, %130 : vector<24x32xf32>
    %c0_44 = arith.constant 0 : index
    %c0_45 = arith.constant 0 : index
    %132 = vector.load %arg7[%c0_44, %c0_45] : memref<1x32xf32, #tpu.memory_space<vmem>>, vector<1x32xf32>
    %133 = vector.broadcast %132 : vector<1x32xf32> to vector<24x32xf32>
    %134 = arith.addf %131, %133 : vector<24x32xf32>
    %c0_46 = arith.constant 0 : index
    %c0_47 = arith.constant 0 : index
    %135 = vector.load %arg8[%c0_46, %c0_47] : memref<1x32xf32, #tpu.memory_space<vmem>>, vector<1x32xf32>
    %c0_48 = arith.constant 0 : index
    %c0_49 = arith.constant 0 : index
    %136 = vector.load %arg9[%c0_48, %c0_49] : memref<1x32xf32, #tpu.memory_space<vmem>>, vector<1x32xf32>
    %cst_50 = arith.constant dense<0.000000e+00> : vector<24xf32>
    %137 = vector.multi_reduction <add>, %134, %cst_50 [1] : vector<24x32xf32> to vector<24xf32>
    %138 = vector.shape_cast %137 : vector<24xf32> to vector<24x1xf32>
    %cst_51 = arith.constant 3.200000e+01 : f32
    %139 = vector.broadcast %cst_51 : f32 to vector<24x1xf32>
    %140 = arith.divf %138, %139 : vector<24x1xf32>
    %141 = vector.broadcast %140 : vector<24x1xf32> to vector<24x32xf32>
    %142 = arith.subf %134, %141 : vector<24x32xf32>
    %143 = arith.mulf %142, %142 : vector<24x32xf32>
    %cst_52 = arith.constant dense<0.000000e+00> : vector<24xf32>
    %144 = vector.multi_reduction <add>, %143, %cst_52 [1] : vector<24x32xf32> to vector<24xf32>
    %145 = vector.shape_cast %144 : vector<24xf32> to vector<24x1xf32>
    %cst_53 = arith.constant 3.200000e+01 : f32
    %146 = vector.broadcast %cst_53 : f32 to vector<24x1xf32>
    %147 = arith.divf %145, %146 : vector<24x1xf32>
    %148 = vector.broadcast %140 : vector<24x1xf32> to vector<24x32xf32>
    %149 = arith.subf %134, %148 : vector<24x32xf32>
    %cst_54 = arith.constant 9.99999974E-6 : f32
    %150 = vector.broadcast %cst_54 : f32 to vector<24x1xf32>
    %151 = arith.addf %147, %150 : vector<24x1xf32>
    %152 = math.rsqrt %151 : vector<24x1xf32>
    %153 = vector.broadcast %152 : vector<24x1xf32> to vector<24x32xf32>
    %154 = arith.mulf %149, %153 : vector<24x32xf32>
    %155 = vector.broadcast %135 : vector<1x32xf32> to vector<24x32xf32>
    %156 = arith.mulf %154, %155 : vector<24x32xf32>
    %157 = vector.broadcast %136 : vector<1x32xf32> to vector<24x32xf32>
    %158 = arith.addf %156, %157 : vector<24x32xf32>
    %c0_55 = arith.constant 0 : index
    %c0_56 = arith.constant 0 : index
    %159 = vector.load %arg10[%c0_55, %c0_56] : memref<32x128xf32, #tpu.memory_space<vmem>>, vector<32x128xf32>
    %cst_57 = arith.constant dense<0.000000e+00> : vector<24x128xf32>
    %160 = tpu.matmul %158, %159, %cst_57 {dimension_numbers = #tpu.dot_dimension_numbers<[1], [0], [0], [1], [0, 0, 1, 1], [], []>} : vector<24x32xf32>, vector<32x128xf32>, vector<24x128xf32> -> vector<24x128xf32>
    %c0_58 = arith.constant 0 : index
    %c0_59 = arith.constant 0 : index
    %161 = vector.load %arg11[%c0_58, %c0_59] : memref<1x128xf32, #tpu.memory_space<vmem>>, vector<1x128xf32>
    %162 = vector.broadcast %161 : vector<1x128xf32> to vector<24x128xf32>
    %163 = arith.addf %160, %162 : vector<24x128xf32>
    %cst_60 = arith.constant 1.702000e+00 : f32
    %164 = vector.broadcast %cst_60 : f32 to vector<24x128xf32>
    %165 = arith.mulf %164, %163 : vector<24x128xf32>
    %166 = arith.negf %165 : vector<24x128xf32>
    %167 = math.exp %166 : vector<24x128xf32>
    %cst_61 = arith.constant 1.000000e+00 : f32
    %168 = vector.broadcast %cst_61 : f32 to vector<24x128xf32>
    %169 = arith.addf %168, %167 : vector<24x128xf32>
    %170 = arith.divf %168, %169 : vector<24x128xf32>
    %171 = arith.mulf %163, %170 : vector<24x128xf32>
    %c0_62 = arith.constant 0 : index
    %c0_63 = arith.constant 0 : index
    %172 = vector.load %arg12[%c0_62, %c0_63] : memref<128x32xf32, #tpu.memory_space<vmem>>, vector<128x32xf32>
    %cst_64 = arith.constant dense<0.000000e+00> : vector<24x32xf32>
    %173 = tpu.matmul %171, %172, %cst_64 {dimension_numbers = #tpu.dot_dimension_numbers<[1], [0], [0], [1], [0, 0, 1, 1], [], []>} : vector<24x128xf32>, vector<128x32xf32>, vector<24x32xf32> -> vector<24x32xf32>
    %c0_65 = arith.constant 0 : index
    %c0_66 = arith.constant 0 : index
    %174 = vector.load %arg13[%c0_65, %c0_66] : memref<1x32xf32, #tpu.memory_space<vmem>>, vector<1x32xf32>
    %175 = vector.broadcast %174 : vector<1x32xf32> to vector<24x32xf32>
    %176 = arith.addf %173, %175 : vector<24x32xf32>
    %177 = arith.addf %134, %176 : vector<24x32xf32>
    %c0_67 = arith.constant 0 : index
    %c0_68 = arith.constant 0 : index
    %c0_69 = arith.constant 0 : index
    %178 = vector.load %arg14[%c0_67, %c0_68, %c0_69] : memref<1x24x32xf32, #tpu.memory_space<vmem>>, vector<1x24x32xf32>
    %179 = vector.shape_cast %178 : vector<1x24x32xf32> to vector<24x32xf32>
    %180 = vector.shape_cast %177 : vector<24x32xf32> to vector<1x24x32xf32>
    tpu.vector_store %arg14[%c0_67, %c0_68, %c0_69], %180 {strides = array<i32>} : memref<1x24x32xf32, #tpu.memory_space<vmem>>, vector<1x24x32xf32>,
    return
  }
  func.func @transform_0(%arg0: i32) -> (i32, i32, i32) {
    %c0_i32 = arith.constant 0 : i32
    %c0_i32_0 = arith.constant 0 : i32
    %c0_i32_1 = arith.constant 0 : i32
    return %arg0, %c0_i32, %c0_i32_0 : i32, i32, i32
  }
  func.func @transform_1(%arg0: i32) -> (i32, i32) {
    %c0_i32 = arith.constant 0 : i32
    %c0_i32_0 = arith.constant 0 : i32
    %c0_i32_1 = arith.constant 0 : i32
    return %c0_i32, %c0_i32_0 : i32, i32
  }
  func.func @transform_2(%arg0: i32) -> (i32, i32) {
    %c0_i32 = arith.constant 0 : i32
    %c0_i32_0 = arith.constant 0 : i32
    %c0_i32_1 = arith.constant 0 : i32
    return %c0_i32, %c0_i32_0 : i32, i32
  }
  func.func @transform_3(%arg0: i32) -> (i32, i32) {
    %c0_i32 = arith.constant 0 : i32
    %c0_i32_0 = arith.constant 0 : i32
    %c0_i32_1 = arith.constant 0 : i32
    return %c0_i32, %c0_i32_0 : i32, i32
  }
  func.func @transform_4(%arg0: i32) -> (i32, i32) {
    %c0_i32 = arith.constant 0 : i32
    %c0_i32_0 = arith.constant 0 : i32
    %c0_i32_1 = arith.constant 0 : i32
    return %c0_i32, %c0_i32_0 : i32, i32
  }
  func.func @transform_5(%arg0: i32) -> (i32, i32) {
    %c0_i32 = arith.constant 0 : i32
    %c0_i32_0 = arith.constant 0 : i32
    %c0_i32_1 = arith.constant 0 : i32
    return %c0_i32, %c0_i32_0 : i32, i32
  }
  func.func @transform_6(%arg0: i32) -> (i32, i32) {
    %c0_i32 = arith.constant 0 : i32
    %c0_i32_0 = arith.constant 0 : i32
    %c0_i32_1 = arith.constant 0 : i32
    return %c0_i32, %c0_i32_0 : i32, i32
  }
  func.func @transform_7(%arg0: i32) -> (i32, i32) {
    %c0_i32 = arith.constant 0 : i32
    %c0_i32_0 = arith.constant 0 : i32
    %c0_i32_1 = arith.constant 0 : i32
    return %c0_i32, %c0_i32_0 : i32, i32
  }
  func.func @transform_8(%arg0: i32) -> (i32, i32) {
    %c0_i32 = arith.constant 0 : i32
    %c0_i32_0 = arith.constant 0 : i32
    %c0_i32_1 = arith.constant 0 : i32
    return %c0_i32, %c0_i32_0 : i32, i32
  }
  func.func @transform_9(%arg0: i32) -> (i32, i32) {
    %c0_i32 = arith.constant 0 : i32
    %c0_i32_0 = arith.constant 0 : i32
    %c0_i32_1 = arith.constant 0 : i32
    return %c0_i32, %c0_i32_0 : i32, i32
  }
  func.func @transform_10(%arg0: i32) -> (i32, i32) {
    %c0_i32 = arith.constant 0 : i32
    %c0_i32_0 = arith.constant 0 : i32
    %c0_i32_1 = arith.constant 0 : i32
    return %c0_i32, %c0_i32_0 : i32, i32
  }
  func.func @transform_11(%arg0: i32) -> (i32, i32) {
    %c0_i32 = arith.constant 0 : i32
    %c0_i32_0 = arith.constant 0 : i32
    %c0_i32_1 = arith.constant 0 : i32
    return %c0_i32, %c0_i32_0 : i32, i32
  }
  func.func @transform_12(%arg0: i32) -> (i32, i32) {
    %c0_i32 = arith.constant 0 : i32
    %c0_i32_0 = arith.constant 0 : i32
    %c0_i32_1 = arith.constant 0 : i32
    return %c0_i32, %c0_i32_0 : i32, i32
  }
  func.func @transform_13(%arg0: i32) -> (i32, i32, i32) {
    %c0_i32 = arith.constant 0 : i32
    %c0_i32_0 = arith.constant 0 : i32
    %c0_i32_1 = arith.constant 0 : i32
    return %arg0, %c0_i32, %c0_i32_0 : i32, i32, i32
  }
}

module attributes {stable_mosaic.version = 11 : i64} {
  func.func @_head_kernel(%arg0: memref<2x32xf32, #tpu.memory_space<vmem>>, %arg1: memref<1x32xf32, #tpu.memory_space<vmem>>, %arg2: memref<1x32xf32, #tpu.memory_space<vmem>>, %arg3: memref<32x16xf32, #tpu.memory_space<vmem>>, %arg4: memref<16x10xf32, #tpu.memory_space<vmem>>, %arg5: memref<1x10xf32, #tpu.memory_space<vmem>>, %arg6: memref<2x10xf32, #tpu.memory_space<vmem>>) attributes {dimension_semantics = [], scalar_prefetch = 0 : i64, scratch_operands = 0 : i64, tpu.core_type = #tpu.core_type<tc>} {
    %c0 = arith.constant 0 : index
    %c0_0 = arith.constant 0 : index
    %0 = vector.load %arg0[%c0, %c0_0] : memref<2x32xf32, #tpu.memory_space<vmem>>, vector<2x32xf32>
    %c0_1 = arith.constant 0 : index
    %c0_2 = arith.constant 0 : index
    %1 = vector.load %arg1[%c0_1, %c0_2] : memref<1x32xf32, #tpu.memory_space<vmem>>, vector<1x32xf32>
    %c0_3 = arith.constant 0 : index
    %c0_4 = arith.constant 0 : index
    %2 = vector.load %arg2[%c0_3, %c0_4] : memref<1x32xf32, #tpu.memory_space<vmem>>, vector<1x32xf32>
    %cst = arith.constant dense<0.000000e+00> : vector<2xf32>
    %3 = vector.multi_reduction <add>, %0, %cst [1] : vector<2x32xf32> to vector<2xf32>
    %4 = vector.shape_cast %3 : vector<2xf32> to vector<2x1xf32>
    %cst_5 = arith.constant 3.200000e+01 : f32
    %5 = vector.broadcast %cst_5 : f32 to vector<2x1xf32>
    %6 = arith.divf %4, %5 : vector<2x1xf32>
    %7 = vector.broadcast %6 : vector<2x1xf32> to vector<2x32xf32>
    %8 = arith.subf %0, %7 : vector<2x32xf32>
    %9 = arith.mulf %8, %8 : vector<2x32xf32>
    %cst_6 = arith.constant dense<0.000000e+00> : vector<2xf32>
    %10 = vector.multi_reduction <add>, %9, %cst_6 [1] : vector<2x32xf32> to vector<2xf32>
    %11 = vector.shape_cast %10 : vector<2xf32> to vector<2x1xf32>
    %cst_7 = arith.constant 3.200000e+01 : f32
    %12 = vector.broadcast %cst_7 : f32 to vector<2x1xf32>
    %13 = arith.divf %11, %12 : vector<2x1xf32>
    %14 = vector.broadcast %6 : vector<2x1xf32> to vector<2x32xf32>
    %15 = arith.subf %0, %14 : vector<2x32xf32>
    %cst_8 = arith.constant 9.99999974E-6 : f32
    %16 = vector.broadcast %cst_8 : f32 to vector<2x1xf32>
    %17 = arith.addf %13, %16 : vector<2x1xf32>
    %18 = math.rsqrt %17 : vector<2x1xf32>
    %19 = vector.broadcast %18 : vector<2x1xf32> to vector<2x32xf32>
    %20 = arith.mulf %15, %19 : vector<2x32xf32>
    %21 = vector.broadcast %1 : vector<1x32xf32> to vector<2x32xf32>
    %22 = arith.mulf %20, %21 : vector<2x32xf32>
    %23 = vector.broadcast %2 : vector<1x32xf32> to vector<2x32xf32>
    %24 = arith.addf %22, %23 : vector<2x32xf32>
    %c0_9 = arith.constant 0 : index
    %c0_10 = arith.constant 0 : index
    %25 = vector.load %arg3[%c0_9, %c0_10] : memref<32x16xf32, #tpu.memory_space<vmem>>, vector<32x16xf32>
    %cst_11 = arith.constant dense<0.000000e+00> : vector<2x16xf32>
    %26 = tpu.matmul %24, %25, %cst_11 {dimension_numbers = #tpu.dot_dimension_numbers<[1], [0], [0], [1], [0, 0, 1, 1], [], []>} : vector<2x32xf32>, vector<32x16xf32>, vector<2x16xf32> -> vector<2x16xf32>
    %27 = arith.mulf %26, %26 : vector<2x16xf32>
    %cst_12 = arith.constant dense<0.000000e+00> : vector<2xf32>
    %28 = vector.multi_reduction <add>, %27, %cst_12 [1] : vector<2x16xf32> to vector<2xf32>
    %29 = vector.shape_cast %28 : vector<2xf32> to vector<2x1xf32>
    %30 = math.rsqrt %29 : vector<2x1xf32>
    %31 = vector.broadcast %30 : vector<2x1xf32> to vector<2x16xf32>
    %32 = arith.mulf %26, %31 : vector<2x16xf32>
    %c0_13 = arith.constant 0 : index
    %c0_14 = arith.constant 0 : index
    %33 = vector.load %arg4[%c0_13, %c0_14] : memref<16x10xf32, #tpu.memory_space<vmem>>, vector<16x10xf32>
    %cst_15 = arith.constant dense<0.000000e+00> : vector<2x10xf32>
    %34 = tpu.matmul %32, %33, %cst_15 {dimension_numbers = #tpu.dot_dimension_numbers<[1], [0], [0], [1], [0, 0, 1, 1], [], []>} : vector<2x16xf32>, vector<16x10xf32>, vector<2x10xf32> -> vector<2x10xf32>
    %c0_16 = arith.constant 0 : index
    %c0_17 = arith.constant 0 : index
    %35 = vector.load %arg5[%c0_16, %c0_17] : memref<1x10xf32, #tpu.memory_space<vmem>>, vector<1x10xf32>
    %36 = vector.broadcast %35 : vector<1x10xf32> to vector<2x10xf32>
    %37 = arith.addf %34, %36 : vector<2x10xf32>
    %c0_18 = arith.constant 0 : index
    %c0_19 = arith.constant 0 : index
    %38 = vector.load %arg6[%c0_18, %c0_19] : memref<2x10xf32, #tpu.memory_space<vmem>>, vector<2x10xf32>
    tpu.vector_store %arg6[%c0_18, %c0_19], %37 {strides = array<i32>} : memref<2x10xf32, #tpu.memory_space<vmem>>, vector<2x10xf32>,
    return
  }
}

</mosaic_0001>

<llo_original>
// kernel: vit_forward.4
$region0: #{vit_forward.4}
  #allocation0 [shape = 'u32[]', space=smem, size = 0x4, offset = 0x4, fixed_abs, tag = 'smem constant byte address 0x4 - core index']
  #allocation1 [shape = 'u32[144,128]{1,0:T(1,128)}', space=vmem, size = 0x12000, scoped, tag = 'internal scratch']
  %s0 = inlined_call_operand.vmem [shape: f32[2,24,48], index: 0, kind: input, shape index: {}]
  %s1 = inlined_call_operand.vmem [shape: f32[48,32], index: 1, kind: input, shape index: {}]
  %s2 = inlined_call_operand.vmem [shape: f32[24,32], index: 2, kind: input, shape index: {}]
  %s3 = inlined_call_operand.vmem [shape: f32[1,32], index: 3, kind: input, shape index: {}]
  %s4 = inlined_call_operand.vmem [shape: f32[1,32], index: 4, kind: input, shape index: {}]
  %s5 = inlined_call_operand.vmem [shape: f32[2,24,32], index: 5, kind: output, shape index: {}]
  %s6 = sld [smem:[#allocation0]]
  $region53: #{vit_forward.4} parent=0
    _
  %s8 = ssub.s32 1, %s6
  %s9 = scalar_select 0, %s8, %s6
  loop: start=0, step=1, limit=4
  $region2: #{vit_forward.4} parent=0 // loop_pre_header
    _
  $region3: #{vit_forward.4} parent=0 // loop_header
    %s11 = sphi 0, %s15
    %p12 = scmp.ge.s32.totalorder %s11, 4
    %s21 = sphi 0, %s23
    %s24 = sphi 0, %s21
    %s25 = sphi 0, %s24
    %s41 = sphi 0, %s25
    %s45 = sphi 0, %s45
    %s47 = sphi 0, %s45
    %s48 = sphi 0, %s47
    %s62 = sphi 0, %s48
    %s66 = sphi 0, %s66
    %s68 = sphi 0, %s66
    %s69 = sphi 0, %s68
    %s83 = sphi 0, %s69
    %s87 = sphi 0, %s87
    %s89 = sphi 0, %s87
    %s90 = sphi 0, %s89
    %s104 = sphi 0, %s90
    %s108 = sphi 0, %s108
    %s110 = sphi 0, %s108
    %s111 = sphi 0, %s110
    %s125 = sphi 0, %s111
    %s131 = sphi 0, %s133
    %s134 = sphi 0, %s131
    %s135 = sphi 0, %s134
    %s151 = sphi 0, %s135
  $region4: #{vit_forward.4} parent=0 // loop_header_branch
    %14 = sbr.rel (%p12) target = $region8
  $region5: #{vit_forward.4} parent=0 // loop_body
    %s16 = ssub.s32 %s11, 1
    %s17 = ssub.s32 %s11, 2
    %s18 = sadd.s32 %s11, 1
    %s19 = ssub.s32 %s11, %s18
    %p20 = scmp.eq.s32.totalorder %s19, 0
    %s22 = sadd.s32 %s21, 1
    %s23 = scalar_select %p20, %s21, %s22
    %p26 = pneg %p20
    %p27 = scmp.eq.s32.totalorder %s11, 1
    %p28 = por %p26, %p27
    %p29 = scmp.ne.s32.totalorder %s21, %s24
    %p30 = scmp.eq.s32.totalorder %s11, 0
    %p31 = por %p29, %p30
    %p32 = scmp.ne.s32.totalorder %s21, %s24
    %p33 = scmp.eq.s32.totalorder %s16, 1
    %p34 = por %p32, %p33
    %p35 = scmp.ne.s32.totalorder %s24, %s25
    %p36 = scmp.eq.s32.totalorder %s16, 0
    %p37 = por %p35, %p36
    %p38 = scmp.ne.s32.totalorder %s24, %s25
    %p39 = scmp.eq.s32.totalorder %s17, 1
    %p40 = por %p38, %p39
    %p42 = scmp.ne.s32.totalorder %s25, %s41
    %p43 = scmp.eq.s32.totalorder %s17, 0
    %p44 = por %p42, %p43
    %s46 = sadd.s32 %s45, 1
    %p49 = scmp.eq.s32.totalorder %s11, 1
    %p50 = scmp.ne.s32.totalorder %s45, %s47
    %p51 = scmp.eq.s32.totalorder %s11, 0
    %p52 = por %p50, %p51
    %p53 = scmp.ne.s32.totalorder %s45, %s47
    %p54 = scmp.eq.s32.totalorder %s16, 1
    %p55 = por %p53, %p54
    %p56 = scmp.ne.s32.totalorder %s47, %s48
    %p57 = scmp.eq.s32.totalorder %s16, 0
    %p58 = por %p56, %p57
    %p59 = scmp.ne.s32.totalorder %s47, %s48
    %p60 = scmp.eq.s32.totalorder %s17, 1
    %p61 = por %p59, %p60
    %p63 = scmp.ne.s32.totalorder %s48, %s62
    %p64 = scmp.eq.s32.totalorder %s17, 0
    %p65 = por %p63, %p64
    %s67 = sadd.s32 %s66, 1
    %p70 = scmp.eq.s32.totalorder %s11, 1
    %p71 = scmp.ne.s32.totalorder %s66, %s68
    %p72 = scmp.eq.s32.totalorder %s11, 0
    %p73 = por %p71, %p72
    %p74 = scmp.ne.s32.totalorder %s66, %s68
    %p75 = scmp.eq.s32.totalorder %s16, 1
    %p76 = por %p74, %p75
    %p77 = scmp.ne.s32.totalorder %s68, %s69
    %p78 = scmp.eq.s32.totalorder %s16, 0
    %p79 = por %p77, %p78
    %p80 = scmp.ne.s32.totalorder %s68, %s69
    %p81 = scmp.eq.s32.totalorder %s17, 1
    %p82 = por %p80, %p81
    %p84 = scmp.ne.s32.totalorder %s69, %s83
    %p85 = scmp.eq.s32.totalorder %s17, 0
    %p86 = por %p84, %p85
    %s88 = sadd.s32 %s87, 1
    %p91 = scmp.eq.s32.totalorder %s11, 1
    %p92 = scmp.ne.s32.totalorder %s87, %s89
    %p93 = scmp.eq.s32.totalorder %s11, 0
    %p94 = por %p92, %p93
    %p95 = scmp.ne.s32.totalorder %s87, %s89
    %p96 = scmp.eq.s32.totalorder %s16, 1
    %p97 = por %p95, %p96
    %p98 = scmp.ne.s32.totalorder %s89, %s90
    %p99 = scmp.eq.s32.totalorder %s16, 0
    %p100 = por %p98, %p99
    %p101 = scmp.ne.s32.totalorder %s89, %s90
    %p102 = scmp.eq.s32.totalorder %s17, 1
    %p103 = por %p101, %p102
    %p105 = scmp.ne.s32.totalorder %s90, %s104
    %p106 = scmp.eq.s32.totalorder %s17, 0
    %p107 = por %p105, %p106
    %s109 = sadd.s32 %s108, 1
    %p112 = scmp.eq.s32.totalorder %s11, 1
    %p113 = scmp.ne.s32.totalorder %s108, %s110
    %p114 = scmp.eq.s32.totalorder %s11, 0
    %p115 = por %p113, %p114
    %p116 = scmp.ne.s32.totalorder %s108, %s110
    %p117 = scmp.eq.s32.totalorder %s16, 1
    %p118 = por %p116, %p117
    %p119 = scmp.ne.s32.totalorder %s110, %s111
    %p120 = scmp.eq.s32.totalorder %s16, 0
    %p121 = por %p119, %p120
    %p122 = scmp.ne.s32.totalorder %s110, %s111
    %p123 = scmp.eq.s32.totalorder %s17, 1
    %p124 = por %p122, %p123
    %p126 = scmp.ne.s32.totalorder %s111, %s125
    %p127 = scmp.eq.s32.totalorder %s17, 0
    %p128 = por %p126, %p127
    %s129 = ssub.s32 %s11, %s18
    %p130 = scmp.eq.s32.totalorder %s129, 0
    %s132 = sadd.s32 %s131, 1
    %s133 = scalar_select %p130, %s131, %s132
    %p136 = pneg %p130
    %p137 = scmp.eq.s32.totalorder %s11, 1
    %p138 = por %p136, %p137
    %p139 = scmp.ne.s32.totalorder %s131, %s134
    %p140 = scmp.eq.s32.totalorder %s11, 0
    %p141 = por %p139, %p140
    %p142 = scmp.ne.s32.totalorder %s131, %s134
    %p143 = scmp.eq.s32.totalorder %s16, 1
    %p144 = por %p142, %p143
    %p145 = scmp.ne.s32.totalorder %s134, %s135
    %p146 = scmp.eq.s32.totalorder %s16, 0
    %p147 = por %p145, %p146
    %p148 = scmp.ne.s32.totalorder %s134, %s135
    %p149 = scmp.eq.s32.totalorder %s17, 1
    %p150 = por %p148, %p149
    %p152 = scmp.ne.s32.totalorder %s135, %s151
    %p153 = scmp.eq.s32.totalorder %s17, 0
    %p154 = por %p152, %p153
    %p155 = scmp.le.s32.totalorder 1, %s11
    %p156 = scmp.lt.s32.totalorder %s11, 3
    %p157 = pnand %p155, %p156
    %p158 = pneg %p157
    // Predicated region
    $region9: #{vit_forward.4} parent=5 // pred_check
      _
    $region10: #{vit_forward.4} parent=5 // pred_check_branch
      %160 = sbr.rel (%p157) target = $region12
    $region11: #{vit_forward.4} parent=5 // pred_region
      %s161 = ssub.s32 %s11, 1
      // Predicated region
      $region13: #{vit_forward.4} parent=11 // pred_check
        %p162 = pneg %p58
      $region14: #{vit_forward.4} parent=11 // pred_check_branch
        %164 = sbr.rel (%p162) target = $region16
      $region15: #{vit_forward.4} parent=11 // pred_region
        _
      $region16: #{vit_forward.4} parent=11 // pred_fallthru
        _
      // Predicated region
      $region17: #{vit_forward.4} parent=11 // pred_check
        %p165 = pneg %p79
      $region18: #{vit_forward.4} parent=11 // pred_check_branch
        %167 = sbr.rel (%p165) target = $region20
      $region19: #{vit_forward.4} parent=11 // pred_region
        _
      $region20: #{vit_forward.4} parent=11 // pred_fallthru
        _
      // Predicated region
      $region21: #{vit_forward.4} parent=11 // pred_check
        %p168 = pneg %p100
      $region22: #{vit_forward.4} parent=11 // pred_check_branch
        %170 = sbr.rel (%p168) target = $region24
      $region23: #{vit_forward.4} parent=11 // pred_region
        _
      $region24: #{vit_forward.4} parent=11 // pred_fallthru
        _
      // Predicated region
      $region25: #{vit_forward.4} parent=11 // pred_check
        %p171 = pneg %p121
      $region26: #{vit_forward.4} parent=11 // pred_check_branch
        %173 = sbr.rel (%p171) target = $region28
      $region27: #{vit_forward.4} parent=11 // pred_region
        _
      $region28: #{vit_forward.4} parent=11 // pred_fallthru
        _
    $region12: #{vit_forward.4} parent=5 // pred_fallthru
      _
    %p174 = scmp.lt.s32.totalorder %s11, 2
    // Predicated region
    $region29: #{vit_forward.4} parent=5 // pred_check
      %p175 = pneg %p174
    $region30: #{vit_forward.4} parent=5 // pred_check_branch
      %177 = sbr.rel (%p175) target = $region32
    $region31: #{vit_forward.4} parent=5 // pred_region
      // Predicated region
      $region33: #{vit_forward.4} parent=31 // pred_check
        %p178 = pneg %p31
      $region34: #{vit_forward.4} parent=31 // pred_check_branch
        %180 = sbr.rel (%p178) target = $region36
      $region35: #{vit_forward.4} parent=31 // pred_region
        %p181 = scmp.lt.s32.totalorder %s11, 1
        %s182 = scalar_select %p181, %s11, 1
        %s183 = smul.addr %s182, 3
        %s184 = smul.addr %s183, 8
        %s185 = scalar_lea.vmem %s0, %s184
      $region36: #{vit_forward.4} parent=31 // pred_fallthru
        _
    $region32: #{vit_forward.4} parent=5 // pred_fallthru
      _
    %p186 = scmp.le.s32.totalorder 1, %s11
    %p187 = scmp.lt.s32.totalorder %s11, 3
    %p188 = pnand %p186, %p187
    %p189 = pneg %p188
    // Predicated region
    $region37: #{vit_forward.4} parent=5 // pred_check
      _
    $region38: #{vit_forward.4} parent=5 // pred_check_branch
      %191 = sbr.rel (%p188) target = $region40
    $region39: #{vit_forward.4} parent=5 // pred_region
      %s192 = ssub.s32 %s11, 1
      %p193 = scmp.lt.s32.totalorder %s16, 1
      %s194 = scalar_select %p193, %s16, 1
      %s195 = smul.addr %s194, 3
      %s196 = smul.addr %s195, 8
      %s197 = scalar_lea.vmem %s0, %s196
      %p198 = pneg %p37
      %p199 = pneg %p34
      %p200 = pneg %p58
      %p201 = pneg %p55
      %p202 = pneg %p79
      %p203 = pneg %p76
      %p204 = pneg %p100
      %p205 = pneg %p97
      %p206 = pneg %p121
      %p207 = pneg %p118
      %p208 = pneg %p147
      %p209 = pneg %p144
      %p210 = scmp.lt.s32.totalorder %s16, 1
      %s211 = scalar_select %p210, %s16, 1
      %s212 = smul.addr %s211, 3
      %s213 = smul.addr %s212, 8
      %s214 = scalar_lea.vmem %s5, %s213
      %p215 = scmp.lt.s32.totalorder %s16, 1
      %s216 = scalar_select %p215, %s16, 1
      %s217 = smul.addr %s216, 3
      %s218 = smul.addr %s217, 8
      %s219 = scalar_lea.vmem %s0, %s218
      %p220 = scmp.lt.s32.totalorder %s16, 1
      %s221 = scalar_select %p220, %s16, 1
      %s222 = smul.addr %s221, 3
      %s223 = smul.addr %s222, 8
      %s224 = scalar_lea.vmem %s5, %s223
      %v225 = vld [vmem:[%s219] sm:$0xff]
      %v226 = vld [vmem:[%s219 + $0x8] sm:$0xff]
      %v227 = vld [vmem:[%s219 + $0x10] sm:$0xff]
      %v228 = vld [vmem:[%s1] sm:$0xff]
      %v229 = vld [vmem:[%s1 + $0x8] sm:$0xff]
      %v230 = vld [vmem:[%s1 + $0x10] sm:$0xff]
      %v231 = vld [vmem:[%s1 + $0x18] sm:$0xff]
      %v232 = vld [vmem:[%s1 + $0x20] sm:$0xff]
      %v233 = vld [vmem:[%s1 + $0x28] sm:$0xff]
      %v234 = vld [vmem:[%s2] sm:$0xff]
      %v235 = vld [vmem:[%s2 + $0x8] sm:$0xff]
      %v236 = vld [vmem:[%s2 + $0x10] sm:$0xff]
      %vm237 = vcmask 392192
      %v239 = vsel %vm237, %v225, 0
      %v242 = vsel %vm237, %v226, 0
      %v245 = vsel %vm237, %v227, 0
      %247 = vmatprep.subr.mxu0 0.0
      %248 = vmatpush1.msra.mxu0 %v228
      %249 = vmatprep.subr.mxu0 0.0
      %250 = vmatpush1.msra.mxu0 %v229
      %251 = vmatprep.subr.mxu0 0.0
      %252 = vmatpush1.msra.mxu0 %v230
      %253 = vmatprep.subr.mxu0 0.0
      %254 = vmatpush1.msra.mxu0 %v231
      %255 = vmatprep.subr.mxu0 0.0
      %256 = vmatpush1.msra.mxu0 %v232
      %257 = vmatprep.subr.mxu0 0.0
      %258 = vmatpush1.msra.mxu0 %v233
      %259 = vmatprep.subr.mxu0 0.0
      %260 = vmatpush1.msra.mxu0 0.0
      %261 = vmatprep.subr.mxu0 0.0
      %262 = vmatpush1.msra.mxu0 0.0
      %263 = vmatprep.subr.mxu0 0.0
      %264 = vmatpush1.msra.mxu0 0.0
      %265 = vmatprep.subr.mxu0 0.0
      %266 = vmatpush1.msra.mxu0 0.0
      %267 = vmatprep.subr.mxu0 0.0
      %268 = vmatpush1.msra.mxu0 0.0
      %269 = vmatprep.subr.mxu0 0.0
      %270 = vmatpush1.msra.mxu0 0.0
      %271 = vmatprep.subr.mxu0 0.0
      %272 = vmatpush1.msra.mxu0 0.0
      %273 = vmatprep.subr.mxu0 0.0
      %274 = vmatpush1.msra.mxu0 0.0
      %275 = vmatprep.subr.mxu0 0.0
      %276 = vmatpush1.msra.mxu0 0.0
      %277 = vmatprep.subr.mxu0 0.0
      %278 = vmatpush1.msra.mxu0 0.0
      %279 = vmatprep.subr.mxu0 0.0
      %280 = vmatpush1.msra.mxu0 0.0
      %281 = vmatprep.subr.mxu0 0.0
      %282 = vmatpush1.msra.mxu0 0.0
      %283 = vmatprep.subr.mxu0 0.0
      %284 = vmatpush1.msra.mxu0 0.0
      %285 = vmatprep.subr.mxu0 0.0
      %286 = vmatpush1.msra.mxu0 0.0
      %287 = vmatprep.subr.mxu0 0.0
      %288 = vmatpush1.msra.mxu0 0.0
      %289 = vmatprep.subr.mxu0 0.0
      %290 = vmatpush1.msra.mxu0 0.0
      %291 = vmatprep.subr.mxu0 0.0
      %292 = vmatpush1.msra.mxu0 0.0
      %293 = vmatprep.subr.mxu0 0.0
      %294 = vmatpush1.msra.mxu0 0.0
      %295 = vmatprep.subr.mxu0 0.0
      %296 = vmatpush1.msra.mxu0 0.0
      %297 = vmatprep.subr.mxu0 0.0
      %298 = vmatpush1.msra.mxu0 0.0
      %299 = vmatprep.subr.mxu0 0.0
      %300 = vmatpush1.msra.mxu0 0.0
      %301 = vmatprep.subr.mxu0 0.0
      %302 = vmatpush1.msra.mxu0 0.0
      %303 = vmatprep.subr.mxu0 0.0
      %304 = vmatpush1.msra.mxu0 0.0
      %305 = vmatprep.subr.mxu0 0.0
      %306 = vmatpush1.msra.mxu0 0.0
      %307 = vmatprep.subr.mxu0 0.0
      %308 = vmatpush1.msra.mxu0 0.0
      %309 = vmatprep.subr.mxu0 0.0
      %310 = vmatpush1.msra.mxu0 0.0
      %311 = vmatprep.mubr.f32.mxu0 0.0
      %312 = vmatmul.mubr.f32.gmra.mrb[0].mxu0 %v239
      %v313 = vpop.f32.mrb[0].mxu0
      %v314 = vadd.f32 %v234, %v313
      %v315 = vpop.f32.mrb[0].mxu0
      %316 = vmatprep.mubr.f32.mxu0 0.0
      %317 = vmatmul.mubr.f32.gmra.mrb[0].mxu0 %v242
      %v318 = vpop.f32.mrb[0].mxu0
      %v319 = vadd.f32 %v235, %v318
      %v320 = vpop.f32.mrb[0].mxu0
      %321 = vmatprep.mubr.f32.mxu0 0.0
      %322 = vmatmul.mubr.f32.gmra.mrb[0].mxu0 %v245
      %v323 = vpop.f32.mrb[0].mxu0
      %v324 = vadd.f32 %v236, %v323
      %v325 = vpop.f32.mrb[0].mxu0
      %326 = vdwg.mxu0
      %v327 = vld [vmem:[%s3] sm:$0x1]
      %v328 = vld [vmem:[%s4] sm:$0x1]
      %vm329 = vcmask 261120
      %v330 = vsel %vm329, %v314, 0.0
      %331 = vadd.xlane.f32.xlu0 %v330
      %v332 = vpop.xlane.xlu0 %331
      %v333 = vsel %vm329, %v319, 0.0
      %334 = vadd.xlane.f32.xlu0 %v333
      %v335 = vpop.xlane.xlu0 %334
      %v336 = vsel %vm329, %v324, 0.0
      %337 = vadd.xlane.f32.xlu0 %v336
      %v338 = vpop.xlane.xlu0 %337
      %v339 = vrcp.pop 32.0
      %v340 = vmul.f32 %v332, %v339
      %v341 = vmul.f32 %v335, %v339
      %v342 = vmul.f32 %v338, %v339
      %v343 = vsub.f32 %v314, %v340
      %v344 = vsub.f32 %v319, %v341
      %v345 = vsub.f32 %v324, %v342
      %v346 = vmul.f32 %v343, %v343
      %v347 = vmul.f32 %v344, %v344
      %v348 = vmul.f32 %v345, %v345
      %v349 = vsel %vm329, %v346, 0.0
      %350 = vadd.xlane.f32.xlu0 %v349
      %v351 = vpop.xlane.xlu0 %350
      %v352 = vsel %vm329, %v347, 0.0
      %353 = vadd.xlane.f32.xlu0 %v352
      %v354 = vpop.xlane.xlu0 %353
      %v355 = vsel %vm329, %v348, 0.0
      %356 = vadd.xlane.f32.xlu0 %v355
      %v357 = vpop.xlane.xlu0 %356
      %v358 = vmul.f32 %v351, %v339
      %v359 = vmul.f32 %v354, %v339
      %v360 = vmul.f32 %v357, %v339
      %v361 = vadd.f32 %v358, 1e-05
      %v362 = vadd.f32 %v359, 1e-05
      %v363 = vadd.f32 %v360, 1e-05
      %v364 = vrsqrt.pop %v361
      %v365 = vrsqrt.pop %v362
      %v366 = vrsqrt.pop %v363
      %v367 = vmul.f32 %v343, %v364
      %v368 = vmul.f32 %v344, %v365
      %v369 = vmul.f32 %v345, %v366
      %v371 = vlaneseq
      %v372 = vshrl.u32 %v371, 7
      %v373 = vsub.s32 0, %v372
      %v374 = vrot.slane %v327, %v373
      %v376 = vmul.f32 %v367, %v374
      %v377 = vmul.f32 %v368, %v374
      %v378 = vmul.f32 %v369, %v374
      %v380 = vlaneseq
      %v381 = vshrl.u32 %v380, 7
      %v382 = vsub.s32 0, %v381
      %v383 = vrot.slane %v328, %v382
      %v385 = vadd.f32 %v376, %v383
      %v386 = vadd.f32 %v377, %v383
      %v387 = vadd.f32 %v378, %v383
      %388 = vst.msk [vmem:[%s224] sm:$0xff] %vm329, %v385
      %389 = vst.msk [vmem:[%s224 + $0x8] sm:$0xff] %vm329, %v386
      %390 = vst.msk [vmem:[%s224 + $0x10] sm:$0xff] %vm329, %v387
      %p391 = scmp.lt.s32.totalorder %s16, 1
      %s392 = scalar_select %p391, %s16, 1
      %s393 = smul.addr %s392, 3
      %s394 = smul.addr %s393, 8
      %s395 = scalar_lea.vmem %s5, %s394
      // Predicated region
      $region41: #{vit_forward.4} parent=39 // pred_check
        %p396 = pneg %p144
      $region42: #{vit_forward.4} parent=39 // pred_check_branch
        %398 = sbr.rel (%p396) target = $region44
      $region43: #{vit_forward.4} parent=39 // pred_region
        _
      $region44: #{vit_forward.4} parent=39 // pred_fallthru
        _
    $region40: #{vit_forward.4} parent=5 // pred_fallthru
      _
    %p399 = scmp.le.s32.totalorder 2, %s11
    // Predicated region
    $region45: #{vit_forward.4} parent=5 // pred_check
      %p400 = pneg %p399
    $region46: #{vit_forward.4} parent=5 // pred_check_branch
      %402 = sbr.rel (%p400) target = $region48
    $region47: #{vit_forward.4} parent=5 // pred_region
      %s403 = ssub.s32 %s11, 2
      // Predicated region
      $region49: #{vit_forward.4} parent=47 // pred_check
        %p404 = pneg %p150
      $region50: #{vit_forward.4} parent=47 // pred_check_branch
        %406 = sbr.rel (%p404) target = $region52
      $region51: #{vit_forward.4} parent=47 // pred_region
        %p407 = scmp.lt.s32.totalorder %s17, 1
        %s408 = scalar_select %p407, %s17, 1
        %s409 = smul.addr %s408, 3
        %s410 = smul.addr %s409, 8
        %s411 = scalar_lea.vmem %s5, %s410
      $region52: #{vit_forward.4} parent=47 // pred_fallthru
        _
    $region48: #{vit_forward.4} parent=5 // pred_fallthru
      _
  $region6: #{vit_forward.4} parent=0 // loop_footer
    %s15 = sadd.s32 1, %s11
  $region7: #{vit_forward.4} parent=0 // loop_footer_branch
    %10 = sbr.rel target = $region3
  $region8: #{vit_forward.4} parent=0 // loop_exit
    _

// kernel: vit_forward.7
$region0: #{vit_forward.7}
  #allocation0 [shape = 'u32[]', space=smem, size = 0x4, offset = 0x4, fixed_abs, tag = 'smem constant byte address 0x4 - core index']
  #allocation1 [shape = 'u32[144,128]{1,0:T(1,128)}', space=vmem, size = 0x12000, scoped, tag = 'internal scratch']
  %s0 = inlined_call_operand.vmem [shape: f32[2,32], index: 0, kind: input, shape index: {}]
  %s1 = inlined_call_operand.vmem [shape: f32[1,32], index: 1, kind: input, shape index: {}]
  %s2 = inlined_call_operand.vmem [shape: f32[1,32], index: 2, kind: input, shape index: {}]
  %s3 = inlined_call_operand.vmem [shape: f32[32,16], index: 3, kind: input, shape index: {}]
  %s4 = inlined_call_operand.vmem [shape: f32[16,10], index: 4, kind: input, shape index: {}]
  %s5 = inlined_call_operand.vmem [shape: f32[1,10], index: 5, kind: input, shape index: {}]
  %s6 = inlined_call_operand.hbm [shape: f32[2,10], index: 6, kind: output, shape index: {}]
  %s7 = sld [smem:[#allocation0]]
  $region34: #{vit_forward.7} parent=0
    _
  %s9 = ssub.s32 1, %s7
  %s10 = scalar_select 0, %s9, %s7
  $region1: #{vit_forward.7} parent=0
    #allocation2 [shape = 'u8[1024]{0}', space=vmem, size = 0x400, scoped, tag = 'output window, operand 0, single buffered']
    #allocation3 [shape = 's32[1]{0}', space=sflag, size = 0x4, scoped, tag = 'scoped memory for vit_forward.7']
    %11 = vsyncpa [#allocation3], 0
    // Predicated region
    $region2: #{vit_forward.7} parent=1 // pred_check
      _
    $region3: #{vit_forward.7} parent=1 // pred_check_branch
      %13 = sbr.rel (0) target = $region5
    $region4: #{vit_forward.7} parent=1 // pred_region
      _
    $region5: #{vit_forward.7} parent=1 // pred_fallthru
      _
    // Predicated region
    $region6: #{vit_forward.7} parent=1 // pred_check
      _
    $region7: #{vit_forward.7} parent=1 // pred_check_branch
      %15 = sbr.rel (0) target = $region9
    $region8: #{vit_forward.7} parent=1 // pred_region
      _
    $region9: #{vit_forward.7} parent=1 // pred_fallthru
      _
    // Predicated region
    $region10: #{vit_forward.7} parent=1 // pred_check
      _
    $region11: #{vit_forward.7} parent=1 // pred_check_branch
      %17 = sbr.rel (0) target = $region13
    $region12: #{vit_forward.7} parent=1 // pred_region
      _
    $region13: #{vit_forward.7} parent=1 // pred_fallthru
      _
    // Predicated region
    $region14: #{vit_forward.7} parent=1 // pred_check
      _
    $region15: #{vit_forward.7} parent=1 // pred_check_branch
      %19 = sbr.rel (0) target = $region17
    $region16: #{vit_forward.7} parent=1 // pred_region
      _
    $region17: #{vit_forward.7} parent=1 // pred_fallthru
      _
    // Predicated region
    $region18: #{vit_forward.7} parent=1 // pred_check
      _
    $region19: #{vit_forward.7} parent=1 // pred_check_branch
      %21 = sbr.rel (0) target = $region21
    $region20: #{vit_forward.7} parent=1 // pred_region
      _
    $region21: #{vit_forward.7} parent=1 // pred_fallthru
      _
    // Predicated region
    $region22: #{vit_forward.7} parent=1 // pred_check
      _
    $region23: #{vit_forward.7} parent=1 // pred_check_branch
      %23 = sbr.rel (0) target = $region25
    $region24: #{vit_forward.7} parent=1 // pred_region
      _
    $region25: #{vit_forward.7} parent=1 // pred_fallthru
      _
    %v24 = vld [vmem:[%s0] sm:$0x3]
    %v25 = vld [vmem:[%s1] sm:$0x1]
    %v26 = vld [vmem:[%s2] sm:$0x1]
    %vm27 = vcmask 254976
    %v28 = vsel %vm27, %v24, 0.0
    %29 = vadd.xlane.f32.xlu0 %v28
    %v30 = vpop.xlane.xlu0 %29
    %v31 = vrcp.pop 32.0
    %v32 = vmul.f32 %v30, %v31
    %v33 = vsub.f32 %v24, %v32
    %v34 = vmul.f32 %v33, %v33
    %v35 = vsel %vm27, %v34, 0.0
    %36 = vadd.xlane.f32.xlu0 %v35
    %v37 = vpop.xlane.xlu0 %36
    %v38 = vmul.f32 %v37, %v31
    %v39 = vadd.f32 %v38, 1e-05
    %v40 = vrsqrt.pop %v39
    %v41 = vmul.f32 %v33, %v40
    %v43 = vlaneseq
    %v44 = vshrl.u32 %v43, 7
    %v45 = vsub.s32 0, %v44
    %v46 = vrot.slane %v25, %v45
    %v48 = vmul.f32 %v41, %v46
    %v50 = vlaneseq
    %v51 = vshrl.u32 %v50, 7
    %v52 = vsub.s32 0, %v51
    %v53 = vrot.slane %v26, %v52
    %v55 = vadd.f32 %v48, %v53
    %v56 = vld [vmem:[%s3] sm:$0xff]
    %v57 = vld [vmem:[%s3 + $0x8] sm:$0xff]
    %v58 = vld [vmem:[%s3 + $0x10] sm:$0xff]
    %v59 = vld [vmem:[%s3 + $0x18] sm:$0xff]
    %vm60 = vcmask 261120
    %v62 = vsel %vm60, %v55, 0
    %64 = vmatprep.subr.mxu0 0.0
    %65 = vmatpush1.msra.mxu0 %v56
    %66 = vmatprep.subr.mxu0 0.0
    %67 = vmatpush1.msra.mxu0 %v57
    %68 = vmatprep.subr.mxu0 0.0
    %69 = vmatpush1.msra.mxu0 %v58
    %70 = vmatprep.subr.mxu0 0.0
    %71 = vmatpush1.msra.mxu0 %v59
    %72 = vmatprep.subr.mxu0 0.0
    %73 = vmatpush1.msra.mxu0 0.0
    %74 = vmatprep.subr.mxu0 0.0
    %75 = vmatpush1.msra.mxu0 0.0
    %76 = vmatprep.subr.mxu0 0.0
    %77 = vmatpush1.msra.mxu0 0.0
    %78 = vmatprep.subr.mxu0 0.0
    %79 = vmatpush1.msra.mxu0 0.0
    %80 = vmatprep.subr.mxu0 0.0
    %81 = vmatpush1.msra.mxu0 0.0
    %82 = vmatprep.subr.mxu0 0.0
    %83 = vmatpush1.msra.mxu0 0.0
    %84 = vmatprep.subr.mxu0 0.0
    %85 = vmatpush1.msra.mxu0 0.0
    %86 = vmatprep.subr.mxu0 0.0
    %87 = vmatpush1.msra.mxu0 0.0
    %88 = vmatprep.subr.mxu0 0.0
    %89 = vmatpush1.msra.mxu0 0.0
    %90 = vmatprep.subr.mxu0 0.0
    %91 = vmatpush1.msra.mxu0 0.0
    %92 = vmatprep.subr.mxu0 0.0
    %93 = vmatpush1.msra.mxu0 0.0
    %94 = vmatprep.subr.mxu0 0.0
    %95 = vmatpush1.msra.mxu0 0.0
    %96 = vmatprep.subr.mxu0 0.0
    %97 = vmatpush1.msra.mxu0 0.0
    %98 = vmatprep.subr.mxu0 0.0
    %99 = vmatpush1.msra.mxu0 0.0
    %100 = vmatprep.subr.mxu0 0.0
    %101 = vmatpush1.msra.mxu0 0.0
    %102 = vmatprep.subr.mxu0 0.0
    %103 = vmatpush1.msra.mxu0 0.0
    %104 = vmatprep.subr.mxu0 0.0
    %105 = vmatpush1.msra.mxu0 0.0
    %106 = vmatprep.subr.mxu0 0.0
    %107 = vmatpush1.msra.mxu0 0.0
    %108 = vmatprep.subr.mxu0 0.0
    %109 = vmatpush1.msra.mxu0 0.0
    %110 = vmatprep.subr.mxu0 0.0
    %111 = vmatpush1.msra.mxu0 0.0
    %112 = vmatprep.subr.mxu0 0.0
    %113 = vmatpush1.msra.mxu0 0.0
    %114 = vmatprep.subr.mxu0 0.0
    %115 = vmatpush1.msra.mxu0 0.0
    %116 = vmatprep.subr.mxu0 0.0
    %117 = vmatpush1.msra.mxu0 0.0
    %118 = vmatprep.subr.mxu0 0.0
    %119 = vmatpush1.msra.mxu0 0.0
    %120 = vmatprep.subr.mxu0 0.0
    %121 = vmatpush1.msra.mxu0 0.0
    %122 = vmatprep.subr.mxu0 0.0
    %123 = vmatpush1.msra.mxu0 0.0
    %124 = vmatprep.subr.mxu0 0.0
    %125 = vmatpush1.msra.mxu0 0.0
    %126 = vmatprep.subr.mxu0 0.0
    %127 = vmatpush1.msra.mxu0 0.0
    %128 = vmatprep.mubr.f32.mxu0 0.0
    %129 = vmatmul.mubr.f32.gmra.mrb[0].mxu0 %v62
    %v130 = vpop.f32.mrb[0].mxu0
    %v131 = vadd.f32 0.0, %v130
    %v132 = vpop.f32.mrb[0].mxu0
    %133 = vdwg.mxu0
    %v134 = vmul.f32 %v131, %v131
    %vm135 = vcmask 123904
    %v136 = vsel %vm135, %v134, 0.0
    %137 = vadd.xlane.f32.xlu0 %v136
    %v138 = vpop.xlane.xlu0 %137
    %v139 = vrsqrt.pop %v138
    %v140 = vmul.f32 %v131, %v139
    %v141 = vld [vmem:[%s4] sm:$0xff]
    %v142 = vld [vmem:[%s4 + $0x8] sm:$0xff]
    %v143 = vld [vmem:[%s5] sm:$0x1]
    %v145 = vlaneseq
    %v146 = vshrl.u32 %v145, 7
    %v147 = vsub.s32 0, %v146
    %v148 = vrot.slane %v143, %v147
    %vm150 = vcmask 130048
    %v152 = vsel %vm150, %v140, 0
    %154 = vmatprep.subr.mxu0 0.0
    %155 = vmatpush1.msra.mxu0 %v141
    %156 = vmatprep.subr.mxu0 0.0
    %157 = vmatpush1.msra.mxu0 %v142
    %158 = vmatprep.subr.mxu0 0.0
    %159 = vmatpush1.msra.mxu0 0.0
    %160 = vmatprep.subr.mxu0 0.0
    %161 = vmatpush1.msra.mxu0 0.0
    %162 = vmatprep.subr.mxu0 0.0
    %163 = vmatpush1.msra.mxu0 0.0
    %164 = vmatprep.subr.mxu0 0.0
    %165 = vmatpush1.msra.mxu0 0.0
    %166 = vmatprep.subr.mxu0 0.0
    %167 = vmatpush1.msra.mxu0 0.0
    %168 = vmatprep.subr.mxu0 0.0
    %169 = vmatpush1.msra.mxu0 0.0
    %170 = vmatprep.subr.mxu0 0.0
    %171 = vmatpush1.msra.mxu0 0.0
    %172 = vmatprep.subr.mxu0 0.0
    %173 = vmatpush1.msra.mxu0 0.0
    %174 = vmatprep.subr.mxu0 0.0
    %175 = vmatpush1.msra.mxu0 0.0
    %176 = vmatprep.subr.mxu0 0.0
    %177 = vmatpush1.msra.mxu0 0.0
    %178 = vmatprep.subr.mxu0 0.0
    %179 = vmatpush1.msra.mxu0 0.0
    %180 = vmatprep.subr.mxu0 0.0
    %181 = vmatpush1.msra.mxu0 0.0
    %182 = vmatprep.subr.mxu0 0.0
    %183 = vmatpush1.msra.mxu0 0.0
    %184 = vmatprep.subr.mxu0 0.0
    %185 = vmatpush1.msra.mxu0 0.0
    %186 = vmatprep.subr.mxu0 0.0
    %187 = vmatpush1.msra.mxu0 0.0
    %188 = vmatprep.subr.mxu0 0.0
    %189 = vmatpush1.msra.mxu0 0.0
    %190 = vmatprep.subr.mxu0 0.0
    %191 = vmatpush1.msra.mxu0 0.0
    %192 = vmatprep.subr.mxu0 0.0
    %193 = vmatpush1.msra.mxu0 0.0
    %194 = vmatprep.subr.mxu0 0.0
    %195 = vmatpush1.msra.mxu0 0.0
    %196 = vmatprep.subr.mxu0 0.0
    %197 = vmatpush1.msra.mxu0 0.0
    %198 = vmatprep.subr.mxu0 0.0
    %199 = vmatpush1.msra.mxu0 0.0
    %200 = vmatprep.subr.mxu0 0.0
    %201 = vmatpush1.msra.mxu0 0.0
    %202 = vmatprep.subr.mxu0 0.0
    %203 = vmatpush1.msra.mxu0 0.0
    %204 = vmatprep.subr.mxu0 0.0
    %205 = vmatpush1.msra.mxu0 0.0
    %206 = vmatprep.subr.mxu0 0.0
    %207 = vmatpush1.msra.mxu0 0.0
    %208 = vmatprep.subr.mxu0 0.0
    %209 = vmatpush1.msra.mxu0 0.0
    %210 = vmatprep.subr.mxu0 0.0
    %211 = vmatpush1.msra.mxu0 0.0
    %212 = vmatprep.subr.mxu0 0.0
    %213 = vmatpush1.msra.mxu0 0.0
    %214 = vmatprep.subr.mxu0 0.0
    %215 = vmatpush1.msra.mxu0 0.0
    %216 = vmatprep.subr.mxu0 0.0
    %217 = vmatpush1.msra.mxu0 0.0
    %218 = vmatprep.mubr.f32.mxu0 0.0
    %219 = vmatmul.mubr.f32.gmra.mrb[0].mxu0 %v152
    %v220 = vpop.f32.mrb[0].mxu0
    %v221 = vadd.f32 %v148, %v220
    %v222 = vpop.f32.mrb[0].mxu0
    %223 = vdwg.mxu0
    %vm224 = vcmask 74752
    %225 = vst.msk [vmem:[#allocation2] sm:$0x3] %vm224, %v221
    // Predicated region
    $region26: #{vit_forward.7} parent=1 // pred_check
      _
    $region27: #{vit_forward.7} parent=1 // pred_check_branch
      %227 = sbr.rel (0) target = $region29
    $region28: #{vit_forward.7} parent=1 // pred_region
      %s229 = ssub.s32 32, 32
      %230 = vsyncadd [#allocation3], %s229
      %s232 = sshll.u32 [#allocation2], 4
      %s233 = int_to_ptr.vmem [resolvable:$true] %s232
      %235 = dma.vmem_to_hbm [thread:$0]  %s233, 32, %s6, [#allocation3]
    $region29: #{vit_forward.7} parent=1 // pred_fallthru
      _
    // Predicated region
    $region30: #{vit_forward.7} parent=1 // pred_check
      _
    $region31: #{vit_forward.7} parent=1 // pred_check_branch
      %237 = sbr.rel (0) target = $region33
    $region32: #{vit_forward.7} parent=1 // pred_region
      %238 = dma.done [#allocation3], 32
    $region33: #{vit_forward.7} parent=1 // pred_fallthru
      _
    %239 = vsyncpa [#allocation3], 1

// kernel: vit_forward.5
$region0: #{vit_forward.5}
  #allocation0 [shape = 'u32[]', space=smem, size = 0x4, offset = 0x4, fixed_abs, tag = 'smem constant byte address 0x4 - core index']
  #allocation1 [shape = 'u32[144,128]{1,0:T(1,128)}', space=vmem, size = 0x12000, scoped, tag = 'internal scratch']
  %s0 = inlined_call_operand.vmem [shape: f32[2,24,32], index: 0, kind: input, shape index: {}]
  %s1 = inlined_call_operand.vmem [shape: f32[1,32], index: 1, kind: input, shape index: {}]
  %s2 = inlined_call_operand.vmem [shape: f32[1,32], index: 2, kind: input, shape index: {}]
  %s3 = inlined_call_operand.vmem [shape: f32[32,96], index: 3, kind: input, shape index: {}]
  %s4 = inlined_call_operand.vmem [shape: f32[1,96], index: 4, kind: input, shape index: {}]
  %s5 = inlined_call_operand.vmem [shape: f32[32,32], index: 5, kind: input, shape index: {}]
  %s6 = inlined_call_operand.vmem [shape: f32[1,32], index: 6, kind: input, shape index: {}]
  %s7 = inlined_call_operand.vmem [shape: f32[1,32], index: 7, kind: input, shape index: {}]
  %s8 = inlined_call_operand.vmem [shape: f32[1,32], index: 8, kind: input, shape index: {}]
  %s9 = inlined_call_operand.vmem [shape: f32[32,128], index: 9, kind: input, shape index: {}]
  %s10 = inlined_call_operand.vmem [shape: f32[1,128], index: 10, kind: input, shape index: {}]
  %s11 = inlined_call_operand.vmem [shape: f32[128,32], index: 11, kind: input, shape index: {}]
  %s12 = inlined_call_operand.vmem [shape: f32[1,32], index: 12, kind: input, shape index: {}]
  %s13 = inlined_call_operand.vmem [shape: f32[2,24,32], index: 13, kind: output, shape index: {}]
  %s14 = sld [smem:[#allocation0]]
  $region85: #{vit_forward.5} parent=0
    _
  %s16 = ssub.s32 1, %s14
  %s17 = scalar_select 0, %s16, %s14
  loop: start=0, step=1, limit=4
  $region2: #{vit_forward.5} parent=0 // loop_pre_header
    _
  $region3: #{vit_forward.5} parent=0 // loop_header
    %s19 = sphi 0, %s23
    %p20 = scmp.ge.s32.totalorder %s19, 4
    %s29 = sphi 0, %s31
    %s32 = sphi 0, %s29
    %s33 = sphi 0, %s32
    %s49 = sphi 0, %s33
    %s53 = sphi 0, %s53
    %s55 = sphi 0, %s53
    %s56 = sphi 0, %s55
    %s70 = sphi 0, %s56
    %s74 = sphi 0, %s74
    %s76 = sphi 0, %s74
    %s77 = sphi 0, %s76
    %s91 = sphi 0, %s77
    %s95 = sphi 0, %s95
    %s97 = sphi 0, %s95
    %s98 = sphi 0, %s97
    %s112 = sphi 0, %s98
    %s116 = sphi 0, %s116
    %s118 = sphi 0, %s116
    %s119 = sphi 0, %s118
    %s133 = sphi 0, %s119
    %s137 = sphi 0, %s137
    %s139 = sphi 0, %s137
    %s140 = sphi 0, %s139
    %s154 = sphi 0, %s140
    %s158 = sphi 0, %s158
    %s160 = sphi 0, %s158
    %s161 = sphi 0, %s160
    %s175 = sphi 0, %s161
    %s179 = sphi 0, %s179
    %s181 = sphi 0, %s179
    %s182 = sphi 0, %s181
    %s196 = sphi 0, %s182
    %s200 = sphi 0, %s200
    %s202 = sphi 0, %s200
    %s203 = sphi 0, %s202
    %s217 = sphi 0, %s203
    %s221 = sphi 0, %s221
    %s223 = sphi 0, %s221
    %s224 = sphi 0, %s223
    %s238 = sphi 0, %s224
    %s242 = sphi 0, %s242
    %s244 = sphi 0, %s242
    %s245 = sphi 0, %s244
    %s259 = sphi 0, %s245
    %s263 = sphi 0, %s263
    %s265 = sphi 0, %s263
    %s266 = sphi 0, %s265
    %s280 = sphi 0, %s266
    %s284 = sphi 0, %s284
    %s286 = sphi 0, %s284
    %s287 = sphi 0, %s286
    %s301 = sphi 0, %s287
    %s307 = sphi 0, %s309
    %s310 = sphi 0, %s307
    %s311 = sphi 0, %s310
    %s327 = sphi 0, %s311
  $region4: #{vit_forward.5} parent=0 // loop_header_branch
    %22 = sbr.rel (%p20) target = $region8
  $region5: #{vit_forward.5} parent=0 // loop_body
    %s24 = ssub.s32 %s19, 1
    %s25 = ssub.s32 %s19, 2
    %s26 = sadd.s32 %s19, 1
    %s27 = ssub.s32 %s19, %s26
    %p28 = scmp.eq.s32.totalorder %s27, 0
    %s30 = sadd.s32 %s29, 1
    %s31 = scalar_select %p28, %s29, %s30
    %p34 = pneg %p28
    %p35 = scmp.eq.s32.totalorder %s19, 1
    %p36 = por %p34, %p35
    %p37 = scmp.ne.s32.totalorder %s29, %s32
    %p38 = scmp.eq.s32.totalorder %s19, 0
    %p39 = por %p37, %p38
    %p40 = scmp.ne.s32.totalorder %s29, %s32
    %p41 = scmp.eq.s32.totalorder %s24, 1
    %p42 = por %p40, %p41
    %p43 = scmp.ne.s32.totalorder %s32, %s33
    %p44 = scmp.eq.s32.totalorder %s24, 0
    %p45 = por %p43, %p44
    %p46 = scmp.ne.s32.totalorder %s32, %s33
    %p47 = scmp.eq.s32.totalorder %s25, 1
    %p48 = por %p46, %p47
    %p50 = scmp.ne.s32.totalorder %s33, %s49
    %p51 = scmp.eq.s32.totalorder %s25, 0
    %p52 = por %p50, %p51
    %s54 = sadd.s32 %s53, 1
    %p57 = scmp.eq.s32.totalorder %s19, 1
    %p58 = scmp.ne.s32.totalorder %s53, %s55
    %p59 = scmp.eq.s32.totalorder %s19, 0
    %p60 = por %p58, %p59
    %p61 = scmp.ne.s32.totalorder %s53, %s55
    %p62 = scmp.eq.s32.totalorder %s24, 1
    %p63 = por %p61, %p62
    %p64 = scmp.ne.s32.totalorder %s55, %s56
    %p65 = scmp.eq.s32.totalorder %s24, 0
    %p66 = por %p64, %p65
    %p67 = scmp.ne.s32.totalorder %s55, %s56
    %p68 = scmp.eq.s32.totalorder %s25, 1
    %p69 = por %p67, %p68
    %p71 = scmp.ne.s32.totalorder %s56, %s70
    %p72 = scmp.eq.s32.totalorder %s25, 0
    %p73 = por %p71, %p72
    %s75 = sadd.s32 %s74, 1
    %p78 = scmp.eq.s32.totalorder %s19, 1
    %p79 = scmp.ne.s32.totalorder %s74, %s76
    %p80 = scmp.eq.s32.totalorder %s19, 0
    %p81 = por %p79, %p80
    %p82 = scmp.ne.s32.totalorder %s74, %s76
    %p83 = scmp.eq.s32.totalorder %s24, 1
    %p84 = por %p82, %p83
    %p85 = scmp.ne.s32.totalorder %s76, %s77
    %p86 = scmp.eq.s32.totalorder %s24, 0
    %p87 = por %p85, %p86
    %p88 = scmp.ne.s32.totalorder %s76, %s77
    %p89 = scmp.eq.s32.totalorder %s25, 1
    %p90 = por %p88, %p89
    %p92 = scmp.ne.s32.totalorder %s77, %s91
    %p93 = scmp.eq.s32.totalorder %s25, 0
    %p94 = por %p92, %p93
    %s96 = sadd.s32 %s95, 1
    %p99 = scmp.eq.s32.totalorder %s19, 1
    %p100 = scmp.ne.s32.totalorder %s95, %s97
    %p101 = scmp.eq.s32.totalorder %s19, 0
    %p102 = por %p100, %p101
    %p103 = scmp.ne.s32.totalorder %s95, %s97
    %p104 = scmp.eq.s32.totalorder %s24, 1
    %p105 = por %p103, %p104
    %p106 = scmp.ne.s32.totalorder %s97, %s98
    %p107 = scmp.eq.s32.totalorder %s24, 0
    %p108 = por %p106, %p107
    %p109 = scmp.ne.s32.totalorder %s97, %s98
    %p110 = scmp.eq.s32.totalorder %s25, 1
    %p111 = por %p109, %p110
    %p113 = scmp.ne.s32.totalorder %s98, %s112
    %p114 = scmp.eq.s32.totalorder %s25, 0
    %p115 = por %p113, %p114
    %s117 = sadd.s32 %s116, 1
    %p120 = scmp.eq.s32.totalorder %s19, 1
    %p121 = scmp.ne.s32.totalorder %s116, %s118
    %p122 = scmp.eq.s32.totalorder %s19, 0
    %p123 = por %p121, %p122
    %p124 = scmp.ne.s32.totalorder %s116, %s118
    %p125 = scmp.eq.s32.totalorder %s24, 1
    %p126 = por %p124, %p125
    %p127 = scmp.ne.s32.totalorder %s118, %s119
    %p128 = scmp.eq.s32.totalorder %s24, 0
    %p129 = por %p127, %p128
    %p130 = scmp.ne.s32.totalorder %s118, %s119
    %p131 = scmp.eq.s32.totalorder %s25, 1
    %p132 = por %p130, %p131
    %p134 = scmp.ne.s32.totalorder %s119, %s133
    %p135 = scmp.eq.s32.totalorder %s25, 0
    %p136 = por %p134, %p135
    %s138 = sadd.s32 %s137, 1
    %p141 = scmp.eq.s32.totalorder %s19, 1
    %p142 = scmp.ne.s32.totalorder %s137, %s139
    %p143 = scmp.eq.s32.totalorder %s19, 0
    %p144 = por %p142, %p143
    %p145 = scmp.ne.s32.totalorder %s137, %s139
    %p146 = scmp.eq.s32.totalorder %s24, 1
    %p147 = por %p145, %p146
    %p148 = scmp.ne.s32.totalorder %s139, %s140
    %p149 = scmp.eq.s32.totalorder %s24, 0
    %p150 = por %p148, %p149
    %p151 = scmp.ne.s32.totalorder %s139, %s140
    %p152 = scmp.eq.s32.totalorder %s25, 1
    %p153 = por %p151, %p152
    %p155 = scmp.ne.s32.totalorder %s140, %s154
    %p156 = scmp.eq.s32.totalorder %s25, 0
    %p157 = por %p155, %p156
    %s159 = sadd.s32 %s158, 1
    %p162 = scmp.eq.s32.totalorder %s19, 1
    %p163 = scmp.ne.s32.totalorder %s158, %s160
    %p164 = scmp.eq.s32.totalorder %s19, 0
    %p165 = por %p163, %p164
    %p166 = scmp.ne.s32.totalorder %s158, %s160
    %p167 = scmp.eq.s32.totalorder %s24, 1
    %p168 = por %p166, %p167
    %p169 = scmp.ne.s32.totalorder %s160, %s161
    %p170 = scmp.eq.s32.totalorder %s24, 0
    %p171 = por %p169, %p170
    %p172 = scmp.ne.s32.totalorder %s160, %s161
    %p173 = scmp.eq.s32.totalorder %s25, 1
    %p174 = por %p172, %p173
    %p176 = scmp.ne.s32.totalorder %s161, %s175
    %p177 = scmp.eq.s32.totalorder %s25, 0
    %p178 = por %p176, %p177
    %s180 = sadd.s32 %s179, 1
    %p183 = scmp.eq.s32.totalorder %s19, 1
    %p184 = scmp.ne.s32.totalorder %s179, %s181
    %p185 = scmp.eq.s32.totalorder %s19, 0
    %p186 = por %p184, %p185
    %p187 = scmp.ne.s32.totalorder %s179, %s181
    %p188 = scmp.eq.s32.totalorder %s24, 1
    %p189 = por %p187, %p188
    %p190 = scmp.ne.s32.totalorder %s181, %s182
    %p191 = scmp.eq.s32.totalorder %s24, 0
    %p192 = por %p190, %p191
    %p193 = scmp.ne.s32.totalorder %s181, %s182
    %p194 = scmp.eq.s32.totalorder %s25, 1
    %p195 = por %p193, %p194
    %p197 = scmp.ne.s32.totalorder %s182, %s196
    %p198 = scmp.eq.s32.totalorder %s25, 0
    %p199 = por %p197, %p198
    %s201 = sadd.s32 %s200, 1
    %p204 = scmp.eq.s32.totalorder %s19, 1
    %p205 = scmp.ne.s32.totalorder %s200, %s202
    %p206 = scmp.eq.s32.totalorder %s19, 0
    %p207 = por %p205, %p206
    %p208 = scmp.ne.s32.totalorder %s200, %s202
    %p209 = scmp.eq.s32.totalorder %s24, 1
    %p210 = por %p208, %p209
    %p211 = scmp.ne.s32.totalorder %s202, %s203
    %p212 = scmp.eq.s32.totalorder %s24, 0
    %p213 = por %p211, %p212
    %p214 = scmp.ne.s32.totalorder %s202, %s203
    %p215 = scmp.eq.s32.totalorder %s25, 1
    %p216 = por %p214, %p215
    %p218 = scmp.ne.s32.totalorder %s203, %s217
    %p219 = scmp.eq.s32.totalorder %s25, 0
    %p220 = por %p218, %p219
    %s222 = sadd.s32 %s221, 1
    %p225 = scmp.eq.s32.totalorder %s19, 1
    %p226 = scmp.ne.s32.totalorder %s221, %s223
    %p227 = scmp.eq.s32.totalorder %s19, 0
    %p228 = por %p226, %p227
    %p229 = scmp.ne.s32.totalorder %s221, %s223
    %p230 = scmp.eq.s32.totalorder %s24, 1
    %p231 = por %p229, %p230
    %p232 = scmp.ne.s32.totalorder %s223, %s224
    %p233 = scmp.eq.s32.totalorder %s24, 0
    %p234 = por %p232, %p233
    %p235 = scmp.ne.s32.totalorder %s223, %s224
    %p236 = scmp.eq.s32.totalorder %s25, 1
    %p237 = por %p235, %p236
    %p239 = scmp.ne.s32.totalorder %s224, %s238
    %p240 = scmp.eq.s32.totalorder %s25, 0
    %p241 = por %p239, %p240
    %s243 = sadd.s32 %s242, 1
    %p246 = scmp.eq.s32.totalorder %s19, 1
    %p247 = scmp.ne.s32.totalorder %s242, %s244
    %p248 = scmp.eq.s32.totalorder %s19, 0
    %p249 = por %p247, %p248
    %p250 = scmp.ne.s32.totalorder %s242, %s244
    %p251 = scmp.eq.s32.totalorder %s24, 1
    %p252 = por %p250, %p251
    %p253 = scmp.ne.s32.totalorder %s244, %s245
    %p254 = scmp.eq.s32.totalorder %s24, 0
    %p255 = por %p253, %p254
    %p256 = scmp.ne.s32.totalorder %s244, %s245
    %p257 = scmp.eq.s32.totalorder %s25, 1
    %p258 = por %p256, %p257
    %p260 = scmp.ne.s32.totalorder %s245, %s259
    %p261 = scmp.eq.s32.totalorder %s25, 0
    %p262 = por %p260, %p261
    %s264 = sadd.s32 %s263, 1
    %p267 = scmp.eq.s32.totalorder %s19, 1
    %p268 = scmp.ne.s32.totalorder %s263, %s265
    %p269 = scmp.eq.s32.totalorder %s19, 0
    %p270 = por %p268, %p269
    %p271 = scmp.ne.s32.totalorder %s263, %s265
    %p272 = scmp.eq.s32.totalorder %s24, 1
    %p273 = por %p271, %p272
    %p274 = scmp.ne.s32.totalorder %s265, %s266
    %p275 = scmp.eq.s32.totalorder %s24, 0
    %p276 = por %p274, %p275
    %p277 = scmp.ne.s32.totalorder %s265, %s266
    %p278 = scmp.eq.s32.totalorder %s25, 1
    %p279 = por %p277, %p278
    %p281 = scmp.ne.s32.totalorder %s266, %s280
    %p282 = scmp.eq.s32.totalorder %s25, 0
    %p283 = por %p281, %p282
    %s285 = sadd.s32 %s284, 1
    %p288 = scmp.eq.s32.totalorder %s19, 1
    %p289 = scmp.ne.s32.totalorder %s284, %s286
    %p290 = scmp.eq.s32.totalorder %s19, 0
    %p291 = por %p289, %p290
    %p292 = scmp.ne.s32.totalorder %s284, %s286
    %p293 = scmp.eq.s32.totalorder %s24, 1
    %p294 = por %p292, %p293
    %p295 = scmp.ne.s32.totalorder %s286, %s287
    %p296 = scmp.eq.s32.totalorder %s24, 0
    %p297 = por %p295, %p296
    %p298 = scmp.ne.s32.totalorder %s286, %s287
    %p299 = scmp.eq.s32.totalorder %s25, 1
    %p300 = por %p298, %p299
    %p302 = scmp.ne.s32.totalorder %s287, %s301
    %p303 = scmp.eq.s32.totalorder %s25, 0
    %p304 = por %p302, %p303
    %s305 = ssub.s32 %s19, %s26
    %p306 = scmp.eq.s32.totalorder %s305, 0
    %s308 = sadd.s32 %s307, 1
    %s309 = scalar_select %p306, %s307, %s308
    %p312 = pneg %p306
    %p313 = scmp.eq.s32.totalorder %s19, 1
    %p314 = por %p312, %p313
    %p315 = scmp.ne.s32.totalorder %s307, %s310
    %p316 = scmp.eq.s32.totalorder %s19, 0
    %p317 = por %p315, %p316
    %p318 = scmp.ne.s32.totalorder %s307, %s310
    %p319 = scmp.eq.s32.totalorder %s24, 1
    %p320 = por %p318, %p319
    %p321 = scmp.ne.s32.totalorder %s310, %s311
    %p322 = scmp.eq.s32.totalorder %s24, 0
    %p323 = por %p321, %p322
    %p324 = scmp.ne.s32.totalorder %s310, %s311
    %p325 = scmp.eq.s32.totalorder %s25, 1
    %p326 = por %p324, %p325
    %p328 = scmp.ne.s32.totalorder %s311, %s327
    %p329 = scmp.eq.s32.totalorder %s25, 0
    %p330 = por %p328, %p329
    %p331 = scmp.le.s32.totalorder 1, %s19
    %p332 = scmp.lt.s32.totalorder %s19, 3
    %p333 = pnand %p331, %p332
    %p334 = pneg %p333
    // Predicated region
    $region9: #{vit_forward.5} parent=5 // pred_check
      _
    $region10: #{vit_forward.5} parent=5 // pred_check_branch
      %336 = sbr.rel (%p333) target = $region12
    $region11: #{vit_forward.5} parent=5 // pred_region
      %s337 = ssub.s32 %s19, 1
      // Predicated region
      $region13: #{vit_forward.5} parent=11 // pred_check
        %p338 = pneg %p66
      $region14: #{vit_forward.5} parent=11 // pred_check_branch
        %340 = sbr.rel (%p338) target = $region16
      $region15: #{vit_forward.5} parent=11 // pred_region
        _
      $region16: #{vit_forward.5} parent=11 // pred_fallthru
        _
      // Predicated region
      $region17: #{vit_forward.5} parent=11 // pred_check
        %p341 = pneg %p87
      $region18: #{vit_forward.5} parent=11 // pred_check_branch
        %343 = sbr.rel (%p341) target = $region20
      $region19: #{vit_forward.5} parent=11 // pred_region
        _
      $region20: #{vit_forward.5} parent=11 // pred_fallthru
        _
      // Predicated region
      $region21: #{vit_forward.5} parent=11 // pred_check
        %p344 = pneg %p108
      $region22: #{vit_forward.5} parent=11 // pred_check_branch
        %346 = sbr.rel (%p344) target = $region24
      $region23: #{vit_forward.5} parent=11 // pred_region
        _
      $region24: #{vit_forward.5} parent=11 // pred_fallthru
        _
      // Predicated region
      $region25: #{vit_forward.5} parent=11 // pred_check
        %p347 = pneg %p129
      $region26: #{vit_forward.5} parent=11 // pred_check_branch
        %349 = sbr.rel (%p347) target = $region28
      $region27: #{vit_forward.5} parent=11 // pred_region
        _
      $region28: #{vit_forward.5} parent=11 // pred_fallthru
        _
      // Predicated region
      $region29: #{vit_forward.5} parent=11 // pred_check
        %p350 = pneg %p150
      $region30: #{vit_forward.5} parent=11 // pred_check_branch
        %352 = sbr.rel (%p350) target = $region32
      $region31: #{vit_forward.5} parent=11 // pred_region
        _
      $region32: #{vit_forward.5} parent=11 // pred_fallthru
        _
      // Predicated region
      $region33: #{vit_forward.5} parent=11 // pred_check
        %p353 = pneg %p171
      $region34: #{vit_forward.5} parent=11 // pred_check_branch
        %355 = sbr.rel (%p353) target = $region36
      $region35: #{vit_forward.5} parent=11 // pred_region
        _
      $region36: #{vit_forward.5} parent=11 // pred_fallthru
        _
      // Predicated region
      $region37: #{vit_forward.5} parent=11 // pred_check
        %p356 = pneg %p192
      $region38: #{vit_forward.5} parent=11 // pred_check_branch
        %358 = sbr.rel (%p356) target = $region40
      $region39: #{vit_forward.5} parent=11 // pred_region
        _
      $region40: #{vit_forward.5} parent=11 // pred_fallthru
        _
      // Predicated region
      $region41: #{vit_forward.5} parent=11 // pred_check
        %p359 = pneg %p213
      $region42: #{vit_forward.5} parent=11 // pred_check_branch
        %361 = sbr.rel (%p359) target = $region44
      $region43: #{vit_forward.5} parent=11 // pred_region
        _
      $region44: #{vit_forward.5} parent=11 // pred_fallthru
        _
      // Predicated region
      $region45: #{vit_forward.5} parent=11 // pred_check
        %p362 = pneg %p234
      $region46: #{vit_forward.5} parent=11 // pred_check_branch
        %364 = sbr.rel (%p362) target = $region48
      $region47: #{vit_forward.5} parent=11 // pred_region
        _
      $region48: #{vit_forward.5} parent=11 // pred_fallthru
        _
      // Predicated region
      $region49: #{vit_forward.5} parent=11 // pred_check
        %p365 = pneg %p255
      $region50: #{vit_forward.5} parent=11 // pred_check_branch
        %367 = sbr.rel (%p365) target = $region52
      $region51: #{vit_forward.5} parent=11 // pred_region
        _
      $region52: #{vit_forward.5} parent=11 // pred_fallthru
        _
      // Predicated region
      $region53: #{vit_forward.5} parent=11 // pred_check
        %p368 = pneg %p276
      $region54: #{vit_forward.5} parent=11 // pred_check_branch
        %370 = sbr.rel (%p368) target = $region56
      $region55: #{vit_forward.5} parent=11 // pred_region
        _
      $region56: #{vit_forward.5} parent=11 // pred_fallthru
        _
      // Predicated region
      $region57: #{vit_forward.5} parent=11 // pred_check
        %p371 = pneg %p297
      $region58: #{vit_forward.5} parent=11 // pred_check_branch
        %373 = sbr.rel (%p371) target = $region60
      $region59: #{vit_forward.5} parent=11 // pred_region
        _
      $region60: #{vit_forward.5} parent=11 // pred_fallthru
        _
    $region12: #{vit_forward.5} parent=5 // pred_fallthru
      _
    %p374 = scmp.lt.s32.totalorder %s19, 2
    // Predicated region
    $region61: #{vit_forward.5} parent=5 // pred_check
      %p375 = pneg %p374
    $region62: #{vit_forward.5} parent=5 // pred_check_branch
      %377 = sbr.rel (%p375) target = $region64
    $region63: #{vit_forward.5} parent=5 // pred_region
      // Predicated region
      $region65: #{vit_forward.5} parent=63 // pred_check
        %p378 = pneg %p39
      $region66: #{vit_forward.5} parent=63 // pred_check_branch
        %380 = sbr.rel (%p378) target = $region68
      $region67: #{vit_forward.5} parent=63 // pred_region
        %p381 = scmp.lt.s32.totalorder %s19, 1
        %s382 = scalar_select %p381, %s19, 1
        %s383 = smul.addr %s382, 3
        %s384 = smul.addr %s383, 8
        %s385 = scalar_lea.vmem %s0, %s384
      $region68: #{vit_forward.5} parent=63 // pred_fallthru
        _
    $region64: #{vit_forward.5} parent=5 // pred_fallthru
      _
    %p386 = scmp.le.s32.totalorder 1, %s19
    %p387 = scmp.lt.s32.totalorder %s19, 3
    %p388 = pnand %p386, %p387
    %p389 = pneg %p388
    // Predicated region
    $region69: #{vit_forward.5} parent=5 // pred_check
      _
    $region70: #{vit_forward.5} parent=5 // pred_check_branch
      %391 = sbr.rel (%p388) target = $region72
    $region71: #{vit_forward.5} parent=5 // pred_region
      %s392 = ssub.s32 %s19, 1
      %p393 = scmp.lt.s32.totalorder %s24, 1
      %s394 = scalar_select %p393, %s24, 1
      %s395 = smul.addr %s394, 3
      %s396 = smul.addr %s395, 8
      %s397 = scalar_lea.vmem %s0, %s396
      %p398 = pneg %p45
      %p399 = pneg %p42
      %p400 = pneg %p66
      %p401 = pneg %p63
      %p402 = pneg %p87
      %p403 = pneg %p84
      %p404 = pneg %p108
      %p405 = pneg %p105
      %p406 = pneg %p129
      %p407 = pneg %p126
      %p408 = pneg %p150
      %p409 = pneg %p147
      %p410 = pneg %p171
      %p411 = pneg %p168
      %p412 = pneg %p192
      %p413 = pneg %p189
      %p414 = pneg %p213
      %p415 = pneg %p210
      %p416 = pneg %p234
      %p417 = pneg %p231
      %p418 = pneg %p255
      %p419 = pneg %p252
      %p420 = pneg %p276
      %p421 = pneg %p273
      %p422 = pneg %p297
      %p423 = pneg %p294
      %p424 = pneg %p323
      %p425 = pneg %p320
      %p426 = scmp.lt.s32.totalorder %s24, 1
      %s427 = scalar_select %p426, %s24, 1
      %s428 = smul.addr %s427, 3
      %s429 = smul.addr %s428, 8
      %s430 = scalar_lea.vmem %s13, %s429
      %p431 = scmp.lt.s32.totalorder %s24, 1
      %s432 = scalar_select %p431, %s24, 1
      %s433 = smul.addr %s432, 3
      %s434 = smul.addr %s433, 8
      %s435 = scalar_lea.vmem %s0, %s434
      %p436 = scmp.lt.s32.totalorder %s24, 1
      %s437 = scalar_select %p436, %s24, 1
      %s438 = smul.addr %s437, 3
      %s439 = smul.addr %s438, 8
      %s440 = scalar_lea.vmem %s13, %s439
      %v441 = vld [vmem:[%s435] sm:$0xff]
      %v442 = vld [vmem:[%s435 + $0x8] sm:$0xff]
      %v443 = vld [vmem:[%s435 + $0x10] sm:$0xff]
      %v444 = vld [vmem:[%s1] sm:$0x1]
      %v445 = vld [vmem:[%s2] sm:$0x1]
      %vm446 = vcmask 261120
      %v447 = vsel %vm446, %v441, 0.0
      %448 = vadd.xlane.f32.xlu0 %v447
      %v449 = vpop.xlane.xlu0 %448
      %v450 = vsel %vm446, %v442, 0.0
      %451 = vadd.xlane.f32.xlu0 %v450
      %v452 = vpop.xlane.xlu0 %451
      %v453 = vsel %vm446, %v443, 0.0
      %454 = vadd.xlane.f32.xlu0 %v453
      %v455 = vpop.xlane.xlu0 %454
      %v456 = vrcp.pop 32.0
      %v457 = vmul.f32 %v449, %v456
      %v458 = vmul.f32 %v452, %v456
      %v459 = vmul.f32 %v455, %v456
      %v460 = vsub.f32 %v441, %v457
      %v461 = vsub.f32 %v442, %v458
      %v462 = vsub.f32 %v443, %v459
      %v463 = vmul.f32 %v460, %v460
      %v464 = vmul.f32 %v461, %v461
      %v465 = vmul.f32 %v462, %v462
      %v466 = vsel %vm446, %v463, 0.0
      %467 = vadd.xlane.f32.xlu0 %v466
      %v468 = vpop.xlane.xlu0 %467
      %v469 = vsel %vm446, %v464, 0.0
      %470 = vadd.xlane.f32.xlu0 %v469
      %v471 = vpop.xlane.xlu0 %470
      %v472 = vsel %vm446, %v465, 0.0
      %473 = vadd.xlane.f32.xlu0 %v472
      %v474 = vpop.xlane.xlu0 %473
      %v475 = vmul.f32 %v468, %v456
      %v476 = vmul.f32 %v471, %v456
      %v477 = vmul.f32 %v474, %v456
      %v478 = vadd.f32 %v475, 1e-05
      %v479 = vadd.f32 %v476, 1e-05
      %v480 = vadd.f32 %v477, 1e-05
      %v481 = vrsqrt.pop %v478
      %v482 = vrsqrt.pop %v479
      %v483 = vrsqrt.pop %v480
      %v484 = vmul.f32 %v460, %v481
      %v485 = vmul.f32 %v461, %v482
      %v486 = vmul.f32 %v462, %v483
      %v488 = vlaneseq
      %v489 = vshrl.u32 %v488, 7
      %v490 = vsub.s32 0, %v489
      %v491 = vrot.slane %v444, %v490
      %v493 = vmul.f32 %v484, %v491
      %v494 = vmul.f32 %v485, %v491
      %v495 = vmul.f32 %v486, %v491
      %v497 = vlaneseq
      %v498 = vshrl.u32 %v497, 7
      %v499 = vsub.s32 0, %v498
      %v500 = vrot.slane %v445, %v499
      %v502 = vadd.f32 %v493, %v500
      %v503 = vadd.f32 %v494, %v500
      %v504 = vadd.f32 %v495, %v500
      %v505 = vld [vmem:[%s3] sm:$0xff]
      %v506 = vld [vmem:[%s3 + $0x8] sm:$0xff]
      %v507 = vld [vmem:[%s3 + $0x10] sm:$0xff]
      %v508 = vld [vmem:[%s3 + $0x18] sm:$0xff]
      %v509 = vld [vmem:[%s4] sm:$0x1]
      %v511 = vlaneseq
      %v512 = vshrl.u32 %v511, 7
      %v513 = vsub.s32 0, %v512
      %v514 = vrot.slane %v509, %v513
      %v517 = vsel %vm446, %v502, 0
      %v520 = vsel %vm446, %v503, 0
      %v523 = vsel %vm446, %v504, 0
      %525 = vmatprep.subr.mxu0 0.0
      %526 = vmatpush1.msra.mxu0 %v505
      %527 = vmatprep.subr.mxu0 0.0
      %528 = vmatpush1.msra.mxu0 %v506
      %529 = vmatprep.subr.mxu0 0.0
      %530 = vmatpush1.msra.mxu0 %v507
      %531 = vmatprep.subr.mxu0 0.0
      %532 = vmatpush1.msra.mxu0 %v508
      %533 = vmatprep.subr.mxu0 0.0
      %534 = vmatpush1.msra.mxu0 0.0
      %535 = vmatprep.subr.mxu0 0.0
      %536 = vmatpush1.msra.mxu0 0.0
      %537 = vmatprep.subr.mxu0 0.0
      %538 = vmatpush1.msra.mxu0 0.0
      %539 = vmatprep.subr.mxu0 0.0
      %540 = vmatpush1.msra.mxu0 0.0
      %541 = vmatprep.subr.mxu0 0.0
      %542 = vmatpush1.msra.mxu0 0.0
      %543 = vmatprep.subr.mxu0 0.0
      %544 = vmatpush1.msra.mxu0 0.0
      %545 = vmatprep.subr.mxu0 0.0
      %546 = vmatpush1.msra.mxu0 0.0
      %547 = vmatprep.subr.mxu0 0.0
      %548 = vmatpush1.msra.mxu0 0.0
      %549 = vmatprep.subr.mxu0 0.0
      %550 = vmatpush1.msra.mxu0 0.0
      %551 = vmatprep.subr.mxu0 0.0
      %552 = vmatpush1.msra.mxu0 0.0
      %553 = vmatprep.subr.mxu0 0.0
      %554 = vmatpush1.msra.mxu0 0.0
      %555 = vmatprep.subr.mxu0 0.0
      %556 = vmatpush1.msra.mxu0 0.0
      %557 = vmatprep.subr.mxu0 0.0
      %558 = vmatpush1.msra.mxu0 0.0
      %559 = vmatprep.subr.mxu0 0.0
      %560 = vmatpush1.msra.mxu0 0.0
      %561 = vmatprep.subr.mxu0 0.0
      %562 = vmatpush1.msra.mxu0 0.0
      %563 = vmatprep.subr.mxu0 0.0
      %564 = vmatpush1.msra.mxu0 0.0
      %565 = vmatprep.subr.mxu0 0.0
      %566 = vmatpush1.msra.mxu0 0.0
      %567 = vmatprep.subr.mxu0 0.0
      %568 = vmatpush1.msra.mxu0 0.0
      %569 = vmatprep.subr.mxu0 0.0
      %570 = vmatpush1.msra.mxu0 0.0
      %571 = vmatprep.subr.mxu0 0.0
      %572 = vmatpush1.msra.mxu0 0.0
      %573 = vmatprep.subr.mxu0 0.0
      %574 = vmatpush1.msra.mxu0 0.0
      %575 = vmatprep.subr.mxu0 0.0
      %576 = vmatpush1.msra.mxu0 0.0
      %577 = vmatprep.subr.mxu0 0.0
      %578 = vmatpush1.msra.mxu0 0.0
      %579 = vmatprep.subr.mxu0 0.0
      %580 = vmatpush1.msra.mxu0 0.0
      %581 = vmatprep.subr.mxu0 0.0
      %582 = vmatpush1.msra.mxu0 0.0
      %583 = vmatprep.subr.mxu0 0.0
      %584 = vmatpush1.msra.mxu0 0.0
      %585 = vmatprep.subr.mxu0 0.0
      %586 = vmatpush1.msra.mxu0 0.0
      %587 = vmatprep.subr.mxu0 0.0
      %588 = vmatpush1.msra.mxu0 0.0
      %589 = vmatprep.mubr.f32.mxu0 0.0
      %590 = vmatmul.mubr.f32.gmra.mrb[0].mxu0 %v517
      %v591 = vpop.f32.mrb[0].mxu0
      %v592 = vadd.f32 %v514, %v591
      %v593 = vpop.f32.mrb[0].mxu0
      %594 = vmatprep.mubr.f32.mxu0 0.0
      %595 = vmatmul.mubr.f32.gmra.mrb[0].mxu0 %v520
      %v596 = vpop.f32.mrb[0].mxu0
      %v597 = vadd.f32 %v514, %v596
      %v598 = vpop.f32.mrb[0].mxu0
      %599 = vmatprep.mubr.f32.mxu0 0.0
      %600 = vmatmul.mubr.f32.gmra.mrb[0].mxu0 %v523
      %v601 = vpop.f32.mrb[0].mxu0
      %v602 = vadd.f32 %v514, %v601
      %v603 = vpop.f32.mrb[0].mxu0
      %604 = vdwg.mxu0
      %v605 = vlaneseq
      %v606 = vand.u32 %v605, 127
      %vm607 = vcmp.lt.s32.totalorder %v606, 17
      %v608 = vsel %vm607, 0.0, -1e+30
      %v609 = vld [vmem:[%s5] sm:$0xff]
      %v610 = vld [vmem:[%s5 + $0x8] sm:$0xff]
      %v611 = vld [vmem:[%s5 + $0x10] sm:$0xff]
      %v612 = vld [vmem:[%s5 + $0x18] sm:$0xff]
      %616 = vrot.lane.b32.xlu0 %v592, 96
      %v617 = vpop.permute.xlu0 %616
      %618 = vrot.lane.b32.xlu0 %v597, 96
      %v619 = vpop.permute.xlu0 %618
      %620 = vrot.lane.b32.xlu0 %v602, 96
      %v621 = vpop.permute.xlu0 %620
      %vm622 = vcmask 64512
      %v623 = vsel %vm622, %v592, 0
      %v625 = vsel %vm622, %v597, 0
      %v627 = vsel %vm622, %v602, 0
      %v629 = vsel %vm622, %v617, 0
      %v631 = vsel %vm622, %v619, 0
      %v633 = vsel %vm622, %v621, 0
      %635 = vmatprep.subr.mxu0 0.0
      %636 = vmatpush1.xpose.msra.mxu0 %v629
      %637 = vmatprep.subr.mxu0 0.0
      %638 = vmatpush1.xpose.msra.mxu0 %v631
      %639 = vmatprep.subr.mxu0 0.0
      %640 = vmatpush1.xpose.msra.mxu0 %v633
      %641 = vmatprep.subr.mxu0 0.0
      %642 = vmatpush1.xpose.msra.mxu0 0.0
      %643 = vmatprep.subr.mxu0 0.0
      %644 = vmatpush1.xpose.msra.mxu0 0.0
      %645 = vmatprep.subr.mxu0 0.0
      %646 = vmatpush1.xpose.msra.mxu0 0.0
      %647 = vmatprep.subr.mxu0 0.0
      %648 = vmatpush1.xpose.msra.mxu0 0.0
      %649 = vmatprep.subr.mxu0 0.0
      %650 = vmatpush1.xpose.msra.mxu0 0.0
      %651 = vmatprep.subr.mxu0 0.0
      %652 = vmatpush1.xpose.msra.mxu0 0.0
      %653 = vmatprep.subr.mxu0 0.0
      %654 = vmatpush1.xpose.msra.mxu0 0.0
      %655 = vmatprep.subr.mxu0 0.0
      %656 = vmatpush1.xpose.msra.mxu0 0.0
      %657 = vmatprep.subr.mxu0 0.0
      %658 = vmatpush1.xpose.msra.mxu0 0.0
      %659 = vmatprep.subr.mxu0 0.0
      %660 = vmatpush1.xpose.msra.mxu0 0.0
      %661 = vmatprep.subr.mxu0 0.0
      %662 = vmatpush1.xpose.msra.mxu0 0.0
      %663 = vmatprep.subr.mxu0 0.0
      %664 = vmatpush1.xpose.msra.mxu0 0.0
      %665 = vmatprep.subr.mxu0 0.0
      %666 = vmatpush1.xpose.msra.mxu0 0.0
      %667 = vmatprep.subr.mxu0 0.0
      %668 = vmatpush1.xpose.msra.mxu0 0.0
      %669 = vmatprep.subr.mxu0 0.0
      %670 = vmatpush1.xpose.msra.mxu0 0.0
      %671 = vmatprep.subr.mxu0 0.0
      %672 = vmatpush1.xpose.msra.mxu0 0.0
      %673 = vmatprep.subr.mxu0 0.0
      %674 = vmatpush1.xpose.msra.mxu0 0.0
      %675 = vmatprep.subr.mxu0 0.0
      %676 = vmatpush1.xpose.msra.mxu0 0.0
      %677 = vmatprep.subr.mxu0 0.0
      %678 = vmatpush1.xpose.msra.mxu0 0.0
      %679 = vmatprep.subr.mxu0 0.0
      %680 = vmatpush1.xpose.msra.mxu0 0.0
      %681 = vmatprep.subr.mxu0 0.0
      %682 = vmatpush1.xpose.msra.mxu0 0.0
      %683 = vmatprep.subr.mxu0 0.0
      %684 = vmatpush1.xpose.msra.mxu0 0.0
      %685 = vmatprep.subr.mxu0 0.0
      %686 = vmatpush1.xpose.msra.mxu0 0.0
      %687 = vmatprep.subr.mxu0 0.0
      %688 = vmatpush1.xpose.msra.mxu0 0.0
      %689 = vmatprep.subr.mxu0 0.0
      %690 = vmatpush1.xpose.msra.mxu0 0.0
      %691 = vmatprep.subr.mxu0 0.0
      %692 = vmatpush1.xpose.msra.mxu0 0.0
      %693 = vmatprep.subr.mxu0 0.0
      %694 = vmatpush1.xpose.msra.mxu0 0.0
      %695 = vmatprep.subr.mxu0 0.0
      %696 = vmatpush1.xpose.msra.mxu0 0.0
      %697 = vmatprep.subr.mxu0 0.0
      %698 = vmatpush1.xpose.msra.mxu0 0.0
      %699 = vmatprep.mubr.f32.mxu0 0.0
      %700 = vmatmul.mubr.f32.gmra.mrb[0].mxu0 %v623
      %v701 = vpop.f32.mrb[0].mxu0
      %v702 = vadd.f32 0.0, %v701
      %v703 = vpop.f32.mrb[0].mxu0
      %704 = vmatprep.mubr.f32.mxu0 0.0
      %705 = vmatmul.mubr.f32.gmra.mrb[0].mxu0 %v625
      %v706 = vpop.f32.mrb[0].mxu0
      %v707 = vadd.f32 0.0, %v706
      %v708 = vpop.f32.mrb[0].mxu0
      %709 = vmatprep.mubr.f32.mxu0 0.0
      %710 = vmatmul.mubr.f32.gmra.mrb[0].mxu0 %v627
      %v711 = vpop.f32.mrb[0].mxu0
      %v712 = vadd.f32 0.0, %v711
      %v713 = vpop.f32.mrb[0].mxu0
      %714 = vdwg.mxu0
      %v715 = vmul.f32 %v702, 0.35355338
      %v716 = vmul.f32 %v707, 0.35355338
      %v717 = vmul.f32 %v712, 0.35355338
      %v718 = vadd.f32 %v715, %v608
      %v719 = vadd.f32 %v716, %v608
      %v720 = vadd.f32 %v717, %v608
      %vm721 = vcmask 195584
      %v722 = vsel %vm721, %v718, -inf
      %723 = vmax.xlane.f32.xlu0 %v722
      %v724 = vpop.xlane.xlu0 %723
      %v725 = vsel %vm721, %v719, -inf
      %726 = vmax.xlane.f32.xlu0 %v725
      %v727 = vpop.xlane.xlu0 %726
      %v728 = vsel %vm721, %v720, -inf
      %729 = vmax.xlane.f32.xlu0 %v728
      %v730 = vpop.xlane.xlu0 %729
      %v731 = vsub.f32 %v718, %v724
      %v732 = vsub.f32 %v719, %v727
      %v733 = vsub.f32 %v720, %v730
      %v734 = vmul.f32 %v731, 1.442695
      %v735 = vpow.pop %v734
      %v736 = vmul.f32 %v732, 1.442695
      %v737 = vpow.pop %v736
      %v738 = vmul.f32 %v733, 1.442695
      %v739 = vpow.pop %v738
      %v740 = vsel %vm721, %v735, 0.0
      %741 = vadd.xlane.f32.xlu0 %v740
      %v742 = vpop.xlane.xlu0 %741
      %v743 = vsel %vm721, %v737, 0.0
      %744 = vadd.xlane.f32.xlu0 %v743
      %v745 = vpop.xlane.xlu0 %744
      %v746 = vsel %vm721, %v739, 0.0
      %747 = vadd.xlane.f32.xlu0 %v746
      %v748 = vpop.xlane.xlu0 %747
      %v749 = vrcp.pop %v742
      %v750 = vrcp.pop %v745
      %v751 = vrcp.pop %v748
      %v752 = vmul.f32 %v735, %v749
      %v753 = vmul.f32 %v737, %v750
      %v754 = vmul.f32 %v739, %v751
      %755 = vrot.lane.b32.xlu0 %v592, 64
      %v756 = vpop.permute.xlu0 %755
      %757 = vrot.lane.b32.xlu0 %v597, 64
      %v758 = vpop.permute.xlu0 %757
      %759 = vrot.lane.b32.xlu0 %v602, 64
      %v760 = vpop.permute.xlu0 %759
      %v765 = vsel %vm721, %v752, 0
      %v768 = vsel %vm721, %v753, 0
      %v771 = vsel %vm721, %v754, 0
      %773 = vmatprep.subr.mxu0 0.0
      %774 = vmatpush1.msra.mxu0 %v756
      %775 = vmatprep.subr.mxu0 0.0
      %776 = vmatpush1.msra.mxu0 %v758
      %777 = vmatprep.subr.mxu0 0.0
      %778 = vmatpush1.msra.mxu0 %v760
      %779 = vmatprep.subr.mxu0 0.0
      %780 = vmatpush1.msra.mxu0 0.0
      %781 = vmatprep.subr.mxu0 0.0
      %782 = vmatpush1.msra.mxu0 0.0
      %783 = vmatprep.subr.mxu0 0.0
      %784 = vmatpush1.msra.mxu0 0.0
      %785 = vmatprep.subr.mxu0 0.0
      %786 = vmatpush1.msra.mxu0 0.0
      %787 = vmatprep.subr.mxu0 0.0
      %788 = vmatpush1.msra.mxu0 0.0
      %789 = vmatprep.subr.mxu0 0.0
      %790 = vmatpush1.msra.mxu0 0.0
      %791 = vmatprep.subr.mxu0 0.0
      %792 = vmatpush1.msra.mxu0 0.0
      %793 = vmatprep.subr.mxu0 0.0
      %794 = vmatpush1.msra.mxu0 0.0
      %795 = vmatprep.subr.mxu0 0.0
      %796 = vmatpush1.msra.mxu0 0.0
      %797 = vmatprep.subr.mxu0 0.0
      %798 = vmatpush1.msra.mxu0 0.0
      %799 = vmatprep.subr.mxu0 0.0
      %800 = vmatpush1.msra.mxu0 0.0
      %801 = vmatprep.subr.mxu0 0.0
      %802 = vmatpush1.msra.mxu0 0.0
      %803 = vmatprep.subr.mxu0 0.0
      %804 = vmatpush1.msra.mxu0 0.0
      %805 = vmatprep.subr.mxu0 0.0
      %806 = vmatpush1.msra.mxu0 0.0
      %807 = vmatprep.subr.mxu0 0.0
      %808 = vmatpush1.msra.mxu0 0.0
      %809 = vmatprep.subr.mxu0 0.0
      %810 = vmatpush1.msra.mxu0 0.0
      %811 = vmatprep.subr.mxu0 0.0
      %812 = vmatpush1.msra.mxu0 0.0
      %813 = vmatprep.subr.mxu0 0.0
      %814 = vmatpush1.msra.mxu0 0.0
      %815 = vmatprep.subr.mxu0 0.0
      %816 = vmatpush1.msra.mxu0 0.0
      %817 = vmatprep.subr.mxu0 0.0
      %818 = vmatpush1.msra.mxu0 0.0
      %819 = vmatprep.subr.mxu0 0.0
      %820 = vmatpush1.msra.mxu0 0.0
      %821 = vmatprep.subr.mxu0 0.0
      %822 = vmatpush1.msra.mxu0 0.0
      %823 = vmatprep.subr.mxu0 0.0
      %824 = vmatpush1.msra.mxu0 0.0
      %825 = vmatprep.subr.mxu0 0.0
      %826 = vmatpush1.msra.mxu0 0.0
      %827 = vmatprep.subr.mxu0 0.0
      %828 = vmatpush1.msra.mxu0 0.0
      %829 = vmatprep.subr.mxu0 0.0
      %830 = vmatpush1.msra.mxu0 0.0
      %831 = vmatprep.subr.mxu0 0.0
      %832 = vmatpush1.msra.mxu0 0.0
      %833 = vmatprep.subr.mxu0 0.0
      %834 = vmatpush1.msra.mxu0 0.0
      %835 = vmatprep.subr.mxu0 0.0
      %836 = vmatpush1.msra.mxu0 0.0
      %837 = vmatprep.mubr.f32.mxu0 0.0
      %838 = vmatmul.mubr.f32.gmra.mrb[0].mxu0 %v765
      %v839 = vpop.f32.mrb[0].mxu0
      %v840 = vadd.f32 0.0, %v839
      %v841 = vpop.f32.mrb[0].mxu0
      %842 = vmatprep.mubr.f32.mxu0 0.0
      %843 = vmatmul.mubr.f32.gmra.mrb[0].mxu0 %v768
      %v844 = vpop.f32.mrb[0].mxu0
      %v845 = vadd.f32 0.0, %v844
      %v846 = vpop.f32.mrb[0].mxu0
      %847 = vmatprep.mubr.f32.mxu0 0.0
      %848 = vmatmul.mubr.f32.gmra.mrb[0].mxu0 %v771
      %v849 = vpop.f32.mrb[0].mxu0
      %v850 = vadd.f32 0.0, %v849
      %v851 = vpop.f32.mrb[0].mxu0
      %852 = vdwg.mxu0
      %853 = vrot.lane.b32.xlu0 %v592, 120
      %v854 = vpop.permute.xlu0 %853
      %855 = vrot.lane.b32.xlu0 %v597, 120
      %v856 = vpop.permute.xlu0 %855
      %857 = vrot.lane.b32.xlu0 %v602, 120
      %v858 = vpop.permute.xlu0 %857
      %859 = vrot.lane.b32.xlu0 %v592, 88
      %v860 = vpop.permute.xlu0 %859
      %861 = vrot.lane.b32.xlu0 %v597, 88
      %v862 = vpop.permute.xlu0 %861
      %863 = vrot.lane.b32.xlu0 %v602, 88
      %v864 = vpop.permute.xlu0 %863
      %v865 = vsel %vm622, %v854, 0
      %v867 = vsel %vm622, %v856, 0
      %v869 = vsel %vm622, %v858, 0
      %v871 = vsel %vm622, %v860, 0
      %v873 = vsel %vm622, %v862, 0
      %v875 = vsel %vm622, %v864, 0
      %877 = vmatprep.subr.mxu0 0.0
      %878 = vmatpush1.xpose.msra.mxu0 %v871
      %879 = vmatprep.subr.mxu0 0.0
      %880 = vmatpush1.xpose.msra.mxu0 %v873
      %881 = vmatprep.subr.mxu0 0.0
      %882 = vmatpush1.xpose.msra.mxu0 %v875
      %883 = vmatprep.subr.mxu0 0.0
      %884 = vmatpush1.xpose.msra.mxu0 0.0
      %885 = vmatprep.subr.mxu0 0.0
      %886 = vmatpush1.xpose.msra.mxu0 0.0
      %887 = vmatprep.subr.mxu0 0.0
      %888 = vmatpush1.xpose.msra.mxu0 0.0
      %889 = vmatprep.subr.mxu0 0.0
      %890 = vmatpush1.xpose.msra.mxu0 0.0
      %891 = vmatprep.subr.mxu0 0.0
      %892 = vmatpush1.xpose.msra.mxu0 0.0
      %893 = vmatprep.subr.mxu0 0.0
      %894 = vmatpush1.xpose.msra.mxu0 0.0
      %895 = vmatprep.subr.mxu0 0.0
      %896 = vmatpush1.xpose.msra.mxu0 0.0
      %897 = vmatprep.subr.mxu0 0.0
      %898 = vmatpush1.xpose.msra.mxu0 0.0
      %899 = vmatprep.subr.mxu0 0.0
      %900 = vmatpush1.xpose.msra.mxu0 0.0
      %901 = vmatprep.subr.mxu0 0.0
      %902 = vmatpush1.xpose.msra.mxu0 0.0
      %903 = vmatprep.subr.mxu0 0.0
      %904 = vmatpush1.xpose.msra.mxu0 0.0
      %905 = vmatprep.subr.mxu0 0.0
      %906 = vmatpush1.xpose.msra.mxu0 0.0
      %907 = vmatprep.subr.mxu0 0.0
      %908 = vmatpush1.xpose.msra.mxu0 0.0
      %909 = vmatprep.subr.mxu0 0.0
      %910 = vmatpush1.xpose.msra.mxu0 0.0
      %911 = vmatprep.subr.mxu0 0.0
      %912 = vmatpush1.xpose.msra.mxu0 0.0
      %913 = vmatprep.subr.mxu0 0.0
      %914 = vmatpush1.xpose.msra.mxu0 0.0
      %915 = vmatprep.subr.mxu0 0.0
      %916 = vmatpush1.xpose.msra.mxu0 0.0
      %917 = vmatprep.subr.mxu0 0.0
      %918 = vmatpush1.xpose.msra.mxu0 0.0
      %919 = vmatprep.subr.mxu0 0.0
      %920 = vmatpush1.xpose.msra.mxu0 0.0
      %921 = vmatprep.subr.mxu0 0.0
      %922 = vmatpush1.xpose.msra.mxu0 0.0
      %923 = vmatprep.subr.mxu0 0.0
      %924 = vmatpush1.xpose.msra.mxu0 0.0
      %925 = vmatprep.subr.mxu0 0.0
      %926 = vmatpush1.xpose.msra.mxu0 0.0
      %927 = vmatprep.subr.mxu0 0.0
      %928 = vmatpush1.xpose.msra.mxu0 0.0
      %929 = vmatprep.subr.mxu0 0.0
      %930 = vmatpush1.xpose.msra.mxu0 0.0
      %931 = vmatprep.subr.mxu0 0.0
      %932 = vmatpush1.xpose.msra.mxu0 0.0
      %933 = vmatprep.subr.mxu0 0.0
      %934 = vmatpush1.xpose.msra.mxu0 0.0
      %935 = vmatprep.subr.mxu0 0.0
      %936 = vmatpush1.xpose.msra.mxu0 0.0
      %937 = vmatprep.subr.mxu0 0.0
      %938 = vmatpush1.xpose.msra.mxu0 0.0
      %939 = vmatprep.subr.mxu0 0.0
      %940 = vmatpush1.xpose.msra.mxu0 0.0
      %941 = vmatprep.mubr.f32.mxu0 0.0
      %942 = vmatmul.mubr.f32.gmra.mrb[0].mxu0 %v865
      %v943 = vpop.f32.mrb[0].mxu0
      %v944 = vadd.f32 0.0, %v943
      %v945 = vpop.f32.mrb[0].mxu0
      %946 = vmatprep.mubr.f32.mxu0 0.0
      %947 = vmatmul.mubr.f32.gmra.mrb[0].mxu0 %v867
      %v948 = vpop.f32.mrb[0].mxu0
      %v949 = vadd.f32 0.0, %v948
      %v950 = vpop.f32.mrb[0].mxu0
      %951 = vmatprep.mubr.f32.mxu0 0.0
      %952 = vmatmul.mubr.f32.gmra.mrb[0].mxu0 %v869
      %v953 = vpop.f32.mrb[0].mxu0
      %v954 = vadd.f32 0.0, %v953
      %v955 = vpop.f32.mrb[0].mxu0
      %956 = vdwg.mxu0
      %v957 = vmul.f32 %v944, 0.35355338
      %v958 = vmul.f32 %v949, 0.35355338
      %v959 = vmul.f32 %v954, 0.35355338
      %v960 = vadd.f32 %v957, %v608
      %v961 = vadd.f32 %v958, %v608
      %v962 = vadd.f32 %v959, %v608
      %v963 = vsel %vm721, %v960, -inf
      %964 = vmax.xlane.f32.xlu0 %v963
      %v965 = vpop.xlane.xlu0 %964
      %v966 = vsel %vm721, %v961, -inf
      %967 = vmax.xlane.f32.xlu0 %v966
      %v968 = vpop.xlane.xlu0 %967
      %v969 = vsel %vm721, %v962, -inf
      %970 = vmax.xlane.f32.xlu0 %v969
      %v971 = vpop.xlane.xlu0 %970
      %v972 = vsub.f32 %v960, %v965
      %v973 = vsub.f32 %v961, %v968
      %v974 = vsub.f32 %v962, %v971
      %v975 = vmul.f32 %v972, 1.442695
      %v976 = vpow.pop %v975
      %v977 = vmul.f32 %v973, 1.442695
      %v978 = vpow.pop %v977
      %v979 = vmul.f32 %v974, 1.442695
      %v980 = vpow.pop %v979
      %v981 = vsel %vm721, %v976, 0.0
      %982 = vadd.xlane.f32.xlu0 %v981
      %v983 = vpop.xlane.xlu0 %982
      %v984 = vsel %vm721, %v978, 0.0
      %985 = vadd.xlane.f32.xlu0 %v984
      %v986 = vpop.xlane.xlu0 %985
      %v987 = vsel %vm721, %v980, 0.0
      %988 = vadd.xlane.f32.xlu0 %v987
      %v989 = vpop.xlane.xlu0 %988
      %v990 = vrcp.pop %v983
      %v991 = vrcp.pop %v986
      %v992 = vrcp.pop %v989
      %v993 = vmul.f32 %v976, %v990
      %v994 = vmul.f32 %v978, %v991
      %v995 = vmul.f32 %v980, %v992
      %996 = vrot.lane.b32.xlu0 %v592, 56
      %v997 = vpop.permute.xlu0 %996
      %998 = vrot.lane.b32.xlu0 %v597, 56
      %v999 = vpop.permute.xlu0 %998
      %1000 = vrot.lane.b32.xlu0 %v602, 56
      %v1001 = vpop.permute.xlu0 %1000
      %v1006 = vsel %vm721, %v993, 0
      %v1009 = vsel %vm721, %v994, 0
      %v1012 = vsel %vm721, %v995, 0
      %1014 = vmatprep.subr.mxu0 0.0
      %1015 = vmatpush1.msra.mxu0 %v997
      %1016 = vmatprep.subr.mxu0 0.0
      %1017 = vmatpush1.msra.mxu0 %v999
      %1018 = vmatprep.subr.mxu0 0.0
      %1019 = vmatpush1.msra.mxu0 %v1001
      %1020 = vmatprep.subr.mxu0 0.0
      %1021 = vmatpush1.msra.mxu0 0.0
      %1022 = vmatprep.subr.mxu0 0.0
      %1023 = vmatpush1.msra.mxu0 0.0
      %1024 = vmatprep.subr.mxu0 0.0
      %1025 = vmatpush1.msra.mxu0 0.0
      %1026 = vmatprep.subr.mxu0 0.0
      %1027 = vmatpush1.msra.mxu0 0.0
      %1028 = vmatprep.subr.mxu0 0.0
      %1029 = vmatpush1.msra.mxu0 0.0
      %1030 = vmatprep.subr.mxu0 0.0
      %1031 = vmatpush1.msra.mxu0 0.0
      %1032 = vmatprep.subr.mxu0 0.0
      %1033 = vmatpush1.msra.mxu0 0.0
      %1034 = vmatprep.subr.mxu0 0.0
      %1035 = vmatpush1.msra.mxu0 0.0
      %1036 = vmatprep.subr.mxu0 0.0
      %1037 = vmatpush1.msra.mxu0 0.0
      %1038 = vmatprep.subr.mxu0 0.0
      %1039 = vmatpush1.msra.mxu0 0.0
      %1040 = vmatprep.subr.mxu0 0.0
      %1041 = vmatpush1.msra.mxu0 0.0
      %1042 = vmatprep.subr.mxu0 0.0
      %1043 = vmatpush1.msra.mxu0 0.0
      %1044 = vmatprep.subr.mxu0 0.0
      %1045 = vmatpush1.msra.mxu0 0.0
      %1046 = vmatprep.subr.mxu0 0.0
      %1047 = vmatpush1.msra.mxu0 0.0
      %1048 = vmatprep.subr.mxu0 0.0
      %1049 = vmatpush1.msra.mxu0 0.0
      %1050 = vmatprep.subr.mxu0 0.0
      %1051 = vmatpush1.msra.mxu0 0.0
      %1052 = vmatprep.subr.mxu0 0.0
      %1053 = vmatpush1.msra.mxu0 0.0
      %1054 = vmatprep.subr.mxu0 0.0
      %1055 = vmatpush1.msra.mxu0 0.0
      %1056 = vmatprep.subr.mxu0 0.0
      %1057 = vmatpush1.msra.mxu0 0.0
      %1058 = vmatprep.subr.mxu0 0.0
      %1059 = vmatpush1.msra.mxu0 0.0
      %1060 = vmatprep.subr.mxu0 0.0
      %1061 = vmatpush1.msra.mxu0 0.0
      %1062 = vmatprep.subr.mxu0 0.0
      %1063 = vmatpush1.msra.mxu0 0.0
      %1064 = vmatprep.subr.mxu0 0.0
      %1065 = vmatpush1.msra.mxu0 0.0
      %1066 = vmatprep.subr.mxu0 0.0
      %1067 = vmatpush1.msra.mxu0 0.0
      %1068 = vmatprep.subr.mxu0 0.0
      %1069 = vmatpush1.msra.mxu0 0.0
      %1070 = vmatprep.subr.mxu0 0.0
      %1071 = vmatpush1.msra.mxu0 0.0
      %1072 = vmatprep.subr.mxu0 0.0
      %1073 = vmatpush1.msra.mxu0 0.0
      %1074 = vmatprep.subr.mxu0 0.0
      %1075 = vmatpush1.msra.mxu0 0.0
      %1076 = vmatprep.subr.mxu0 0.0
      %1077 = vmatpush1.msra.mxu0 0.0
      %1078 = vmatprep.mubr.f32.mxu0 0.0
      %1079 = vmatmul.mubr.f32.gmra.mrb[0].mxu0 %v1006
      %v1080 = vpop.f32.mrb[0].mxu0
      %v1081 = vadd.f32 0.0, %v1080
      %v1082 = vpop.f32.mrb[0].mxu0
      %1083 = vmatprep.mubr.f32.mxu0 0.0
      %1084 = vmatmul.mubr.f32.gmra.mrb[0].mxu0 %v1009
      %v1085 = vpop.f32.mrb[0].mxu0
      %v1086 = vadd.f32 0.0, %v1085
      %v1087 = vpop.f32.mrb[0].mxu0
      %1088 = vmatprep.mubr.f32.mxu0 0.0
      %1089 = vmatmul.mubr.f32.gmra.mrb[0].mxu0 %v1012
      %v1090 = vpop.f32.mrb[0].mxu0
      %v1091 = vadd.f32 0.0, %v1090
      %v1092 = vpop.f32.mrb[0].mxu0
      %1093 = vdwg.mxu0
      %v1095 = vsel %vm622, %v1081, 0
      %v1098 = vsel %vm622, %v1086, 0
      %v1101 = vsel %vm622, %v1091, 0
      %1103 = vmatprep.subr.mxu0 0.0
      %1104 = vmatpush1.msra.mxu0 %v610
      %1105 = vmatprep.subr.mxu0 0.0
      %1106 = vmatpush1.msra.mxu0 0.0
      %1107 = vmatprep.subr.mxu0 0.0
      %1108 = vmatpush1.msra.mxu0 0.0
      %1109 = vmatprep.subr.mxu0 0.0
      %1110 = vmatpush1.msra.mxu0 0.0
      %1111 = vmatprep.subr.mxu0 0.0
      %1112 = vmatpush1.msra.mxu0 0.0
      %1113 = vmatprep.subr.mxu0 0.0
      %1114 = vmatpush1.msra.mxu0 0.0
      %1115 = vmatprep.subr.mxu0 0.0
      %1116 = vmatpush1.msra.mxu0 0.0
      %1117 = vmatprep.subr.mxu0 0.0
      %1118 = vmatpush1.msra.mxu0 0.0
      %1119 = vmatprep.subr.mxu0 0.0
      %1120 = vmatpush1.msra.mxu0 0.0
      %1121 = vmatprep.subr.mxu0 0.0
      %1122 = vmatpush1.msra.mxu0 0.0
      %1123 = vmatprep.subr.mxu0 0.0
      %1124 = vmatpush1.msra.mxu0 0.0
      %1125 = vmatprep.subr.mxu0 0.0
      %1126 = vmatpush1.msra.mxu0 0.0
      %1127 = vmatprep.subr.mxu0 0.0
      %1128 = vmatpush1.msra.mxu0 0.0
      %1129 = vmatprep.subr.mxu0 0.0
      %1130 = vmatpush1.msra.mxu0 0.0
      %1131 = vmatprep.subr.mxu0 0.0
      %1132 = vmatpush1.msra.mxu0 0.0
      %1133 = vmatprep.subr.mxu0 0.0
      %1134 = vmatpush1.msra.mxu0 0.0
      %1135 = vmatprep.subr.mxu0 0.0
      %1136 = vmatpush1.msra.mxu0 0.0
      %1137 = vmatprep.subr.mxu0 0.0
      %1138 = vmatpush1.msra.mxu0 0.0
      %1139 = vmatprep.subr.mxu0 0.0
      %1140 = vmatpush1.msra.mxu0 0.0
      %1141 = vmatprep.subr.mxu0 0.0
      %1142 = vmatpush1.msra.mxu0 0.0
      %1143 = vmatprep.subr.mxu0 0.0
      %1144 = vmatpush1.msra.mxu0 0.0
      %1145 = vmatprep.subr.mxu0 0.0
      %1146 = vmatpush1.msra.mxu0 0.0
      %1147 = vmatprep.subr.mxu0 0.0
      %1148 = vmatpush1.msra.mxu0 0.0
      %1149 = vmatprep.subr.mxu0 0.0
      %1150 = vmatpush1.msra.mxu0 0.0
      %1151 = vmatprep.subr.mxu0 0.0
      %1152 = vmatpush1.msra.mxu0 0.0
      %1153 = vmatprep.subr.mxu0 0.0
      %1154 = vmatpush1.msra.mxu0 0.0
      %1155 = vmatprep.subr.mxu0 0.0
      %1156 = vmatpush1.msra.mxu0 0.0
      %1157 = vmatprep.subr.mxu0 0.0
      %1158 = vmatpush1.msra.mxu0 0.0
      %1159 = vmatprep.subr.mxu0 0.0
      %1160 = vmatpush1.msra.mxu0 0.0
      %1161 = vmatprep.subr.mxu0 0.0
      %1162 = vmatpush1.msra.mxu0 0.0
      %1163 = vmatprep.subr.mxu0 0.0
      %1164 = vmatpush1.msra.mxu0 0.0
      %1165 = vmatprep.subr.mxu0 0.0
      %1166 = vmatpush1.msra.mxu0 0.0
      %1167 = vmatprep.mubr.f32.mxu0 0.0
      %1168 = vmatmul.mubr.f32.gmra.mrb[0].mxu0 %v1095
      %v1169 = vpop.f32.mrb[0].mxu0
      %v1170 = vadd.f32 0.0, %v1169
      %v1171 = vpop.f32.mrb[0].mxu0
      %1172 = vmatprep.mubr.f32.mxu0 0.0
      %1173 = vmatmul.mubr.f32.gmra.mrb[0].mxu0 %v1098
      %v1174 = vpop.f32.mrb[0].mxu0
      %v1175 = vadd.f32 0.0, %v1174
      %v1176 = vpop.f32.mrb[0].mxu0
      %1177 = vmatprep.mubr.f32.mxu0 0.0
      %1178 = vmatmul.mubr.f32.gmra.mrb[0].mxu0 %v1101
      %v1179 = vpop.f32.mrb[0].mxu0
      %v1180 = vadd.f32 0.0, %v1179
      %v1181 = vpop.f32.mrb[0].mxu0
      %1182 = vdwg.mxu0
      %v1184 = vsel %vm622, %v840, 0
      %v1187 = vsel %vm622, %v845, 0
      %v1190 = vsel %vm622, %v850, 0
      %1192 = vmatprep.subr.mxu0 0.0
      %1193 = vmatpush1.msra.mxu0 %v609
      %1194 = vmatprep.subr.mxu0 0.0
      %1195 = vmatpush1.msra.mxu0 0.0
      %1196 = vmatprep.subr.mxu0 0.0
      %1197 = vmatpush1.msra.mxu0 0.0
      %1198 = vmatprep.subr.mxu0 0.0
      %1199 = vmatpush1.msra.mxu0 0.0
      %1200 = vmatprep.subr.mxu0 0.0
      %1201 = vmatpush1.msra.mxu0 0.0
      %1202 = vmatprep.subr.mxu0 0.0
      %1203 = vmatpush1.msra.mxu0 0.0
      %1204 = vmatprep.subr.mxu0 0.0
      %1205 = vmatpush1.msra.mxu0 0.0
      %1206 = vmatprep.subr.mxu0 0.0
      %1207 = vmatpush1.msra.mxu0 0.0
      %1208 = vmatprep.subr.mxu0 0.0
      %1209 = vmatpush1.msra.mxu0 0.0
      %1210 = vmatprep.subr.mxu0 0.0
      %1211 = vmatpush1.msra.mxu0 0.0
      %1212 = vmatprep.subr.mxu0 0.0
      %1213 = vmatpush1.msra.mxu0 0.0
      %1214 = vmatprep.subr.mxu0 0.0
      %1215 = vmatpush1.msra.mxu0 0.0
      %1216 = vmatprep.subr.mxu0 0.0
      %1217 = vmatpush1.msra.mxu0 0.0
      %1218 = vmatprep.subr.mxu0 0.0
      %1219 = vmatpush1.msra.mxu0 0.0
      %1220 = vmatprep.subr.mxu0 0.0
      %1221 = vmatpush1.msra.mxu0 0.0
      %1222 = vmatprep.subr.mxu0 0.0
      %1223 = vmatpush1.msra.mxu0 0.0
      %1224 = vmatprep.subr.mxu0 0.0
      %1225 = vmatpush1.msra.mxu0 0.0
      %1226 = vmatprep.subr.mxu0 0.0
      %1227 = vmatpush1.msra.mxu0 0.0
      %1228 = vmatprep.subr.mxu0 0.0
      %1229 = vmatpush1.msra.mxu0 0.0
      %1230 = vmatprep.subr.mxu0 0.0
      %1231 = vmatpush1.msra.mxu0 0.0
      %1232 = vmatprep.subr.mxu0 0.0
      %1233 = vmatpush1.msra.mxu0 0.0
      %1234 = vmatprep.subr.mxu0 0.0
      %1235 = vmatpush1.msra.mxu0 0.0
      %1236 = vmatprep.subr.mxu0 0.0
      %1237 = vmatpush1.msra.mxu0 0.0
      %1238 = vmatprep.subr.mxu0 0.0
      %1239 = vmatpush1.msra.mxu0 0.0
      %1240 = vmatprep.subr.mxu0 0.0
      %1241 = vmatpush1.msra.mxu0 0.0
      %1242 = vmatprep.subr.mxu0 0.0
      %1243 = vmatpush1.msra.mxu0 0.0
      %1244 = vmatprep.subr.mxu0 0.0
      %1245 = vmatpush1.msra.mxu0 0.0
      %1246 = vmatprep.subr.mxu0 0.0
      %1247 = vmatpush1.msra.mxu0 0.0
      %1248 = vmatprep.subr.mxu0 0.0
      %1249 = vmatpush1.msra.mxu0 0.0
      %1250 = vmatprep.subr.mxu0 0.0
      %1251 = vmatpush1.msra.mxu0 0.0
      %1252 = vmatprep.subr.mxu0 0.0
      %1253 = vmatpush1.msra.mxu0 0.0
      %1254 = vmatprep.subr.mxu0 0.0
      %1255 = vmatpush1.msra.mxu0 0.0
      %1256 = vmatprep.mubr.f32.mxu0 0.0
      %1257 = vmatmul.mubr.f32.gmra.mrb[0].mxu0 %v1184
      %v1258 = vpop.f32.mrb[0].mxu0
      %v1259 = vadd.f32 %v1170, %v1258
      %v1260 = vpop.f32.mrb[0].mxu0
      %1261 = vmatprep.mubr.f32.mxu0 0.0
      %1262 = vmatmul.mubr.f32.gmra.mrb[0].mxu0 %v1187
      %v1263 = vpop.f32.mrb[0].mxu0
      %v1264 = vadd.f32 %v1175, %v1263
      %v1265 = vpop.f32.mrb[0].mxu0
      %1266 = vmatprep.mubr.f32.mxu0 0.0
      %1267 = vmatmul.mubr.f32.gmra.mrb[0].mxu0 %v1190
      %v1268 = vpop.f32.mrb[0].mxu0
      %v1269 = vadd.f32 %v1180, %v1268
      %v1270 = vpop.f32.mrb[0].mxu0
      %1271 = vdwg.mxu0
      %1272 = vrot.lane.b32.xlu0 %v592, 112
      %v1273 = vpop.permute.xlu0 %1272
      %1274 = vrot.lane.b32.xlu0 %v597, 112
      %v1275 = vpop.permute.xlu0 %1274
      %1276 = vrot.lane.b32.xlu0 %v602, 112
      %v1277 = vpop.permute.xlu0 %1276
      %1278 = vrot.lane.b32.xlu0 %v592, 80
      %v1279 = vpop.permute.xlu0 %1278
      %1280 = vrot.lane.b32.xlu0 %v597, 80
      %v1281 = vpop.permute.xlu0 %1280
      %1282 = vrot.lane.b32.xlu0 %v602, 80
      %v1283 = vpop.permute.xlu0 %1282
      %v1284 = vsel %vm622, %v1273, 0
      %v1286 = vsel %vm622, %v1275, 0
      %v1288 = vsel %vm622, %v1277, 0
      %v1290 = vsel %vm622, %v1279, 0
      %v1292 = vsel %vm622, %v1281, 0
      %v1294 = vsel %vm622, %v1283, 0
      %1296 = vmatprep.subr.mxu0 0.0
      %1297 = vmatpush1.xpose.msra.mxu0 %v1290
      %1298 = vmatprep.subr.mxu0 0.0
      %1299 = vmatpush1.xpose.msra.mxu0 %v1292
      %1300 = vmatprep.subr.mxu0 0.0
      %1301 = vmatpush1.xpose.msra.mxu0 %v1294
      %1302 = vmatprep.subr.mxu0 0.0
      %1303 = vmatpush1.xpose.msra.mxu0 0.0
      %1304 = vmatprep.subr.mxu0 0.0
      %1305 = vmatpush1.xpose.msra.mxu0 0.0
      %1306 = vmatprep.subr.mxu0 0.0
      %1307 = vmatpush1.xpose.msra.mxu0 0.0
      %1308 = vmatprep.subr.mxu0 0.0
      %1309 = vmatpush1.xpose.msra.mxu0 0.0
      %1310 = vmatprep.subr.mxu0 0.0
      %1311 = vmatpush1.xpose.msra.mxu0 0.0
      %1312 = vmatprep.subr.mxu0 0.0
      %1313 = vmatpush1.xpose.msra.mxu0 0.0
      %1314 = vmatprep.subr.mxu0 0.0
      %1315 = vmatpush1.xpose.msra.mxu0 0.0
      %1316 = vmatprep.subr.mxu0 0.0
      %1317 = vmatpush1.xpose.msra.mxu0 0.0
      %1318 = vmatprep.subr.mxu0 0.0
      %1319 = vmatpush1.xpose.msra.mxu0 0.0
      %1320 = vmatprep.subr.mxu0 0.0
      %1321 = vmatpush1.xpose.msra.mxu0 0.0
      %1322 = vmatprep.subr.mxu0 0.0
      %1323 = vmatpush1.xpose.msra.mxu0 0.0
      %1324 = vmatprep.subr.mxu0 0.0
      %1325 = vmatpush1.xpose.msra.mxu0 0.0
      %1326 = vmatprep.subr.mxu0 0.0
      %1327 = vmatpush1.xpose.msra.mxu0 0.0
      %1328 = vmatprep.subr.mxu0 0.0
      %1329 = vmatpush1.xpose.msra.mxu0 0.0
      %1330 = vmatprep.subr.mxu0 0.0
      %1331 = vmatpush1.xpose.msra.mxu0 0.0
      %1332 = vmatprep.subr.mxu0 0.0
      %1333 = vmatpush1.xpose.msra.mxu0 0.0
      %1334 = vmatprep.subr.mxu0 0.0
      %1335 = vmatpush1.xpose.msra.mxu0 0.0
      %1336 = vmatprep.subr.mxu0 0.0
      %1337 = vmatpush1.xpose.msra.mxu0 0.0
      %1338 = vmatprep.subr.mxu0 0.0
      %1339 = vmatpush1.xpose.msra.mxu0 0.0
      %1340 = vmatprep.subr.mxu0 0.0
      %1341 = vmatpush1.xpose.msra.mxu0 0.0
      %1342 = vmatprep.subr.mxu0 0.0
      %1343 = vmatpush1.xpose.msra.mxu0 0.0
      %1344 = vmatprep.subr.mxu0 0.0
      %1345 = vmatpush1.xpose.msra.mxu0 0.0
      %1346 = vmatprep.subr.mxu0 0.0
      %1347 = vmatpush1.xpose.msra.mxu0 0.0
      %1348 = vmatprep.subr.mxu0 0.0
      %1349 = vmatpush1.xpose.msra.mxu0 0.0
      %1350 = vmatprep.subr.mxu0 0.0
      %1351 = vmatpush1.xpose.msra.mxu0 0.0
      %1352 = vmatprep.subr.mxu0 0.0
      %1353 = vmatpush1.xpose.msra.mxu0 0.0
      %1354 = vmatprep.subr.mxu0 0.0
      %1355 = vmatpush1.xpose.msra.mxu0 0.0
      %1356 = vmatprep.subr.mxu0 0.0
      %1357 = vmatpush1.xpose.msra.mxu0 0.0
      %1358 = vmatprep.subr.mxu0 0.0
      %1359 = vmatpush1.xpose.msra.mxu0 0.0
      %1360 = vmatprep.mubr.f32.mxu0 0.0
      %1361 = vmatmul.mubr.f32.gmra.mrb[0].mxu0 %v1284
      %v1362 = vpop.f32.mrb[0].mxu0
      %v1363 = vadd.f32 0.0, %v1362
      %v1364 = vpop.f32.mrb[0].mxu0
      %1365 = vmatprep.mubr.f32.mxu0 0.0
      %1366 = vmatmul.mubr.f32.gmra.mrb[0].mxu0 %v1286
      %v1367 = vpop.f32.mrb[0].mxu0
      %v1368 = vadd.f32 0.0, %v1367
      %v1369 = vpop.f32.mrb[0].mxu0
      %1370 = vmatprep.mubr.f32.mxu0 0.0
      %1371 = vmatmul.mubr.f32.gmra.mrb[0].mxu0 %v1288
      %v1372 = vpop.f32.mrb[0].mxu0
      %v1373 = vadd.f32 0.0, %v1372
      %v1374 = vpop.f32.mrb[0].mxu0
      %1375 = vdwg.mxu0
      %v1376 = vmul.f32 %v1363, 0.35355338
      %v1377 = vmul.f32 %v1368, 0.35355338
      %v1378 = vmul.f32 %v1373, 0.35355338
      %v1379 = vadd.f32 %v1376, %v608
      %v1380 = vadd.f32 %v1377, %v608
      %v1381 = vadd.f32 %v1378, %v608
      %v1382 = vsel %vm721, %v1379, -inf
      %1383 = vmax.xlane.f32.xlu0 %v1382
      %v1384 = vpop.xlane.xlu0 %1383
      %v1385 = vsel %vm721, %v1380, -inf
      %1386 = vmax.xlane.f32.xlu0 %v1385
      %v1387 = vpop.xlane.xlu0 %1386
      %v1388 = vsel %vm721, %v1381, -inf
      %1389 = vmax.xlane.f32.xlu0 %v1388
      %v1390 = vpop.xlane.xlu0 %1389
      %v1391 = vsub.f32 %v1379, %v1384
      %v1392 = vsub.f32 %v1380, %v1387
      %v1393 = vsub.f32 %v1381, %v1390
      %v1394 = vmul.f32 %v1391, 1.442695
      %v1395 = vpow.pop %v1394
      %v1396 = vmul.f32 %v1392, 1.442695
      %v1397 = vpow.pop %v1396
      %v1398 = vmul.f32 %v1393, 1.442695
      %v1399 = vpow.pop %v1398
      %v1400 = vsel %vm721, %v1395, 0.0
      %1401 = vadd.xlane.f32.xlu0 %v1400
      %v1402 = vpop.xlane.xlu0 %1401
      %v1403 = vsel %vm721, %v1397, 0.0
      %1404 = vadd.xlane.f32.xlu0 %v1403
      %v1405 = vpop.xlane.xlu0 %1404
      %v1406 = vsel %vm721, %v1399, 0.0
      %1407 = vadd.xlane.f32.xlu0 %v1406
      %v1408 = vpop.xlane.xlu0 %1407
      %v1409 = vrcp.pop %v1402
      %v1410 = vrcp.pop %v1405
      %v1411 = vrcp.pop %v1408
      %v1412 = vmul.f32 %v1395, %v1409
      %v1413 = vmul.f32 %v1397, %v1410
      %v1414 = vmul.f32 %v1399, %v1411
      %1415 = vrot.lane.b32.xlu0 %v592, 48
      %v1416 = vpop.permute.xlu0 %1415
      %1417 = vrot.lane.b32.xlu0 %v597, 48
      %v1418 = vpop.permute.xlu0 %1417
      %1419 = vrot.lane.b32.xlu0 %v602, 48
      %v1420 = vpop.permute.xlu0 %1419
      %v1425 = vsel %vm721, %v1412, 0
      %v1428 = vsel %vm721, %v1413, 0
      %v1431 = vsel %vm721, %v1414, 0
      %1433 = vmatprep.subr.mxu0 0.0
      %1434 = vmatpush1.msra.mxu0 %v1416
      %1435 = vmatprep.subr.mxu0 0.0
      %1436 = vmatpush1.msra.mxu0 %v1418
      %1437 = vmatprep.subr.mxu0 0.0
      %1438 = vmatpush1.msra.mxu0 %v1420
      %1439 = vmatprep.subr.mxu0 0.0
      %1440 = vmatpush1.msra.mxu0 0.0
      %1441 = vmatprep.subr.mxu0 0.0
      %1442 = vmatpush1.msra.mxu0 0.0
      %1443 = vmatprep.subr.mxu0 0.0
      %1444 = vmatpush1.msra.mxu0 0.0
      %1445 = vmatprep.subr.mxu0 0.0
      %1446 = vmatpush1.msra.mxu0 0.0
      %1447 = vmatprep.subr.mxu0 0.0
      %1448 = vmatpush1.msra.mxu0 0.0
      %1449 = vmatprep.subr.mxu0 0.0
      %1450 = vmatpush1.msra.mxu0 0.0
      %1451 = vmatprep.subr.mxu0 0.0
      %1452 = vmatpush1.msra.mxu0 0.0
      %1453 = vmatprep.subr.mxu0 0.0
      %1454 = vmatpush1.msra.mxu0 0.0
      %1455 = vmatprep.subr.mxu0 0.0
      %1456 = vmatpush1.msra.mxu0 0.0
      %1457 = vmatprep.subr.mxu0 0.0
      %1458 = vmatpush1.msra.mxu0 0.0
      %1459 = vmatprep.subr.mxu0 0.0
      %1460 = vmatpush1.msra.mxu0 0.0
      %1461 = vmatprep.subr.mxu0 0.0
      %1462 = vmatpush1.msra.mxu0 0.0
      %1463 = vmatprep.subr.mxu0 0.0
      %1464 = vmatpush1.msra.mxu0 0.0
      %1465 = vmatprep.subr.mxu0 0.0
      %1466 = vmatpush1.msra.mxu0 0.0
      %1467 = vmatprep.subr.mxu0 0.0
      %1468 = vmatpush1.msra.mxu0 0.0
      %1469 = vmatprep.subr.mxu0 0.0
      %1470 = vmatpush1.msra.mxu0 0.0
      %1471 = vmatprep.subr.mxu0 0.0
      %1472 = vmatpush1.msra.mxu0 0.0
      %1473 = vmatprep.subr.mxu0 0.0
      %1474 = vmatpush1.msra.mxu0 0.0
      %1475 = vmatprep.subr.mxu0 0.0
      %1476 = vmatpush1.msra.mxu0 0.0
      %1477 = vmatprep.subr.mxu0 0.0
      %1478 = vmatpush1.msra.mxu0 0.0
      %1479 = vmatprep.subr.mxu0 0.0
      %1480 = vmatpush1.msra.mxu0 0.0
      %1481 = vmatprep.subr.mxu0 0.0
      %1482 = vmatpush1.msra.mxu0 0.0
      %1483 = vmatprep.subr.mxu0 0.0
      %1484 = vmatpush1.msra.mxu0 0.0
      %1485 = vmatprep.subr.mxu0 0.0
      %1486 = vmatpush1.msra.mxu0 0.0
      %1487 = vmatprep.subr.mxu0 0.0
      %1488 = vmatpush1.msra.mxu0 0.0
      %1489 = vmatprep.subr.mxu0 0.0
      %1490 = vmatpush1.msra.mxu0 0.0
      %1491 = vmatprep.subr.mxu0 0.0
      %1492 = vmatpush1.msra.mxu0 0.0
      %1493 = vmatprep.subr.mxu0 0.0
      %1494 = vmatpush1.msra.mxu0 0.0
      %1495 = vmatprep.subr.mxu0 0.0
      %1496 = vmatpush1.msra.mxu0 0.0
      %1497 = vmatprep.mubr.f32.mxu0 0.0
      %1498 = vmatmul.mubr.f32.gmra.mrb[0].mxu0 %v1425
      %v1499 = vpop.f32.mrb[0].mxu0
      %v1500 = vadd.f32 0.0, %v1499
      %v1501 = vpop.f32.mrb[0].mxu0
      %1502 = vmatprep.mubr.f32.mxu0 0.0
      %1503 = vmatmul.mubr.f32.gmra.mrb[0].mxu0 %v1428
      %v1504 = vpop.f32.mrb[0].mxu0
      %v1505 = vadd.f32 0.0, %v1504
      %v1506 = vpop.f32.mrb[0].mxu0
      %1507 = vmatprep.mubr.f32.mxu0 0.0
      %1508 = vmatmul.mubr.f32.gmra.mrb[0].mxu0 %v1431
      %v1509 = vpop.f32.mrb[0].mxu0
      %v1510 = vadd.f32 0.0, %v1509
      %v1511 = vpop.f32.mrb[0].mxu0
      %1512 = vdwg.mxu0
      %v1514 = vsel %vm622, %v1500, 0
      %v1517 = vsel %vm622, %v1505, 0
      %v1520 = vsel %vm622, %v1510, 0
      %1522 = vmatprep.subr.mxu0 0.0
      %1523 = vmatpush1.msra.mxu0 %v611
      %1524 = vmatprep.subr.mxu0 0.0
      %1525 = vmatpush1.msra.mxu0 0.0
      %1526 = vmatprep.subr.mxu0 0.0
      %1527 = vmatpush1.msra.mxu0 0.0
      %1528 = vmatprep.subr.mxu0 0.0
      %1529 = vmatpush1.msra.mxu0 0.0
      %1530 = vmatprep.subr.mxu0 0.0
      %1531 = vmatpush1.msra.mxu0 0.0
      %1532 = vmatprep.subr.mxu0 0.0
      %1533 = vmatpush1.msra.mxu0 0.0
      %1534 = vmatprep.subr.mxu0 0.0
      %1535 = vmatpush1.msra.mxu0 0.0
      %1536 = vmatprep.subr.mxu0 0.0
      %1537 = vmatpush1.msra.mxu0 0.0
      %1538 = vmatprep.subr.mxu0 0.0
      %1539 = vmatpush1.msra.mxu0 0.0
      %1540 = vmatprep.subr.mxu0 0.0
      %1541 = vmatpush1.msra.mxu0 0.0
      %1542 = vmatprep.subr.mxu0 0.0
      %1543 = vmatpush1.msra.mxu0 0.0
      %1544 = vmatprep.subr.mxu0 0.0
      %1545 = vmatpush1.msra.mxu0 0.0
      %1546 = vmatprep.subr.mxu0 0.0
      %1547 = vmatpush1.msra.mxu0 0.0
      %1548 = vmatprep.subr.mxu0 0.0
      %1549 = vmatpush1.msra.mxu0 0.0
      %1550 = vmatprep.subr.mxu0 0.0
      %1551 = vmatpush1.msra.mxu0 0.0
      %1552 = vmatprep.subr.mxu0 0.0
      %1553 = vmatpush1.msra.mxu0 0.0
      %1554 = vmatprep.subr.mxu0 0.0
      %1555 = vmatpush1.msra.mxu0 0.0
      %1556 = vmatprep.subr.mxu0 0.0
      %1557 = vmatpush1.msra.mxu0 0.0
      %1558 = vmatprep.subr.mxu0 0.0
      %1559 = vmatpush1.msra.mxu0 0.0
      %1560 = vmatprep.subr.mxu0 0.0
      %1561 = vmatpush1.msra.mxu0 0.0
      %1562 = vmatprep.subr.mxu0 0.0
      %1563 = vmatpush1.msra.mxu0 0.0
      %1564 = vmatprep.subr.mxu0 0.0
      %1565 = vmatpush1.msra.mxu0 0.0
      %1566 = vmatprep.subr.mxu0 0.0
      %1567 = vmatpush1.msra.mxu0 0.0
      %1568 = vmatprep.subr.mxu0 0.0
      %1569 = vmatpush1.msra.mxu0 0.0
      %1570 = vmatprep.subr.mxu0 0.0
      %1571 = vmatpush1.msra.mxu0 0.0
      %1572 = vmatprep.subr.mxu0 0.0
      %1573 = vmatpush1.msra.mxu0 0.0
      %1574 = vmatprep.subr.mxu0 0.0
      %1575 = vmatpush1.msra.mxu0 0.0
      %1576 = vmatprep.subr.mxu0 0.0
      %1577 = vmatpush1.msra.mxu0 0.0
      %1578 = vmatprep.subr.mxu0 0.0
      %1579 = vmatpush1.msra.mxu0 0.0
      %1580 = vmatprep.subr.mxu0 0.0
      %1581 = vmatpush1.msra.mxu0 0.0
      %1582 = vmatprep.subr.mxu0 0.0
      %1583 = vmatpush1.msra.mxu0 0.0
      %1584 = vmatprep.subr.mxu0 0.0
      %1585 = vmatpush1.msra.mxu0 0.0
      %1586 = vmatprep.mubr.f32.mxu0 0.0
      %1587 = vmatmul.mubr.f32.gmra.mrb[0].mxu0 %v1514
      %v1588 = vpop.f32.mrb[0].mxu0
      %v1589 = vadd.f32 0.0, %v1588
      %v1590 = vpop.f32.mrb[0].mxu0
      %1591 = vmatprep.mubr.f32.mxu0 0.0
      %1592 = vmatmul.mubr.f32.gmra.mrb[0].mxu0 %v1517
      %v1593 = vpop.f32.mrb[0].mxu0
      %v1594 = vadd.f32 0.0, %v1593
      %v1595 = vpop.f32.mrb[0].mxu0
      %1596 = vmatprep.mubr.f32.mxu0 0.0
      %1597 = vmatmul.mubr.f32.gmra.mrb[0].mxu0 %v1520
      %v1598 = vpop.f32.mrb[0].mxu0
      %v1599 = vadd.f32 0.0, %v1598
      %v1600 = vpop.f32.mrb[0].mxu0
      %1601 = vdwg.mxu0
      %v1602 = vadd.f32 %v1259, %v1589
      %v1603 = vadd.f32 %v1264, %v1594
      %v1604 = vadd.f32 %v1269, %v1599
      %1605 = vrot.lane.b32.xlu0 %v592, 104
      %v1606 = vpop.permute.xlu0 %1605
      %1607 = vrot.lane.b32.xlu0 %v597, 104
      %v1608 = vpop.permute.xlu0 %1607
      %1609 = vrot.lane.b32.xlu0 %v602, 104
      %v1610 = vpop.permute.xlu0 %1609
      %1611 = vrot.lane.b32.xlu0 %v592, 72
      %v1612 = vpop.permute.xlu0 %1611
      %1613 = vrot.lane.b32.xlu0 %v597, 72
      %v1614 = vpop.permute.xlu0 %1613
      %1615 = vrot.lane.b32.xlu0 %v602, 72
      %v1616 = vpop.permute.xlu0 %1615
      %v1617 = vsel %vm622, %v1606, 0
      %v1619 = vsel %vm622, %v1608, 0
      %v1621 = vsel %vm622, %v1610, 0
      %v1623 = vsel %vm622, %v1612, 0
      %v1625 = vsel %vm622, %v1614, 0
      %v1627 = vsel %vm622, %v1616, 0
      %1629 = vmatprep.subr.mxu0 0.0
      %1630 = vmatpush1.xpose.msra.mxu0 %v1623
      %1631 = vmatprep.subr.mxu0 0.0
      %1632 = vmatpush1.xpose.msra.mxu0 %v1625
      %1633 = vmatprep.subr.mxu0 0.0
      %1634 = vmatpush1.xpose.msra.mxu0 %v1627
      %1635 = vmatprep.subr.mxu0 0.0
      %1636 = vmatpush1.xpose.msra.mxu0 0.0
      %1637 = vmatprep.subr.mxu0 0.0
      %1638 = vmatpush1.xpose.msra.mxu0 0.0
      %1639 = vmatprep.subr.mxu0 0.0
      %1640 = vmatpush1.xpose.msra.mxu0 0.0
      %1641 = vmatprep.subr.mxu0 0.0
      %1642 = vmatpush1.xpose.msra.mxu0 0.0
      %1643 = vmatprep.subr.mxu0 0.0
      %1644 = vmatpush1.xpose.msra.mxu0 0.0
      %1645 = vmatprep.subr.mxu0 0.0
      %1646 = vmatpush1.xpose.msra.mxu0 0.0
      %1647 = vmatprep.subr.mxu0 0.0
      %1648 = vmatpush1.xpose.msra.mxu0 0.0
      %1649 = vmatprep.subr.mxu0 0.0
      %1650 = vmatpush1.xpose.msra.mxu0 0.0
      %1651 = vmatprep.subr.mxu0 0.0
      %1652 = vmatpush1.xpose.msra.mxu0 0.0
      %1653 = vmatprep.subr.mxu0 0.0
      %1654 = vmatpush1.xpose.msra.mxu0 0.0
      %1655 = vmatprep.subr.mxu0 0.0
      %1656 = vmatpush1.xpose.msra.mxu0 0.0
      %1657 = vmatprep.subr.mxu0 0.0
      %1658 = vmatpush1.xpose.msra.mxu0 0.0
      %1659 = vmatprep.subr.mxu0 0.0
      %1660 = vmatpush1.xpose.msra.mxu0 0.0
      %1661 = vmatprep.subr.mxu0 0.0
      %1662 = vmatpush1.xpose.msra.mxu0 0.0
      %1663 = vmatprep.subr.mxu0 0.0
      %1664 = vmatpush1.xpose.msra.mxu0 0.0
      %1665 = vmatprep.subr.mxu0 0.0
      %1666 = vmatpush1.xpose.msra.mxu0 0.0
      %1667 = vmatprep.subr.mxu0 0.0
      %1668 = vmatpush1.xpose.msra.mxu0 0.0
      %1669 = vmatprep.subr.mxu0 0.0
      %1670 = vmatpush1.xpose.msra.mxu0 0.0
      %1671 = vmatprep.subr.mxu0 0.0
      %1672 = vmatpush1.xpose.msra.mxu0 0.0
      %1673 = vmatprep.subr.mxu0 0.0
      %1674 = vmatpush1.xpose.msra.mxu0 0.0
      %1675 = vmatprep.subr.mxu0 0.0
      %1676 = vmatpush1.xpose.msra.mxu0 0.0
      %1677 = vmatprep.subr.mxu0 0.0
      %1678 = vmatpush1.xpose.msra.mxu0 0.0
      %1679 = vmatprep.subr.mxu0 0.0
      %1680 = vmatpush1.xpose.msra.mxu0 0.0
      %1681 = vmatprep.subr.mxu0 0.0
      %1682 = vmatpush1.xpose.msra.mxu0 0.0
      %1683 = vmatprep.subr.mxu0 0.0
      %1684 = vmatpush1.xpose.msra.mxu0 0.0
      %1685 = vmatprep.subr.mxu0 0.0
      %1686 = vmatpush1.xpose.msra.mxu0 0.0
      %1687 = vmatprep.subr.mxu0 0.0
      %1688 = vmatpush1.xpose.msra.mxu0 0.0
      %1689 = vmatprep.subr.mxu0 0.0
      %1690 = vmatpush1.xpose.msra.mxu0 0.0
      %1691 = vmatprep.subr.mxu0 0.0
      %1692 = vmatpush1.xpose.msra.mxu0 0.0
      %1693 = vmatprep.mubr.f32.mxu0 0.0
      %1694 = vmatmul.mubr.f32.gmra.mrb[0].mxu0 %v1617
      %v1695 = vpop.f32.mrb[0].mxu0
      %v1696 = vadd.f32 0.0, %v1695
      %v1697 = vpop.f32.mrb[0].mxu0
      %1698 = vmatprep.mubr.f32.mxu0 0.0
      %1699 = vmatmul.mubr.f32.gmra.mrb[0].mxu0 %v1619
      %v1700 = vpop.f32.mrb[0].mxu0
      %v1701 = vadd.f32 0.0, %v1700
      %v1702 = vpop.f32.mrb[0].mxu0
      %1703 = vmatprep.mubr.f32.mxu0 0.0
      %1704 = vmatmul.mubr.f32.gmra.mrb[0].mxu0 %v1621
      %v1705 = vpop.f32.mrb[0].mxu0
      %v1706 = vadd.f32 0.0, %v1705
      %v1707 = vpop.f32.mrb[0].mxu0
      %1708 = vdwg.mxu0
      %v1709 = vmul.f32 %v1696, 0.35355338
      %v1710 = vmul.f32 %v1701, 0.35355338
      %v1711 = vmul.f32 %v1706, 0.35355338
      %v1712 = vadd.f32 %v1709, %v608
      %v1713 = vadd.f32 %v1710, %v608
      %v1714 = vadd.f32 %v1711, %v608
      %v1715 = vsel %vm721, %v1712, -inf
      %1716 = vmax.xlane.f32.xlu0 %v1715
      %v1717 = vpop.xlane.xlu0 %1716
      %v1718 = vsel %vm721, %v1713, -inf
      %1719 = vmax.xlane.f32.xlu0 %v1718
      %v1720 = vpop.xlane.xlu0 %1719
      %v1721 = vsel %vm721, %v1714, -inf
      %1722 = vmax.xlane.f32.xlu0 %v1721
      %v1723 = vpop.xlane.xlu0 %1722
      %v1724 = vsub.f32 %v1712, %v1717
      %v1725 = vsub.f32 %v1713, %v1720
      %v1726 = vsub.f32 %v1714, %v1723
      %v1727 = vmul.f32 %v1724, 1.442695
      %v1728 = vpow.pop %v1727
      %v1729 = vmul.f32 %v1725, 1.442695
      %v1730 = vpow.pop %v1729
      %v1731 = vmul.f32 %v1726, 1.442695
      %v1732 = vpow.pop %v1731
      %v1733 = vsel %vm721, %v1728, 0.0
      %1734 = vadd.xlane.f32.xlu0 %v1733
      %v1735 = vpop.xlane.xlu0 %1734
      %v1736 = vsel %vm721, %v1730, 0.0
      %1737 = vadd.xlane.f32.xlu0 %v1736
      %v1738 = vpop.xlane.xlu0 %1737
      %v1739 = vsel %vm721, %v1732, 0.0
      %1740 = vadd.xlane.f32.xlu0 %v1739
      %v1741 = vpop.xlane.xlu0 %1740
      %v1742 = vrcp.pop %v1735
      %v1743 = vrcp.pop %v1738
      %v1744 = vrcp.pop %v1741
      %v1745 = vmul.f32 %v1728, %v1742
      %v1746 = vmul.f32 %v1730, %v1743
      %v1747 = vmul.f32 %v1732, %v1744
      %1748 = vrot.lane.b32.xlu0 %v592, 40
      %v1749 = vpop.permute.xlu0 %1748
      %1750 = vrot.lane.b32.xlu0 %v597, 40
      %v1751 = vpop.permute.xlu0 %1750
      %1752 = vrot.lane.b32.xlu0 %v602, 40
      %v1753 = vpop.permute.xlu0 %1752
      %v1758 = vsel %vm721, %v1745, 0
      %v1761 = vsel %vm721, %v1746, 0
      %v1764 = vsel %vm721, %v1747, 0
      %1766 = vmatprep.subr.mxu0 0.0
      %1767 = vmatpush1.msra.mxu0 %v1749
      %1768 = vmatprep.subr.mxu0 0.0
      %1769 = vmatpush1.msra.mxu0 %v1751
      %1770 = vmatprep.subr.mxu0 0.0
      %1771 = vmatpush1.msra.mxu0 %v1753
      %1772 = vmatprep.subr.mxu0 0.0
      %1773 = vmatpush1.msra.mxu0 0.0
      %1774 = vmatprep.subr.mxu0 0.0
      %1775 = vmatpush1.msra.mxu0 0.0
      %1776 = vmatprep.subr.mxu0 0.0
      %1777 = vmatpush1.msra.mxu0 0.0
      %1778 = vmatprep.subr.mxu0 0.0
      %1779 = vmatpush1.msra.mxu0 0.0
      %1780 = vmatprep.subr.mxu0 0.0
      %1781 = vmatpush1.msra.mxu0 0.0
      %1782 = vmatprep.subr.mxu0 0.0
      %1783 = vmatpush1.msra.mxu0 0.0
      %1784 = vmatprep.subr.mxu0 0.0
      %1785 = vmatpush1.msra.mxu0 0.0
      %1786 = vmatprep.subr.mxu0 0.0
      %1787 = vmatpush1.msra.mxu0 0.0
      %1788 = vmatprep.subr.mxu0 0.0
      %1789 = vmatpush1.msra.mxu0 0.0
      %1790 = vmatprep.subr.mxu0 0.0
      %1791 = vmatpush1.msra.mxu0 0.0
      %1792 = vmatprep.subr.mxu0 0.0
      %1793 = vmatpush1.msra.mxu0 0.0
      %1794 = vmatprep.subr.mxu0 0.0
      %1795 = vmatpush1.msra.mxu0 0.0
      %1796 = vmatprep.subr.mxu0 0.0
      %1797 = vmatpush1.msra.mxu0 0.0
      %1798 = vmatprep.subr.mxu0 0.0
      %1799 = vmatpush1.msra.mxu0 0.0
      %1800 = vmatprep.subr.mxu0 0.0
      %1801 = vmatpush1.msra.mxu0 0.0
      %1802 = vmatprep.subr.mxu0 0.0
      %1803 = vmatpush1.msra.mxu0 0.0
      %1804 = vmatprep.subr.mxu0 0.0
      %1805 = vmatpush1.msra.mxu0 0.0
      %1806 = vmatprep.subr.mxu0 0.0
      %1807 = vmatpush1.msra.mxu0 0.0
      %1808 = vmatprep.subr.mxu0 0.0
      %1809 = vmatpush1.msra.mxu0 0.0
      %1810 = vmatprep.subr.mxu0 0.0
      %1811 = vmatpush1.msra.mxu0 0.0
      %1812 = vmatprep.subr.mxu0 0.0
      %1813 = vmatpush1.msra.mxu0 0.0
      %1814 = vmatprep.subr.mxu0 0.0
      %1815 = vmatpush1.msra.mxu0 0.0
      %1816 = vmatprep.subr.mxu0 0.0
      %1817 = vmatpush1.msra.mxu0 0.0
      %1818 = vmatprep.subr.mxu0 0.0
      %1819 = vmatpush1.msra.mxu0 0.0
      %1820 = vmatprep.subr.mxu0 0.0
      %1821 = vmatpush1.msra.mxu0 0.0
      %1822 = vmatprep.subr.mxu0 0.0
      %1823 = vmatpush1.msra.mxu0 0.0
      %1824 = vmatprep.subr.mxu0 0.0
      %1825 = vmatpush1.msra.mxu0 0.0
      %1826 = vmatprep.subr.mxu0 0.0
      %1827 = vmatpush1.msra.mxu0 0.0
      %1828 = vmatprep.subr.mxu0 0.0
      %1829 = vmatpush1.msra.mxu0 0.0
      %1830 = vmatprep.mubr.f32.mxu0 0.0
      %1831 = vmatmul.mubr.f32.gmra.mrb[0].mxu0 %v1758
      %v1832 = vpop.f32.mrb[0].mxu0
      %v1833 = vadd.f32 0.0, %v1832
      %v1834 = vpop.f32.mrb[0].mxu0
      %1835 = vmatprep.mubr.f32.mxu0 0.0
      %1836 = vmatmul.mubr.f32.gmra.mrb[0].mxu0 %v1761
      %v1837 = vpop.f32.mrb[0].mxu0
      %v1838 = vadd.f32 0.0, %v1837
      %v1839 = vpop.f32.mrb[0].mxu0
      %1840 = vmatprep.mubr.f32.mxu0 0.0
      %1841 = vmatmul.mubr.f32.gmra.mrb[0].mxu0 %v1764
      %v1842 = vpop.f32.mrb[0].mxu0
      %v1843 = vadd.f32 0.0, %v1842
      %v1844 = vpop.f32.mrb[0].mxu0
      %1845 = vdwg.mxu0
      %v1847 = vsel %vm622, %v1833, 0
      %v1850 = vsel %vm622, %v1838, 0
      %v1853 = vsel %vm622, %v1843, 0
      %1855 = vmatprep.subr.mxu0 0.0
      %1856 = vmatpush1.msra.mxu0 %v612
      %1857 = vmatprep.subr.mxu0 0.0
      %1858 = vmatpush1.msra.mxu0 0.0
      %1859 = vmatprep.subr.mxu0 0.0
      %1860 = vmatpush1.msra.mxu0 0.0
      %1861 = vmatprep.subr.mxu0 0.0
      %1862 = vmatpush1.msra.mxu0 0.0
      %1863 = vmatprep.subr.mxu0 0.0
      %1864 = vmatpush1.msra.mxu0 0.0
      %1865 = vmatprep.subr.mxu0 0.0
      %1866 = vmatpush1.msra.mxu0 0.0
      %1867 = vmatprep.subr.mxu0 0.0
      %1868 = vmatpush1.msra.mxu0 0.0
      %1869 = vmatprep.subr.mxu0 0.0
      %1870 = vmatpush1.msra.mxu0 0.0
      %1871 = vmatprep.subr.mxu0 0.0
      %1872 = vmatpush1.msra.mxu0 0.0
      %1873 = vmatprep.subr.mxu0 0.0
      %1874 = vmatpush1.msra.mxu0 0.0
      %1875 = vmatprep.subr.mxu0 0.0
      %1876 = vmatpush1.msra.mxu0 0.0
      %1877 = vmatprep.subr.mxu0 0.0
      %1878 = vmatpush1.msra.mxu0 0.0
      %1879 = vmatprep.subr.mxu0 0.0
      %1880 = vmatpush1.msra.mxu0 0.0
      %1881 = vmatprep.subr.mxu0 0.0
      %1882 = vmatpush1.msra.mxu0 0.0
      %1883 = vmatprep.subr.mxu0 0.0
      %1884 = vmatpush1.msra.mxu0 0.0
      %1885 = vmatprep.subr.mxu0 0.0
      %1886 = vmatpush1.msra.mxu0 0.0
      %1887 = vmatprep.subr.mxu0 0.0
      %1888 = vmatpush1.msra.mxu0 0.0
      %1889 = vmatprep.subr.mxu0 0.0
      %1890 = vmatpush1.msra.mxu0 0.0
      %1891 = vmatprep.subr.mxu0 0.0
      %1892 = vmatpush1.msra.mxu0 0.0
      %1893 = vmatprep.subr.mxu0 0.0
      %1894 = vmatpush1.msra.mxu0 0.0
      %1895 = vmatprep.subr.mxu0 0.0
      %1896 = vmatpush1.msra.mxu0 0.0
      %1897 = vmatprep.subr.mxu0 0.0
      %1898 = vmatpush1.msra.mxu0 0.0
      %1899 = vmatprep.subr.mxu0 0.0
      %1900 = vmatpush1.msra.mxu0 0.0
      %1901 = vmatprep.subr.mxu0 0.0
      %1902 = vmatpush1.msra.mxu0 0.0
      %1903 = vmatprep.subr.mxu0 0.0
      %1904 = vmatpush1.msra.mxu0 0.0
      %1905 = vmatprep.subr.mxu0 0.0
      %1906 = vmatpush1.msra.mxu0 0.0
      %1907 = vmatprep.subr.mxu0 0.0
      %1908 = vmatpush1.msra.mxu0 0.0
      %1909 = vmatprep.subr.mxu0 0.0
      %1910 = vmatpush1.msra.mxu0 0.0
      %1911 = vmatprep.subr.mxu0 0.0
      %1912 = vmatpush1.msra.mxu0 0.0
      %1913 = vmatprep.subr.mxu0 0.0
      %1914 = vmatpush1.msra.mxu0 0.0
      %1915 = vmatprep.subr.mxu0 0.0
      %1916 = vmatpush1.msra.mxu0 0.0
      %1917 = vmatprep.subr.mxu0 0.0
      %1918 = vmatpush1.msra.mxu0 0.0
      %1919 = vmatprep.mubr.f32.mxu0 0.0
      %1920 = vmatmul.mubr.f32.gmra.mrb[0].mxu0 %v1847
      %v1921 = vpop.f32.mrb[0].mxu0
      %v1922 = vadd.f32 0.0, %v1921
      %v1923 = vpop.f32.mrb[0].mxu0
      %1924 = vmatprep.mubr.f32.mxu0 0.0
      %1925 = vmatmul.mubr.f32.gmra.mrb[0].mxu0 %v1850
      %v1926 = vpop.f32.mrb[0].mxu0
      %v1927 = vadd.f32 0.0, %v1926
      %v1928 = vpop.f32.mrb[0].mxu0
      %1929 = vmatprep.mubr.f32.mxu0 0.0
      %1930 = vmatmul.mubr.f32.gmra.mrb[0].mxu0 %v1853
      %v1931 = vpop.f32.mrb[0].mxu0
      %v1932 = vadd.f32 0.0, %v1931
      %v1933 = vpop.f32.mrb[0].mxu0
      %1934 = vdwg.mxu0
      %v1935 = vadd.f32 %v1602, %v1922
      %v1936 = vadd.f32 %v1603, %v1927
      %v1937 = vadd.f32 %v1604, %v1932
      %v1938 = vadd.f32 %v441, %v1935
      %v1939 = vadd.f32 %v442, %v1936
      %v1940 = vadd.f32 %v443, %v1937
      %v1941 = vld [vmem:[%s6] sm:$0x1]
      %v1943 = vlaneseq
      %v1944 = vshrl.u32 %v1943, 7
      %v1945 = vsub.s32 0, %v1944
      %v1946 = vrot.slane %v1941, %v1945
      %v1948 = vadd.f32 %v1938, %v1946
      %v1949 = vadd.f32 %v1939, %v1946
      %v1950 = vadd.f32 %v1940, %v1946
      %v1951 = vld [vmem:[%s7] sm:$0x1]
      %v1952 = vld [vmem:[%s8] sm:$0x1]
      %v1953 = vsel %vm446, %v1948, 0.0
      %1954 = vadd.xlane.f32.xlu0 %v1953
      %v1955 = vpop.xlane.xlu0 %1954
      %v1956 = vsel %vm446, %v1949, 0.0
      %1957 = vadd.xlane.f32.xlu0 %v1956
      %v1958 = vpop.xlane.xlu0 %1957
      %v1959 = vsel %vm446, %v1950, 0.0
      %1960 = vadd.xlane.f32.xlu0 %v1959
      %v1961 = vpop.xlane.xlu0 %1960
      %v1962 = vmul.f32 %v1955, %v456
      %v1963 = vmul.f32 %v1958, %v456
      %v1964 = vmul.f32 %v1961, %v456
      %v1965 = vsub.f32 %v1948, %v1962
      %v1966 = vsub.f32 %v1949, %v1963
      %v1967 = vsub.f32 %v1950, %v1964
      %v1968 = vmul.f32 %v1965, %v1965
      %v1969 = vmul.f32 %v1966, %v1966
      %v1970 = vmul.f32 %v1967, %v1967
      %v1971 = vsel %vm446, %v1968, 0.0
      %1972 = vadd.xlane.f32.xlu0 %v1971
      %v1973 = vpop.xlane.xlu0 %1972
      %v1974 = vsel %vm446, %v1969, 0.0
      %1975 = vadd.xlane.f32.xlu0 %v1974
      %v1976 = vpop.xlane.xlu0 %1975
      %v1977 = vsel %vm446, %v1970, 0.0
      %1978 = vadd.xlane.f32.xlu0 %v1977
      %v1979 = vpop.xlane.xlu0 %1978
      %v1980 = vmul.f32 %v1973, %v456
      %v1981 = vmul.f32 %v1976, %v456
      %v1982 = vmul.f32 %v1979, %v456
      %v1983 = vadd.f32 %v1980, 1e-05
      %v1984 = vadd.f32 %v1981, 1e-05
      %v1985 = vadd.f32 %v1982, 1e-05
      %v1986 = vrsqrt.pop %v1983
      %v1987 = vrsqrt.pop %v1984
      %v1988 = vrsqrt.pop %v1985
      %v1989 = vmul.f32 %v1965, %v1986
      %v1990 = vmul.f32 %v1966, %v1987
      %v1991 = vmul.f32 %v1967, %v1988
      %v1993 = vlaneseq
      %v1994 = vshrl.u32 %v1993, 7
      %v1995 = vsub.s32 0, %v1994
      %v1996 = vrot.slane %v1951, %v1995
      %v1998 = vmul.f32 %v1989, %v1996
      %v1999 = vmul.f32 %v1990, %v1996
      %v2000 = vmul.f32 %v1991, %v1996
      %v2002 = vlaneseq
      %v2003 = vshrl.u32 %v2002, 7
      %v2004 = vsub.s32 0, %v2003
      %v2005 = vrot.slane %v1952, %v2004
      %v2007 = vadd.f32 %v1998, %v2005
      %v2008 = vadd.f32 %v1999, %v2005
      %v2009 = vadd.f32 %v2000, %v2005
      %v2010 = vld [vmem:[%s9] sm:$0xff]
      %v2011 = vld [vmem:[%s9 + $0x8] sm:$0xff]
      %v2012 = vld [vmem:[%s9 + $0x10] sm:$0xff]
      %v2013 = vld [vmem:[%s9 + $0x18] sm:$0xff]
      %v2014 = vld [vmem:[%s10] sm:$0x1]
      %v2016 = vlaneseq
      %v2017 = vshrl.u32 %v2016, 7
      %v2018 = vsub.s32 0, %v2017
      %v2019 = vrot.slane %v2014, %v2018
      %v2022 = vsel %vm446, %v2007, 0
      %v2025 = vsel %vm446, %v2008, 0
      %v2028 = vsel %vm446, %v2009, 0
      %2030 = vmatprep.subr.mxu0 0.0
      %2031 = vmatpush1.msra.mxu0 %v2010
      %2032 = vmatprep.subr.mxu0 0.0
      %2033 = vmatpush1.msra.mxu0 %v2011
      %2034 = vmatprep.subr.mxu0 0.0
      %2035 = vmatpush1.msra.mxu0 %v2012
      %2036 = vmatprep.subr.mxu0 0.0
      %2037 = vmatpush1.msra.mxu0 %v2013
      %2038 = vmatprep.subr.mxu0 0.0
      %2039 = vmatpush1.msra.mxu0 0.0
      %2040 = vmatprep.subr.mxu0 0.0
      %2041 = vmatpush1.msra.mxu0 0.0
      %2042 = vmatprep.subr.mxu0 0.0
      %2043 = vmatpush1.msra.mxu0 0.0
      %2044 = vmatprep.subr.mxu0 0.0
      %2045 = vmatpush1.msra.mxu0 0.0
      %2046 = vmatprep.subr.mxu0 0.0
      %2047 = vmatpush1.msra.mxu0 0.0
      %2048 = vmatprep.subr.mxu0 0.0
      %2049 = vmatpush1.msra.mxu0 0.0
      %2050 = vmatprep.subr.mxu0 0.0
      %2051 = vmatpush1.msra.mxu0 0.0
      %2052 = vmatprep.subr.mxu0 0.0
      %2053 = vmatpush1.msra.mxu0 0.0
      %2054 = vmatprep.subr.mxu0 0.0
      %2055 = vmatpush1.msra.mxu0 0.0
      %2056 = vmatprep.subr.mxu0 0.0
      %2057 = vmatpush1.msra.mxu0 0.0
      %2058 = vmatprep.subr.mxu0 0.0
      %2059 = vmatpush1.msra.mxu0 0.0
      %2060 = vmatprep.subr.mxu0 0.0
      %2061 = vmatpush1.msra.mxu0 0.0
      %2062 = vmatprep.subr.mxu0 0.0
      %2063 = vmatpush1.msra.mxu0 0.0
      %2064 = vmatprep.subr.mxu0 0.0
      %2065 = vmatpush1.msra.mxu0 0.0
      %2066 = vmatprep.subr.mxu0 0.0
      %2067 = vmatpush1.msra.mxu0 0.0
      %2068 = vmatprep.subr.mxu0 0.0
      %2069 = vmatpush1.msra.mxu0 0.0
      %2070 = vmatprep.subr.mxu0 0.0
      %2071 = vmatpush1.msra.mxu0 0.0
      %2072 = vmatprep.subr.mxu0 0.0
      %2073 = vmatpush1.msra.mxu0 0.0
      %2074 = vmatprep.subr.mxu0 0.0
      %2075 = vmatpush1.msra.mxu0 0.0
      %2076 = vmatprep.subr.mxu0 0.0
      %2077 = vmatpush1.msra.mxu0 0.0
      %2078 = vmatprep.subr.mxu0 0.0
      %2079 = vmatpush1.msra.mxu0 0.0
      %2080 = vmatprep.subr.mxu0 0.0
      %2081 = vmatpush1.msra.mxu0 0.0
      %2082 = vmatprep.subr.mxu0 0.0
      %2083 = vmatpush1.msra.mxu0 0.0
      %2084 = vmatprep.subr.mxu0 0.0
      %2085 = vmatpush1.msra.mxu0 0.0
      %2086 = vmatprep.subr.mxu0 0.0
      %2087 = vmatpush1.msra.mxu0 0.0
      %2088 = vmatprep.subr.mxu0 0.0
      %2089 = vmatpush1.msra.mxu0 0.0
      %2090 = vmatprep.subr.mxu0 0.0
      %2091 = vmatpush1.msra.mxu0 0.0
      %2092 = vmatprep.subr.mxu0 0.0
      %2093 = vmatpush1.msra.mxu0 0.0
      %2094 = vmatprep.mubr.f32.mxu0 0.0
      %2095 = vmatmul.mubr.f32.gmra.mrb[0].mxu0 %v2022
      %v2096 = vpop.f32.mrb[0].mxu0
      %v2097 = vadd.f32 %v2019, %v2096
      %v2098 = vpop.f32.mrb[0].mxu0
      %2099 = vmatprep.mubr.f32.mxu0 0.0
      %2100 = vmatmul.mubr.f32.gmra.mrb[0].mxu0 %v2025
      %v2101 = vpop.f32.mrb[0].mxu0
      %v2102 = vadd.f32 %v2019, %v2101
      %v2103 = vpop.f32.mrb[0].mxu0
      %2104 = vmatprep.mubr.f32.mxu0 0.0
      %2105 = vmatmul.mubr.f32.gmra.mrb[0].mxu0 %v2028
      %v2106 = vpop.f32.mrb[0].mxu0
      %v2107 = vadd.f32 %v2019, %v2106
      %v2108 = vpop.f32.mrb[0].mxu0
      %2109 = vdwg.mxu0
      %v2110 = vmul.f32 %v2097, 1.702
      %v2111 = vmul.f32 %v2102, 1.702
      %v2112 = vmul.f32 %v2107, 1.702
      %v2113 = vxor.u32 %v2110, 2147483648
      %v2114 = vxor.u32 %v2111, 2147483648
      %v2115 = vxor.u32 %v2112, 2147483648
      %v2116 = vmul.f32 %v2113, 1.442695
      %v2117 = vpow.pop %v2116
      %v2118 = vmul.f32 %v2114, 1.442695
      %v2119 = vpow.pop %v2118
      %v2120 = vmul.f32 %v2115, 1.442695
      %v2121 = vpow.pop %v2120
      %v2122 = vadd.f32 %v2117, 1.0
      %v2123 = vadd.f32 %v2119, 1.0
      %v2124 = vadd.f32 %v2121, 1.0
      %v2125 = vrcp.pop %v2122
      %v2126 = vmul.f32 1.0, %v2125
      %v2127 = vrcp.pop %v2123
      %v2128 = vmul.f32 1.0, %v2127
      %v2129 = vrcp.pop %v2124
      %v2130 = vmul.f32 1.0, %v2129
      %v2131 = vmul.f32 %v2097, %v2126
      %v2132 = vmul.f32 %v2102, %v2128
      %v2133 = vmul.f32 %v2107, %v2130
      %v2134 = vld [vmem:[%s11] sm:$0xff]
      %v2135 = vld [vmem:[%s11 + $0x8] sm:$0xff]
      %v2136 = vld [vmem:[%s11 + $0x10] sm:$0xff]
      %v2137 = vld [vmem:[%s11 + $0x18] sm:$0xff]
      %v2138 = vld [vmem:[%s11 + $0x20] sm:$0xff]
      %v2139 = vld [vmem:[%s11 + $0x28] sm:$0xff]
      %v2140 = vld [vmem:[%s11 + $0x30] sm:$0xff]
      %v2141 = vld [vmem:[%s11 + $0x38] sm:$0xff]
      %v2142 = vld [vmem:[%s11 + $0x40] sm:$0xff]
      %v2143 = vld [vmem:[%s11 + $0x48] sm:$0xff]
      %v2144 = vld [vmem:[%s11 + $0x50] sm:$0xff]
      %v2145 = vld [vmem:[%s11 + $0x58] sm:$0xff]
      %v2146 = vld [vmem:[%s11 + $0x60] sm:$0xff]
      %v2147 = vld [vmem:[%s11 + $0x68] sm:$0xff]
      %v2148 = vld [vmem:[%s11 + $0x70] sm:$0xff]
      %v2149 = vld [vmem:[%s11 + $0x78] sm:$0xff]
      %v2150 = vld [vmem:[%s12] sm:$0x1]
      %v2152 = vlaneseq
      %v2153 = vshrl.u32 %v2152, 7
      %v2154 = vsub.s32 0, %v2153
      %v2155 = vrot.slane %v2150, %v2154
      %2157 = vmatprep.subr.mxu0 0.0
      %2158 = vmatpush1.msra.mxu0 %v2134
      %2159 = vmatprep.subr.mxu0 0.0
      %2160 = vmatpush1.msra.mxu0 %v2135
      %2161 = vmatprep.subr.mxu0 0.0
      %2162 = vmatpush1.msra.mxu0 %v2136
      %2163 = vmatprep.subr.mxu0 0.0
      %2164 = vmatpush1.msra.mxu0 %v2137
      %2165 = vmatprep.subr.mxu0 0.0
      %2166 = vmatpush1.msra.mxu0 %v2138
      %2167 = vmatprep.subr.mxu0 0.0
      %2168 = vmatpush1.msra.mxu0 %v2139
      %2169 = vmatprep.subr.mxu0 0.0
      %2170 = vmatpush1.msra.mxu0 %v2140
      %2171 = vmatprep.subr.mxu0 0.0
      %2172 = vmatpush1.msra.mxu0 %v2141
      %2173 = vmatprep.subr.mxu0 0.0
      %2174 = vmatpush1.msra.mxu0 %v2142
      %2175 = vmatprep.subr.mxu0 0.0
      %2176 = vmatpush1.msra.mxu0 %v2143
      %2177 = vmatprep.subr.mxu0 0.0
      %2178 = vmatpush1.msra.mxu0 %v2144
      %2179 = vmatprep.subr.mxu0 0.0
      %2180 = vmatpush1.msra.mxu0 %v2145
      %2181 = vmatprep.subr.mxu0 0.0
      %2182 = vmatpush1.msra.mxu0 %v2146
      %2183 = vmatprep.subr.mxu0 0.0
      %2184 = vmatpush1.msra.mxu0 %v2147
      %2185 = vmatprep.subr.mxu0 0.0
      %2186 = vmatpush1.msra.mxu0 %v2148
      %2187 = vmatprep.subr.mxu0 0.0
      %2188 = vmatpush1.msra.mxu0 %v2149
      %2189 = vmatprep.subr.mxu0 0.0
      %2190 = vmatpush1.msra.mxu0 0.0
      %2191 = vmatprep.subr.mxu0 0.0
      %2192 = vmatpush1.msra.mxu0 0.0
      %2193 = vmatprep.subr.mxu0 0.0
      %2194 = vmatpush1.msra.mxu0 0.0
      %2195 = vmatprep.subr.mxu0 0.0
      %2196 = vmatpush1.msra.mxu0 0.0
      %2197 = vmatprep.subr.mxu0 0.0
      %2198 = vmatpush1.msra.mxu0 0.0
      %2199 = vmatprep.subr.mxu0 0.0
      %2200 = vmatpush1.msra.mxu0 0.0
      %2201 = vmatprep.subr.mxu0 0.0
      %2202 = vmatpush1.msra.mxu0 0.0
      %2203 = vmatprep.subr.mxu0 0.0
      %2204 = vmatpush1.msra.mxu0 0.0
      %2205 = vmatprep.subr.mxu0 0.0
      %2206 = vmatpush1.msra.mxu0 0.0
      %2207 = vmatprep.subr.mxu0 0.0
      %2208 = vmatpush1.msra.mxu0 0.0
      %2209 = vmatprep.subr.mxu0 0.0
      %2210 = vmatpush1.msra.mxu0 0.0
      %2211 = vmatprep.subr.mxu0 0.0
      %2212 = vmatpush1.msra.mxu0 0.0
      %2213 = vmatprep.subr.mxu0 0.0
      %2214 = vmatpush1.msra.mxu0 0.0
      %2215 = vmatprep.subr.mxu0 0.0
      %2216 = vmatpush1.msra.mxu0 0.0
      %2217 = vmatprep.subr.mxu0 0.0
      %2218 = vmatpush1.msra.mxu0 0.0
      %2219 = vmatprep.subr.mxu0 0.0
      %2220 = vmatpush1.msra.mxu0 0.0
      %2221 = vmatprep.mubr.f32.mxu0 0.0
      %2222 = vmatmul.mubr.f32.gmra.mrb[0].mxu0 %v2131
      %v2223 = vpop.f32.mrb[0].mxu0
      %v2224 = vadd.f32 %v2155, %v2223
      %v2225 = vpop.f32.mrb[0].mxu0
      %2226 = vmatprep.mubr.f32.mxu0 0.0
      %2227 = vmatmul.mubr.f32.gmra.mrb[0].mxu0 %v2132
      %v2228 = vpop.f32.mrb[0].mxu0
      %v2229 = vadd.f32 %v2155, %v2228
      %v2230 = vpop.f32.mrb[0].mxu0
      %2231 = vmatprep.mubr.f32.mxu0 0.0
      %2232 = vmatmul.mubr.f32.gmra.mrb[0].mxu0 %v2133
      %v2233 = vpop.f32.mrb[0].mxu0
      %v2234 = vadd.f32 %v2155, %v2233
      %v2235 = vpop.f32.mrb[0].mxu0
      %2236 = vdwg.mxu0
      %v2237 = vadd.f32 %v1948, %v2224
      %v2238 = vadd.f32 %v1949, %v2229
      %v2239 = vadd.f32 %v1950, %v2234
      %2240 = vst.msk [vmem:[%s440] sm:$0xff] %vm446, %v2237
      %2241 = vst.msk [vmem:[%s440 + $0x8] sm:$0xff] %vm446, %v2238
      %2242 = vst.msk [vmem:[%s440 + $0x10] sm:$0xff] %vm446, %v2239
      %p2243 = scmp.lt.s32.totalorder %s24, 1
      %s2244 = scalar_select %p2243, %s24, 1
      %s2245 = smul.addr %s2244, 3
      %s2246 = smul.addr %s2245, 8
      %s2247 = scalar_lea.vmem %s13, %s2246
      // Predicated region
      $region73: #{vit_forward.5} parent=71 // pred_check
        %p2248 = pneg %p320
      $region74: #{vit_forward.5} parent=71 // pred_check_branch
        %2250 = sbr.rel (%p2248) target = $region76
      $region75: #{vit_forward.5} parent=71 // pred_region
        _
      $region76: #{vit_forward.5} parent=71 // pred_fallthru
        _
    $region72: #{vit_forward.5} parent=5 // pred_fallthru
      _
    %p2251 = scmp.le.s32.totalorder 2, %s19
    // Predicated region
    $region77: #{vit_forward.5} parent=5 // pred_check
      %p2252 = pneg %p2251
    $region78: #{vit_forward.5} parent=5 // pred_check_branch
      %2254 = sbr.rel (%p2252) target = $region80
    $region79: #{vit_forward.5} parent=5 // pred_region
      %s2255 = ssub.s32 %s19, 2
      // Predicated region
      $region81: #{vit_forward.5} parent=79 // pred_check
        %p2256 = pneg %p326
      $region82: #{vit_forward.5} parent=79 // pred_check_branch
        %2258 = sbr.rel (%p2256) target = $region84
      $region83: #{vit_forward.5} parent=79 // pred_region
        %p2259 = scmp.lt.s32.totalorder %s25, 1
        %s2260 = scalar_select %p2259, %s25, 1
        %s2261 = smul.addr %s2260, 3
        %s2262 = smul.addr %s2261, 8
        %s2263 = scalar_lea.vmem %s13, %s2262
      $region84: #{vit_forward.5} parent=79 // pred_fallthru
        _
    $region80: #{vit_forward.5} parent=5 // pred_fallthru
      _
  $region6: #{vit_forward.5} parent=0 // loop_footer
    %s23 = sadd.s32 1, %s19
  $region7: #{vit_forward.5} parent=0 // loop_footer_branch
    %18 = sbr.rel target = $region3
  $region8: #{vit_forward.5} parent=0 // loop_exit
    _

</llo_original>
